<compile_context>
chip_gen: v7x
topology: tpu7x:2x2x1
jax: 0.10.0
libtpu: 0.0.40
codegen_flags: <defaults>
</compile_context>

<pallas_src>
import jax
import jax.numpy as jnp
from jax.experimental import pallas as pl
from jax.experimental.pallas import tpu as pltpu

LANE = 128


def _round_up(x, m):
    return (x + m - 1) // m * m


def _vmem_limit_bytes():
    """Per-generation scoped-VMEM limit (v5e/v6e: 128 MiB phys -> ~96 MiB,
    v7x: 64 MiB phys -> ~48 MiB). Conservative fallback if query fails."""
    cap = 64 * 1024 * 1024
    try:
        cap = int(pltpu.get_tpu_info().vmem_capacity_bytes)
    except Exception:
        pass
    if cap < 32 * 1024 * 1024:
        cap = 64 * 1024 * 1024
    return min(3 * cap // 4, cap - 16 * 1024 * 1024)


def _estimate_tile_vmem(TH, Wp, Wout, Cin_p, Cout_p, KH, KW, use_fat_k):
    """Rough per-step VMEM footprint (double-buffered tiles + intermediates)."""
    THp = TH + KH - 1
    b16 = 2
    v = 0
    v += 2 * TH * Wp * Cin_p * b16                   # main input tile (x2 buffers)
    v += 2 * max(KH - 1, 0) * Wp * Cin_p * b16       # halo tile
    v += 2 * TH * Wout * Cout_p * b16                # output tile (bf16)
    v += 2 * KH * KW * Cin_p * Cout_p * b16          # weights
    v += THp * Wp * Cin_p * b16                      # concatenated haloed tile
    v += TH * Wout * Cout_p * 4                      # f32 accumulator
    if use_fat_k:
        v += THp * Wout * KW * Cin_p * b16           # x_wide im2col
        v += TH * Wout * KW * Cin_p * b16            # per-kh reshape copy
    else:
        v += 2 * TH * Wout * Cin_p * b16             # per-tap reshape copies
    return v


def _pick_tile_h(Hout, Wp, Wout, Cin_p, Cout_p, KH, KW, use_fat_k,
                 vmem_limit, max_tile_h):
    budget = int(vmem_limit * 0.7)                   # compiler headroom
    TH = min(Hout, max_tile_h)
    while TH > 4 and _estimate_tile_vmem(TH, Wp, Wout, Cin_p, Cout_p,
                                         KH, KW, use_fat_k) > budget:
        TH = max(4, TH // 2)
    return TH


def _make_kernel(KH, KW, TH, Wout, Cin_p, Cout_p, neg_slope, use_act,
                 use_fat_k, has_halo):
    K_fat = KW * Cin_p

    def kernel(*refs):
        # refs: x_main, [x_halo], w, scale, bias, out
        if has_halo:
            xm_ref, xh_ref, w_ref, s_ref, b_ref, o_ref = refs
            # (TH + KH - 1, Wp, Cin_p) bf16 haloed row tile, built once in VMEM.
            x = jnp.concatenate([xm_ref[...], xh_ref[...]], axis=0)
        else:
            xm_ref, w_ref, s_ref, b_ref, o_ref = refs
            x = xm_ref[...]

        acc = jnp.zeros((TH * Wout, Cout_p), jnp.float32)
        if use_fat_k:
            # Compute-bound path: width im2col once, KH fat-K matmuls (K=KW*Cin_p).
            x_wide = jnp.concatenate(
                [x[:, kw:kw + Wout, :] for kw in range(KW)], axis=-1)
            for kh in range(KH):
                xs = x_wide[kh:kh + TH].reshape(TH * Wout, K_fat)
                acc = acc + jax.lax.dot_general(
                    xs, w_ref[kh], (((1,), (0,)), ((), ())),
                    preferred_element_type=jnp.float32)
        else:
            # Memory-bound small-channel path: KH*KW accumulating matmuls with
            # K=Cin_p, no lane-concat im2col copy.
            for kh in range(KH):
                for kw in range(KW):
                    xs = x[kh:kh + TH, kw:kw + Wout, :].reshape(TH * Wout, Cin_p)
                    acc = acc + jax.lax.dot_general(
                        xs, w_ref[kh, kw], (((1,), (0,)), ((), ())),
                        preferred_element_type=jnp.float32)

        # Eval-mode BatchNorm: f32 per-channel scale + bias post-accumulation.
        y = acc * s_ref[0] + b_ref[0]
        if use_act:
            y = jnp.where(y > 0, y, neg_slope * y)    # LeakyReLU(0.2)
        o_ref[...] = y.reshape(TH, Wout, Cout_p).astype(o_ref.dtype)

    return kernel


def conv_block_forward(x_nchw, weight, gamma, beta, running_mean, running_var,
                       *, padding=1, eps=1e-5, neg_slope=0.2, use_act=True,
                       max_tile_h=64, compute_dtype=jnp.bfloat16,
                       out_layout="nchw"):
    """ConvBlock forward (eval mode). x_nchw: (N,Cin,H,W); weight: (Cout,Cin,KH,KW)."""
    N, Cin, H, W = x_nchw.shape
    Cout, _, KH, KW = weight.shape
    HALO = KH - 1
    Hout = H + 2 * padding - HALO
    Wout = W + 2 * padding - (KW - 1)
    Wp = W + 2 * padding

    Cin_p = _round_up(Cin, LANE)
    Cout_p = _round_up(Cout, LANE)
    use_fat_k = Cin_p >= 256

    vmem_limit = _vmem_limit_bytes()
    TH = _pick_tile_h(Hout, Wp, Wout, Cin_p, Cout_p, KH, KW, use_fat_k,
                      vmem_limit, max_tile_h)
    nT = pl.cdiv(Hout, TH)
    Hout_pad = nT * TH

    # ---- parameters (one-time; f32 scale/bias applied post-accumulation) ----
    scale = (gamma / jnp.sqrt(running_var + eps)).astype(jnp.float32)
    bias = (beta - running_mean * scale).astype(jnp.float32)
    scale_p = jnp.pad(scale, (0, Cout_p - Cout)).reshape(1, Cout_p)
    bias_p = jnp.pad(bias, (0, Cout_p - Cout)).reshape(1, Cout_p)
    w = jnp.transpose(weight, (2, 3, 1, 0))                       # (KH,KW,Cin,Cout)
    w = jnp.pad(w, ((0, 0), (0, 0), (0, Cin_p - Cin), (0, Cout_p - Cout)))
    w = w.astype(compute_dtype)
    if use_fat_k:
        w = w.reshape(KH, KW * Cin_p, Cout_p)

    # ---- input: NHWC + bf16 cast FIRST, then one spatial/channel pad --------
    x = jnp.transpose(x_nchw, (0, 2, 3, 1)).astype(compute_dtype)  # (N,H,W,Cin) bf16
    x = jnp.pad(x, ((0, 0),
                    (padding, padding + (Hout_pad - Hout)),
                    (padding, padding),
                    (0, Cin_p - Cin)))                              # (N,Hpad,Wp,Cin_p)

    inputs = [x]
    in_specs = [pl.BlockSpec((None, TH, Wp, Cin_p), lambda n, t: (n, t, 0, 0))]

    has_halo = HALO > 0
    if has_halo:
        # Tiny halo side-array: the KH-1 rows below each TH-row tile
        # ((KH-1)/TH of the input -> a few %, vs. the old full 1.25x gather).
        halo_idx = (jnp.arange(1, nT + 1) * TH)[:, None] + jnp.arange(HALO)[None, :]
        x_halo = jnp.take(x, halo_idx, axis=1)                      # (N,nT,HALO,Wp,Cin_p)
        inputs.append(x_halo)
        in_specs.append(pl.BlockSpec((None, None, HALO, Wp, Cin_p),
                                     lambda n, t: (n, t, 0, 0, 0)))

    w_spec = (pl.BlockSpec((KH, KW * Cin_p, Cout_p), lambda n, t: (0, 0, 0))
              if use_fat_k else
              pl.BlockSpec((KH, KW, Cin_p, Cout_p), lambda n, t: (0, 0, 0, 0)))
    inputs += [w, scale_p, bias_p]
    in_specs += [w_spec,
                 pl.BlockSpec((1, Cout_p), lambda n, t: (0, 0)),
                 pl.BlockSpec((1, Cout_p), lambda n, t: (0, 0))]

    kernel = _make_kernel(KH, KW, TH, Wout, Cin_p, Cout_p, neg_slope, use_act,
                          use_fat_k, has_halo)

    flops = 2 * N * Hout_pad * Wout * KH * KW * Cin_p * Cout_p
    bytes_accessed = (x.size * 2
                      + (x_halo.size * 2 if has_halo else 0)
                      + w.size * 2
                      + (scale_p.size + bias_p.size) * 4
                      + N * Hout_pad * Wout * Cout_p * 2)

    out = pl.pallas_call(
        kernel,
        out_shape=jax.ShapeDtypeStruct((N, Hout_pad, Wout, Cout_p), compute_dtype),
        grid_spec=pltpu.PrefetchScalarGridSpec(
            num_scalar_prefetch=0,
            grid=(N, nT),
            in_specs=in_specs,
            out_specs=pl.BlockSpec((None, TH, Wout, Cout_p),
                                   lambda n, t: (n, t, 0, 0)),
        ),
        compiler_params=pltpu.CompilerParams(
            dimension_semantics=("parallel", "parallel"),
            vmem_limit_bytes=vmem_limit),
        cost_estimate=pl.CostEstimate(flops=flops, transcendentals=0,
                                      bytes_accessed=bytes_accessed),
    )(*inputs)

    if out_layout == "nhwc":
        # Preferred production form: bf16 NHWC with padded channels; downstream
        # NHWC layers consume this directly (no slice/transpose HBM round trip).
        return out[:, :Hout]
    # PyTorch-module parity path (for verification only).
    out = out[:, :Hout, :, :Cout].astype(jnp.float32)
    return jnp.transpose(out, (0, 3, 1, 2))                         # NCHW


def _reference(x_nchw, weight, gamma, beta, running_mean, running_var,
               *, padding=1, eps=1e-5, neg_slope=0.2, use_act=True):
    """Pure-JAX f32 reference (NCHW conv + eval-mode BN + LeakyReLU)."""
    y = jax.lax.conv_general_dilated(
        x_nchw, weight, window_strides=(1, 1),
        padding=((padding, padding), (padding, padding)),
        dimension_numbers=("NCHW", "OIHW", "NCHW"))
    scale = gamma / jnp.sqrt(running_var + eps)
    bias = beta - running_mean * scale
    y = y * scale[None, :, None, None] + bias[None, :, None, None]
    if use_act:
        y = jnp.where(y > 0, y, neg_slope * y)
    return y


if __name__ == "__main__":
    key = jax.random.PRNGKey(0)

    def make_case(k, N, Cin, H, W, Cout, KH=3, KW=3, wscale=0.1):
        ks = jax.random.split(k, 6)
        x = jax.random.normal(ks[0], (N, Cin, H, W), jnp.float32)
        weight = jax.random.normal(ks[1], (Cout, Cin, KH, KW), jnp.float32) * wscale
        gamma = jax.random.normal(ks[2], (Cout,), jnp.float32) * 0.1 + 1.0
        beta = jax.random.normal(ks[3], (Cout,), jnp.float32) * 0.1
        rmean = jax.random.normal(ks[4], (Cout,), jnp.float32) * 0.1
        rvar = jnp.abs(jax.random.normal(ks[5], (Cout,), jnp.float32)) * 0.1 + 1.0
        return x, weight, gamma, beta, rmean, rvar

    k1, k2 = jax.random.split(key)

    # Case 1: small-channel layer (per-tap matmul path), canonical test shape.
    args1 = make_case(k1, N=2, Cin=4, H=16, W=16, Cout=8)
    out1 = jax.block_until_ready(conv_block_forward(*args1))
    ref1 = _reference(*args1)
    assert out1.shape == (2, 8, 16, 16)
    # bf16 MXU operands / bf16 output with f32 accumulation -> loosened tolerance.
    assert jnp.allclose(out1, ref1, atol=5e-2, rtol=5e-2), "case 1 mismatch"

    # Case 2: deep-channel layer (fat-K width-im2col path, K = KW*Cin_p).
    args2 = make_case(k2, N=1, Cin=256, H=8, W=8, Cout=8, wscale=0.05)
    out2 = jax.block_until_ready(conv_block_forward(*args2))
    ref2 = _reference(*args2)
    assert out2.shape == (1, 8, 8, 8)
    assert jnp.allclose(out2, ref2, atol=1e-1, rtol=5e-2), "case 2 mismatch"

    print("KERNEL_OK")
</pallas_src>

<mosaic_0001>
module attributes {stable_mosaic.version = 11 : i64} {
  func.func @kernel(%arg0: i32, %arg1: i32, %arg2: memref<1x16x18x128xbf16, #tpu.memory_space<vmem>>, %arg3: memref<1x1x2x18x128xbf16, #tpu.memory_space<vmem>>, %arg4: memref<3x3x128x128xbf16, #tpu.memory_space<vmem>>, %arg5: memref<1x128xf32, #tpu.memory_space<vmem>>, %arg6: memref<1x128xf32, #tpu.memory_space<vmem>>, %arg7: memref<1x16x16x128xbf16, #tpu.memory_space<vmem>>) attributes {dimension_semantics = [#tpu.dimension_semantics<parallel>, #tpu.dimension_semantics<parallel>], iteration_bounds = array<i64: 2, 1>, scalar_prefetch = 0 : i64, scratch_operands = 0 : i64, tpu.core_type = #tpu.core_type<tc>, window_params = [{transform_indices = @transform_0, window_bounds = array<i64: 1, 16, 18, 128>}, {transform_indices = @transform_1, window_bounds = array<i64: 1, 1, 2, 18, 128>}, {pipeline_mode = #tpu.pipeline_mode<synchronous>, transform_indices = @transform_2, window_bounds = array<i64: 3, 3, 128, 128>}, {pipeline_mode = #tpu.pipeline_mode<synchronous>, transform_indices = @transform_3, window_bounds = array<i64: 1, 128>}, {pipeline_mode = #tpu.pipeline_mode<synchronous>, transform_indices = @transform_4, window_bounds = array<i64: 1, 128>}, {transform_indices = @transform_5, window_bounds = array<i64: 1, 16, 16, 128>}]} {
    %c0 = arith.constant 0 : index
    %c0_0 = arith.constant 0 : index
    %c0_1 = arith.constant 0 : index
    %c0_2 = arith.constant 0 : index
    %0 = vector.load %arg2[%c0, %c0_0, %c0_1, %c0_2] : memref<1x16x18x128xbf16, #tpu.memory_space<vmem>>, vector<1x16x18x128xbf16>
    %1 = vector.shape_cast %0 : vector<1x16x18x128xbf16> to vector<16x18x128xbf16>
    %c0_3 = arith.constant 0 : index
    %c0_4 = arith.constant 0 : index
    %c0_5 = arith.constant 0 : index
    %c0_6 = arith.constant 0 : index
    %c0_7 = arith.constant 0 : index
    %2 = vector.load %arg3[%c0_3, %c0_4, %c0_5, %c0_6, %c0_7] : memref<1x1x2x18x128xbf16, #tpu.memory_space<vmem>>, vector<1x1x2x18x128xbf16>
    %3 = vector.shape_cast %2 : vector<1x1x2x18x128xbf16> to vector<2x18x128xbf16>
    %4 = tpu.concatenate %1, %3 in 0 : vector<16x18x128xbf16>, vector<2x18x128xbf16> -> vector<18x18x128xbf16>
    %cst = arith.constant 0.000000e+00 : f32
    %5 = vector.broadcast %cst : f32 to vector<256x128xf32>
    %6 = vector.extract_strided_slice %4 {offsets = [0, 0, 0], sizes = [16, 16, 128], strides = [1, 1, 1]} : vector<18x18x128xbf16> to vector<16x16x128xbf16>
    %7 = vector.shape_cast %6 : vector<16x16x128xbf16> to vector<256x128xbf16>
    %c0_8 = arith.constant 0 : index
    %c0_9 = arith.constant 0 : index
    %c0_10 = arith.constant 0 : index
    %c0_11 = arith.constant 0 : index
    %8 = vector.load %arg4[%c0_8, %c0_9, %c0_10, %c0_11] : memref<3x3x128x128xbf16, #tpu.memory_space<vmem>>, vector<1x1x128x128xbf16>
    %9 = vector.shape_cast %8 : vector<1x1x128x128xbf16> to vector<128x128xbf16>
    %cst_12 = arith.constant dense<0.000000e+00> : vector<256x128xf32>
    %10 = tpu.matmul %7, %9, %cst_12 {dimension_numbers = #tpu.dot_dimension_numbers<[1], [0], [0], [1], [0, 0, 1, 1], [], []>} : vector<256x128xbf16>, vector<128x128xbf16>, vector<256x128xf32> -> vector<256x128xf32>
    %11 = arith.addf %5, %10 : vector<256x128xf32>
    %12 = vector.extract_strided_slice %4 {offsets = [0, 1, 0], sizes = [16, 16, 128], strides = [1, 1, 1]} : vector<18x18x128xbf16> to vector<16x16x128xbf16>
    %13 = vector.shape_cast %12 : vector<16x16x128xbf16> to vector<256x128xbf16>
    %c0_13 = arith.constant 0 : index
    %c1 = arith.constant 1 : index
    %c0_14 = arith.constant 0 : index
    %c0_15 = arith.constant 0 : index
    %14 = vector.load %arg4[%c0_13, %c1, %c0_14, %c0_15] : memref<3x3x128x128xbf16, #tpu.memory_space<vmem>>, vector<1x1x128x128xbf16>
    %15 = vector.shape_cast %14 : vector<1x1x128x128xbf16> to vector<128x128xbf16>
    %cst_16 = arith.constant dense<0.000000e+00> : vector<256x128xf32>
    %16 = tpu.matmul %13, %15, %cst_16 {dimension_numbers = #tpu.dot_dimension_numbers<[1], [0], [0], [1], [0, 0, 1, 1], [], []>} : vector<256x128xbf16>, vector<128x128xbf16>, vector<256x128xf32> -> vector<256x128xf32>
    %17 = arith.addf %11, %16 : vector<256x128xf32>
    %18 = vector.extract_strided_slice %4 {offsets = [0, 2, 0], sizes = [16, 16, 128], strides = [1, 1, 1]} : vector<18x18x128xbf16> to vector<16x16x128xbf16>
    %19 = vector.shape_cast %18 : vector<16x16x128xbf16> to vector<256x128xbf16>
    %c0_17 = arith.constant 0 : index
    %c2 = arith.constant 2 : index
    %c0_18 = arith.constant 0 : index
    %c0_19 = arith.constant 0 : index
    %20 = vector.load %arg4[%c0_17, %c2, %c0_18, %c0_19] : memref<3x3x128x128xbf16, #tpu.memory_space<vmem>>, vector<1x1x128x128xbf16>
    %21 = vector.shape_cast %20 : vector<1x1x128x128xbf16> to vector<128x128xbf16>
    %cst_20 = arith.constant dense<0.000000e+00> : vector<256x128xf32>
    %22 = tpu.matmul %19, %21, %cst_20 {dimension_numbers = #tpu.dot_dimension_numbers<[1], [0], [0], [1], [0, 0, 1, 1], [], []>} : vector<256x128xbf16>, vector<128x128xbf16>, vector<256x128xf32> -> vector<256x128xf32>
    %23 = arith.addf %17, %22 : vector<256x128xf32>
    %24 = vector.extract_strided_slice %4 {offsets = [1, 0, 0], sizes = [16, 16, 128], strides = [1, 1, 1]} : vector<18x18x128xbf16> to vector<16x16x128xbf16>
    %25 = vector.shape_cast %24 : vector<16x16x128xbf16> to vector<256x128xbf16>
    %c1_21 = arith.constant 1 : index
    %c0_22 = arith.constant 0 : index
    %c0_23 = arith.constant 0 : index
    %c0_24 = arith.constant 0 : index
    %26 = vector.load %arg4[%c1_21, %c0_22, %c0_23, %c0_24] : memref<3x3x128x128xbf16, #tpu.memory_space<vmem>>, vector<1x1x128x128xbf16>
    %27 = vector.shape_cast %26 : vector<1x1x128x128xbf16> to vector<128x128xbf16>
    %cst_25 = arith.constant dense<0.000000e+00> : vector<256x128xf32>
    %28 = tpu.matmul %25, %27, %cst_25 {dimension_numbers = #tpu.dot_dimension_numbers<[1], [0], [0], [1], [0, 0, 1, 1], [], []>} : vector<256x128xbf16>, vector<128x128xbf16>, vector<256x128xf32> -> vector<256x128xf32>
    %29 = arith.addf %23, %28 : vector<256x128xf32>
    %30 = vector.extract_strided_slice %4 {offsets = [1, 1, 0], sizes = [16, 16, 128], strides = [1, 1, 1]} : vector<18x18x128xbf16> to vector<16x16x128xbf16>
    %31 = vector.shape_cast %30 : vector<16x16x128xbf16> to vector<256x128xbf16>
    %c1_26 = arith.constant 1 : index
    %c1_27 = arith.constant 1 : index
    %c0_28 = arith.constant 0 : index
    %c0_29 = arith.constant 0 : index
    %32 = vector.load %arg4[%c1_26, %c1_27, %c0_28, %c0_29] : memref<3x3x128x128xbf16, #tpu.memory_space<vmem>>, vector<1x1x128x128xbf16>
    %33 = vector.shape_cast %32 : vector<1x1x128x128xbf16> to vector<128x128xbf16>
    %cst_30 = arith.constant dense<0.000000e+00> : vector<256x128xf32>
    %34 = tpu.matmul %31, %33, %cst_30 {dimension_numbers = #tpu.dot_dimension_numbers<[1], [0], [0], [1], [0, 0, 1, 1], [], []>} : vector<256x128xbf16>, vector<128x128xbf16>, vector<256x128xf32> -> vector<256x128xf32>
    %35 = arith.addf %29, %34 : vector<256x128xf32>
    %36 = vector.extract_strided_slice %4 {offsets = [1, 2, 0], sizes = [16, 16, 128], strides = [1, 1, 1]} : vector<18x18x128xbf16> to vector<16x16x128xbf16>
    %37 = vector.shape_cast %36 : vector<16x16x128xbf16> to vector<256x128xbf16>
    %c1_31 = arith.constant 1 : index
    %c2_32 = arith.constant 2 : index
    %c0_33 = arith.constant 0 : index
    %c0_34 = arith.constant 0 : index
    %38 = vector.load %arg4[%c1_31, %c2_32, %c0_33, %c0_34] : memref<3x3x128x128xbf16, #tpu.memory_space<vmem>>, vector<1x1x128x128xbf16>
    %39 = vector.shape_cast %38 : vector<1x1x128x128xbf16> to vector<128x128xbf16>
    %cst_35 = arith.constant dense<0.000000e+00> : vector<256x128xf32>
    %40 = tpu.matmul %37, %39, %cst_35 {dimension_numbers = #tpu.dot_dimension_numbers<[1], [0], [0], [1], [0, 0, 1, 1], [], []>} : vector<256x128xbf16>, vector<128x128xbf16>, vector<256x128xf32> -> vector<256x128xf32>
    %41 = arith.addf %35, %40 : vector<256x128xf32>
    %42 = vector.extract_strided_slice %4 {offsets = [2, 0, 0], sizes = [16, 16, 128], strides = [1, 1, 1]} : vector<18x18x128xbf16> to vector<16x16x128xbf16>
    %43 = vector.shape_cast %42 : vector<16x16x128xbf16> to vector<256x128xbf16>
    %c2_36 = arith.constant 2 : index
    %c0_37 = arith.constant 0 : index
    %c0_38 = arith.constant 0 : index
    %c0_39 = arith.constant 0 : index
    %44 = vector.load %arg4[%c2_36, %c0_37, %c0_38, %c0_39] : memref<3x3x128x128xbf16, #tpu.memory_space<vmem>>, vector<1x1x128x128xbf16>
    %45 = vector.shape_cast %44 : vector<1x1x128x128xbf16> to vector<128x128xbf16>
    %cst_40 = arith.constant dense<0.000000e+00> : vector<256x128xf32>
    %46 = tpu.matmul %43, %45, %cst_40 {dimension_numbers = #tpu.dot_dimension_numbers<[1], [0], [0], [1], [0, 0, 1, 1], [], []>} : vector<256x128xbf16>, vector<128x128xbf16>, vector<256x128xf32> -> vector<256x128xf32>
    %47 = arith.addf %41, %46 : vector<256x128xf32>
    %48 = vector.extract_strided_slice %4 {offsets = [2, 1, 0], sizes = [16, 16, 128], strides = [1, 1, 1]} : vector<18x18x128xbf16> to vector<16x16x128xbf16>
    %49 = vector.shape_cast %48 : vector<16x16x128xbf16> to vector<256x128xbf16>
    %c2_41 = arith.constant 2 : index
    %c1_42 = arith.constant 1 : index
    %c0_43 = arith.constant 0 : index
    %c0_44 = arith.constant 0 : index
    %50 = vector.load %arg4[%c2_41, %c1_42, %c0_43, %c0_44] : memref<3x3x128x128xbf16, #tpu.memory_space<vmem>>, vector<1x1x128x128xbf16>
    %51 = vector.shape_cast %50 : vector<1x1x128x128xbf16> to vector<128x128xbf16>
    %cst_45 = arith.constant dense<0.000000e+00> : vector<256x128xf32>
    %52 = tpu.matmul %49, %51, %cst_45 {dimension_numbers = #tpu.dot_dimension_numbers<[1], [0], [0], [1], [0, 0, 1, 1], [], []>} : vector<256x128xbf16>, vector<128x128xbf16>, vector<256x128xf32> -> vector<256x128xf32>
    %53 = arith.addf %47, %52 : vector<256x128xf32>
    %54 = vector.extract_strided_slice %4 {offsets = [2, 2, 0], sizes = [16, 16, 128], strides = [1, 1, 1]} : vector<18x18x128xbf16> to vector<16x16x128xbf16>
    %55 = vector.shape_cast %54 : vector<16x16x128xbf16> to vector<256x128xbf16>
    %c2_46 = arith.constant 2 : index
    %c2_47 = arith.constant 2 : index
    %c0_48 = arith.constant 0 : index
    %c0_49 = arith.constant 0 : index
    %56 = vector.load %arg4[%c2_46, %c2_47, %c0_48, %c0_49] : memref<3x3x128x128xbf16, #tpu.memory_space<vmem>>, vector<1x1x128x128xbf16>
    %57 = vector.shape_cast %56 : vector<1x1x128x128xbf16> to vector<128x128xbf16>
    %cst_50 = arith.constant dense<0.000000e+00> : vector<256x128xf32>
    %58 = tpu.matmul %55, %57, %cst_50 {dimension_numbers = #tpu.dot_dimension_numbers<[1], [0], [0], [1], [0, 0, 1, 1], [], []>} : vector<256x128xbf16>, vector<128x128xbf16>, vector<256x128xf32> -> vector<256x128xf32>
    %59 = arith.addf %53, %58 : vector<256x128xf32>
    %c0_51 = arith.constant 0 : index
    %c0_52 = arith.constant 0 : index
    %60 = vector.load %arg5[%c0_51, %c0_52] : memref<1x128xf32, #tpu.memory_space<vmem>>, vector<1x128xf32>
    %61 = vector.shape_cast %60 : vector<1x128xf32> to vector<128xf32>
    %62 = vector.shape_cast %61 : vector<128xf32> to vector<1x128xf32>
    %63 = vector.broadcast %62 : vector<1x128xf32> to vector<256x128xf32>
    %64 = arith.mulf %59, %63 : vector<256x128xf32>
    %c0_53 = arith.constant 0 : index
    %c0_54 = arith.constant 0 : index
    %65 = vector.load %arg6[%c0_53, %c0_54] : memref<1x128xf32, #tpu.memory_space<vmem>>, vector<1x128xf32>
    %66 = vector.shape_cast %65 : vector<1x128xf32> to vector<128xf32>
    %67 = vector.shape_cast %66 : vector<128xf32> to vector<1x128xf32>
    %68 = vector.broadcast %67 : vector<1x128xf32> to vector<256x128xf32>
    %69 = arith.addf %64, %68 : vector<256x128xf32>
    %cst_55 = arith.constant 0.000000e+00 : f32
    %70 = vector.broadcast %cst_55 : f32 to vector<256x128xf32>
    %71 = arith.cmpf ogt, %69, %70 : vector<256x128xf32>
    %cst_56 = arith.constant 2.000000e-01 : f32
    %72 = vector.broadcast %cst_56 : f32 to vector<256x128xf32>
    %73 = arith.mulf %72, %69 : vector<256x128xf32>
    %74 = arith.select %71, %69, %73 : vector<256x128xi1>, vector<256x128xf32>
    %75 = vector.shape_cast %74 : vector<256x128xf32> to vector<16x16x128xf32>
    %76 = arith.truncf %75 : vector<16x16x128xf32> to vector<16x16x128xbf16>
    %c0_57 = arith.constant 0 : index
    %c0_58 = arith.constant 0 : index
    %c0_59 = arith.constant 0 : index
    %c0_60 = arith.constant 0 : index
    %77 = vector.load %arg7[%c0_57, %c0_58, %c0_59, %c0_60] : memref<1x16x16x128xbf16, #tpu.memory_space<vmem>>, vector<1x16x16x128xbf16>
    %78 = vector.shape_cast %77 : vector<1x16x16x128xbf16> to vector<16x16x128xbf16>
    %79 = vector.shape_cast %76 : vector<16x16x128xbf16> to vector<1x16x16x128xbf16>
    tpu.vector_store %arg7[%c0_57, %c0_58, %c0_59, %c0_60], %79 {strides = array<i32>} : memref<1x16x16x128xbf16, #tpu.memory_space<vmem>>, vector<1x16x16x128xbf16>,
    return
  }
  func.func @transform_0(%arg0: i32, %arg1: i32) -> (i32, i32, i32, i32) {
    %c0_i32 = arith.constant 0 : i32
    %c0_i32_0 = arith.constant 0 : i32
    %c0_i32_1 = arith.constant 0 : i32
    return %arg0, %arg1, %c0_i32, %c0_i32_0 : i32, i32, i32, i32
  }
  func.func @transform_1(%arg0: i32, %arg1: i32) -> (i32, i32, i32, i32, i32) {
    %c0_i32 = arith.constant 0 : i32
    %c0_i32_0 = arith.constant 0 : i32
    %c0_i32_1 = arith.constant 0 : i32
    %c0_i32_2 = arith.constant 0 : i32
    return %arg0, %arg1, %c0_i32, %c0_i32_0, %c0_i32_1 : i32, i32, i32, i32, i32
  }
  func.func @transform_2(%arg0: i32, %arg1: i32) -> (i32, i32, i32, i32) {
    %c0_i32 = arith.constant 0 : i32
    %c0_i32_0 = arith.constant 0 : i32
    %c0_i32_1 = arith.constant 0 : i32
    %c0_i32_2 = arith.constant 0 : i32
    %c0_i32_3 = arith.constant 0 : i32
    return %c0_i32, %c0_i32_0, %c0_i32_1, %c0_i32_2 : i32, i32, i32, i32
  }
  func.func @transform_3(%arg0: i32, %arg1: i32) -> (i32, i32) {
    %c0_i32 = arith.constant 0 : i32
    %c0_i32_0 = arith.constant 0 : i32
    %c0_i32_1 = arith.constant 0 : i32
    return %c0_i32, %c0_i32_0 : i32, i32
  }
  func.func @transform_4(%arg0: i32, %arg1: i32) -> (i32, i32) {
    %c0_i32 = arith.constant 0 : i32
    %c0_i32_0 = arith.constant 0 : i32
    %c0_i32_1 = arith.constant 0 : i32
    return %c0_i32, %c0_i32_0 : i32, i32
  }
  func.func @transform_5(%arg0: i32, %arg1: i32) -> (i32, i32, i32, i32) {
    %c0_i32 = arith.constant 0 : i32
    %c0_i32_0 = arith.constant 0 : i32
    %c0_i32_1 = arith.constant 0 : i32
    return %arg0, %arg1, %c0_i32, %c0_i32_0 : i32, i32, i32, i32
  }
}

</mosaic_0001>

<llo_original>
// kernel: tpu_custom_call.1
$region0: #{tpu_custom_call.1}
  #allocation0 [shape = 'u32[]', space=smem, size = 0x4, offset = 0x4, fixed_abs, tag = 'smem constant byte address 0x4 - core index']
  #allocation1 [shape = 'u32[144,128]{1,0:T(1,128)}', space=vmem, size = 0x12000, scoped, tag = 'internal scratch']
  %s0 = inlined_call_operand.vmem [shape: bf16[2,18,18,128], index: 0, kind: input, shape index: {}]
  %s1 = inlined_call_operand.vmem [shape: bf16[2,1,2,18,128], index: 1, kind: input, shape index: {}]
  %s2 = inlined_call_operand.vmem [shape: bf16[3,3,128,128], index: 2, kind: input, shape index: {}]
  %s3 = inlined_call_operand.vmem [shape: f32[1,128], index: 3, kind: input, shape index: {}]
  %s4 = inlined_call_operand.vmem [shape: f32[1,128], index: 4, kind: input, shape index: {}]
  %s5 = inlined_call_operand.hbm [shape: bf16[2,16,16,128], index: 5, kind: output, shape index: {}]
  %s6 = sld [smem:[#allocation0]]
  $region53: #{tpu_custom_call.1} parent=0
    _
  %s8 = ssub.s32 1, %s6
  %s9 = scalar_select 0, %s8, %s6
  $region1: #{tpu_custom_call.1} parent=0
    #allocation2 [shape = 'u8[131072]{0}', space=vmem, size = 0x20000, scoped, tag = 'output window, operand 0']
    #allocation3 [shape = 's32[2]{0}', space=sflag, size = 0x8, scoped, tag = 'scoped memory for tpu_custom_call.1']
    %10 = vsyncpa [#allocation3], 0
    %s11 = scalar_lea.sflag [#allocation3], 1
    %12 = vsyncpa %s11, 0
    loop: start=0, step=1, limit=4
    $region2: #{tpu_custom_call.1} parent=1 // loop_pre_header
      _
    $region3: #{tpu_custom_call.1} parent=1 // loop_header
      %s14 = sphi 0, %s18
      %p15 = scmp.ge.s32.totalorder %s14, 4
      %s21 = sphi 0, %s33
      %s22 = sphi 0, %s29
      %s23 = sphi 0, %s21
      %s24 = sphi 0, %s22
      %s25 = sphi 0, %s23
      %s26 = sphi 0, %s24
      %s38 = sphi 0, %s40
      %s41 = sphi 0, %s38
      %s42 = sphi 0, %s41
      %s58 = sphi 0, %s42
      %s66 = sphi 0, %s68
      %s69 = sphi 0, %s66
      %s70 = sphi 0, %s69
      %s86 = sphi 0, %s70
      %s90 = sphi 0, %s90
      %s92 = sphi 0, %s90
      %s93 = sphi 0, %s92
      %s107 = sphi 0, %s93
      %s111 = sphi 0, %s111
      %s113 = sphi 0, %s111
      %s114 = sphi 0, %s113
      %s128 = sphi 0, %s114
      %s132 = sphi 0, %s132
      %s134 = sphi 0, %s132
      %s135 = sphi 0, %s134
      %s149 = sphi 0, %s135
      %s157 = sphi 0, %s159
      %s160 = sphi 0, %s157
      %s161 = sphi 0, %s160
      %s177 = sphi 0, %s161
    $region4: #{tpu_custom_call.1} parent=1 // loop_header_branch
      %17 = sbr.rel (%p15) target = $region8
    $region5: #{tpu_custom_call.1} parent=1 // loop_body
      %s19 = ssub.s32 %s14, 1
      %s20 = ssub.s32 %s14, 2
      %s27 = sadd.s32 1, %s22
      %p28 = scmp.ge.s32.totalorder %s27, 1
      %s29 = scalar_select %p28, 0, %s27
      %s30 = sadd.s32 1, %s21
      %s31 = scalar_select %p28, %s30, %s21
      %p32 = scmp.ge.s32.totalorder %s31, 2
      %s33 = scalar_select %p32, 0, %s31
      %s34 = ssub.s32 %s21, %s33
      %s35 = ssub.s32 %s22, %s29
      %s36 = sor.u32 %s34, %s35
      %p37 = scmp.eq.s32.totalorder %s36, 0
      %s39 = sadd.s32 %s38, 1
      %s40 = scalar_select %p37, %s38, %s39
      %p43 = pneg %p37
      %p44 = scmp.eq.s32.totalorder %s14, 1
      %p45 = por %p43, %p44
      %p46 = scmp.ne.s32.totalorder %s38, %s41
      %p47 = scmp.eq.s32.totalorder %s14, 0
      %p48 = por %p46, %p47
      %p49 = scmp.ne.s32.totalorder %s38, %s41
      %p50 = scmp.eq.s32.totalorder %s19, 1
      %p51 = por %p49, %p50
      %p52 = scmp.ne.s32.totalorder %s41, %s42
      %p53 = scmp.eq.s32.totalorder %s19, 0
      %p54 = por %p52, %p53
      %p55 = scmp.ne.s32.totalorder %s41, %s42
      %p56 = scmp.eq.s32.totalorder %s20, 1
      %p57 = por %p55, %p56
      %p59 = scmp.ne.s32.totalorder %s42, %s58
      %p60 = scmp.eq.s32.totalorder %s20, 0
      %p61 = por %p59, %p60
      %s62 = ssub.s32 %s21, %s33
      %s63 = ssub.s32 %s22, %s29
      %s64 = sor.u32 %s62, %s63
      %p65 = scmp.eq.s32.totalorder %s64, 0
      %s67 = sadd.s32 %s66, 1
      %s68 = scalar_select %p65, %s66, %s67
      %p71 = pneg %p65
      %p72 = scmp.eq.s32.totalorder %s14, 1
      %p73 = por %p71, %p72
      %p74 = scmp.ne.s32.totalorder %s66, %s69
      %p75 = scmp.eq.s32.totalorder %s14, 0
      %p76 = por %p74, %p75
      %p77 = scmp.ne.s32.totalorder %s66, %s69
      %p78 = scmp.eq.s32.totalorder %s19, 1
      %p79 = por %p77, %p78
      %p80 = scmp.ne.s32.totalorder %s69, %s70
      %p81 = scmp.eq.s32.totalorder %s19, 0
      %p82 = por %p80, %p81
      %p83 = scmp.ne.s32.totalorder %s69, %s70
      %p84 = scmp.eq.s32.totalorder %s20, 1
      %p85 = por %p83, %p84
      %p87 = scmp.ne.s32.totalorder %s70, %s86
      %p88 = scmp.eq.s32.totalorder %s20, 0
      %p89 = por %p87, %p88
      %s91 = sadd.s32 %s90, 1
      %p94 = scmp.eq.s32.totalorder %s14, 1
      %p95 = scmp.ne.s32.totalorder %s90, %s92
      %p96 = scmp.eq.s32.totalorder %s14, 0
      %p97 = por %p95, %p96
      %p98 = scmp.ne.s32.totalorder %s90, %s92
      %p99 = scmp.eq.s32.totalorder %s19, 1
      %p100 = por %p98, %p99
      %p101 = scmp.ne.s32.totalorder %s92, %s93
      %p102 = scmp.eq.s32.totalorder %s19, 0
      %p103 = por %p101, %p102
      %p104 = scmp.ne.s32.totalorder %s92, %s93
      %p105 = scmp.eq.s32.totalorder %s20, 1
      %p106 = por %p104, %p105
      %p108 = scmp.ne.s32.totalorder %s93, %s107
      %p109 = scmp.eq.s32.totalorder %s20, 0
      %p110 = por %p108, %p109
      %s112 = sadd.s32 %s111, 1
      %p115 = scmp.eq.s32.totalorder %s14, 1
      %p116 = scmp.ne.s32.totalorder %s111, %s113
      %p117 = scmp.eq.s32.totalorder %s14, 0
      %p118 = por %p116, %p117
      %p119 = scmp.ne.s32.totalorder %s111, %s113
      %p120 = scmp.eq.s32.totalorder %s19, 1
      %p121 = por %p119, %p120
      %p122 = scmp.ne.s32.totalorder %s113, %s114
      %p123 = scmp.eq.s32.totalorder %s19, 0
      %p124 = por %p122, %p123
      %p125 = scmp.ne.s32.totalorder %s113, %s114
      %p126 = scmp.eq.s32.totalorder %s20, 1
      %p127 = por %p125, %p126
      %p129 = scmp.ne.s32.totalorder %s114, %s128
      %p130 = scmp.eq.s32.totalorder %s20, 0
      %p131 = por %p129, %p130
      %s133 = sadd.s32 %s132, 1
      %p136 = scmp.eq.s32.totalorder %s14, 1
      %p137 = scmp.ne.s32.totalorder %s132, %s134
      %p138 = scmp.eq.s32.totalorder %s14, 0
      %p139 = por %p137, %p138
      %p140 = scmp.ne.s32.totalorder %s132, %s134
      %p141 = scmp.eq.s32.totalorder %s19, 1
      %p142 = por %p140, %p141
      %p143 = scmp.ne.s32.totalorder %s134, %s135
      %p144 = scmp.eq.s32.totalorder %s19, 0
      %p145 = por %p143, %p144
      %p146 = scmp.ne.s32.totalorder %s134, %s135
      %p147 = scmp.eq.s32.totalorder %s20, 1
      %p148 = por %p146, %p147
      %p150 = scmp.ne.s32.totalorder %s135, %s149
      %p151 = scmp.eq.s32.totalorder %s20, 0
      %p152 = por %p150, %p151
      %s153 = ssub.s32 %s21, %s33
      %s154 = ssub.s32 %s22, %s29
      %s155 = sor.u32 %s153, %s154
      %p156 = scmp.eq.s32.totalorder %s155, 0
      %s158 = sadd.s32 %s157, 1
      %s159 = scalar_select %p156, %s157, %s158
      %p162 = pneg %p156
      %p163 = scmp.eq.s32.totalorder %s14, 1
      %p164 = por %p162, %p163
      %p165 = scmp.ne.s32.totalorder %s157, %s160
      %p166 = scmp.eq.s32.totalorder %s14, 0
      %p167 = por %p165, %p166
      %p168 = scmp.ne.s32.totalorder %s157, %s160
      %p169 = scmp.eq.s32.totalorder %s19, 1
      %p170 = por %p168, %p169
      %p171 = scmp.ne.s32.totalorder %s160, %s161
      %p172 = scmp.eq.s32.totalorder %s19, 0
      %p173 = por %p171, %p172
      %p174 = scmp.ne.s32.totalorder %s160, %s161
      %p175 = scmp.eq.s32.totalorder %s20, 1
      %p176 = por %p174, %p175
      %p178 = scmp.ne.s32.totalorder %s161, %s177
      %p179 = scmp.eq.s32.totalorder %s20, 0
      %p180 = por %p178, %p179
      %p181 = scmp.le.s32.totalorder 1, %s14
      %p182 = scmp.lt.s32.totalorder %s14, 3
      %p183 = pnand %p181, %p182
      %p184 = pneg %p183
      // Predicated region
      $region9: #{tpu_custom_call.1} parent=5 // pred_check
        _
      $region10: #{tpu_custom_call.1} parent=5 // pred_check_branch
        %186 = sbr.rel (%p183) target = $region12
      $region11: #{tpu_custom_call.1} parent=5 // pred_region
        %s187 = ssub.s32 %s14, 1
        // Predicated region
        $region13: #{tpu_custom_call.1} parent=11 // pred_check
          %p188 = pneg %p103
        $region14: #{tpu_custom_call.1} parent=11 // pred_check_branch
          %190 = sbr.rel (%p188) target = $region16
        $region15: #{tpu_custom_call.1} parent=11 // pred_region
          _
        $region16: #{tpu_custom_call.1} parent=11 // pred_fallthru
          _
        // Predicated region
        $region17: #{tpu_custom_call.1} parent=11 // pred_check
          %p191 = pneg %p124
        $region18: #{tpu_custom_call.1} parent=11 // pred_check_branch
          %193 = sbr.rel (%p191) target = $region20
        $region19: #{tpu_custom_call.1} parent=11 // pred_region
          _
        $region20: #{tpu_custom_call.1} parent=11 // pred_fallthru
          _
        // Predicated region
        $region21: #{tpu_custom_call.1} parent=11 // pred_check
          %p194 = pneg %p145
        $region22: #{tpu_custom_call.1} parent=11 // pred_check_branch
          %196 = sbr.rel (%p194) target = $region24
        $region23: #{tpu_custom_call.1} parent=11 // pred_region
          _
        $region24: #{tpu_custom_call.1} parent=11 // pred_fallthru
          _
      $region12: #{tpu_custom_call.1} parent=5 // pred_fallthru
        _
      %p197 = scmp.lt.s32.totalorder %s14, 2
      // Predicated region
      $region25: #{tpu_custom_call.1} parent=5 // pred_check
        %p198 = pneg %p197
      $region26: #{tpu_custom_call.1} parent=5 // pred_check_branch
        %200 = sbr.rel (%p198) target = $region28
      $region27: #{tpu_custom_call.1} parent=5 // pred_region
        // Predicated region
        $region29: #{tpu_custom_call.1} parent=27 // pred_check
          %p201 = pneg %p48
        $region30: #{tpu_custom_call.1} parent=27 // pred_check_branch
          %203 = sbr.rel (%p201) target = $region32
        $region31: #{tpu_custom_call.1} parent=27 // pred_region
          %s204 = smul.u32 16, %s22
          %s205 = ssub.s32 18, %s204
          %p206 = scmp.lt.s32.totalorder %s205, 16
          %s207 = scalar_select %p206, %s205, 16
          %s208 = smul.u32 64, %s207
          %s209 = smul.u32 %s208, 3
          %p210 = scmp.lt.s32.totalorder %s21, 1
          %s211 = scalar_select %p210, %s21, 1
          %p212 = scmp.lt.s32.totalorder %s204, 17
          %s213 = scalar_select %p212, %s204, 17
          %s214 = smul.addr %s213, 3
          %s215 = smul.addr %s211, 54
          %s216 = sadd.s32 %s214, %s215
          %s217 = smul.addr %s216, 4
          %s218 = scalar_lea.vmem %s0, %s217
          %s219 = smul.u32 16, %s22
          %s220 = ssub.s32 18, %s219
          %p221 = scmp.lt.s32.totalorder %s220, 16
          %s222 = scalar_select %p221, %s220, 16
          %s223 = smul.u32 64, %s222
          %s224 = smul.u32 %s223, 3
        $region32: #{tpu_custom_call.1} parent=27 // pred_fallthru
          _
        // Predicated region
        $region33: #{tpu_custom_call.1} parent=27 // pred_check
          %p225 = pneg %p76
        $region34: #{tpu_custom_call.1} parent=27 // pred_check_branch
          %227 = sbr.rel (%p225) target = $region36
        $region35: #{tpu_custom_call.1} parent=27 // pred_region
          %p228 = scmp.lt.s32.totalorder %s21, 1
          %s229 = scalar_select %p228, %s21, 1
          %p230 = scmp.lt.s32.totalorder %s22, 0
          %s231 = scalar_select %p230, %s22, 0
          %s232 = smul.addr %s231, 6
          %s233 = smul.addr %s229, 6
          %s234 = sadd.s32 %s232, %s233
          %s235 = smul.addr %s234, 4
          %s236 = scalar_lea.vmem %s1, %s235
        $region36: #{tpu_custom_call.1} parent=27 // pred_fallthru
          _
      $region28: #{tpu_custom_call.1} parent=5 // pred_fallthru
        _
      %p237 = scmp.le.s32.totalorder 1, %s14
      %p238 = scmp.lt.s32.totalorder %s14, 3
      %p239 = pnand %p237, %p238
      %p240 = pneg %p239
      // Predicated region
      $region37: #{tpu_custom_call.1} parent=5 // pred_check
        _
      $region38: #{tpu_custom_call.1} parent=5 // pred_check_branch
        %242 = sbr.rel (%p239) target = $region40
      $region39: #{tpu_custom_call.1} parent=5 // pred_region
        %s243 = ssub.s32 %s14, 1
        %s244 = smul.u32 16, %s24
        %s245 = ssub.s32 18, %s244
        %p246 = scmp.lt.s32.totalorder %s245, 16
        %s247 = scalar_select %p246, %s245, 16
        %s248 = smul.u32 64, %s247
        %s249 = smul.u32 %s248, 3
        %p250 = scmp.lt.s32.totalorder %s23, 1
        %s251 = scalar_select %p250, %s23, 1
        %p252 = scmp.lt.s32.totalorder %s244, 17
        %s253 = scalar_select %p252, %s244, 17
        %s254 = smul.addr %s253, 3
        %s255 = smul.addr %s251, 54
        %s256 = sadd.s32 %s254, %s255
        %s257 = smul.addr %s256, 4
        %s258 = scalar_lea.vmem %s0, %s257
        %p259 = pneg %p54
        %p260 = pneg %p51
        %p261 = scmp.lt.s32.totalorder %s23, 1
        %s262 = scalar_select %p261, %s23, 1
        %p263 = scmp.lt.s32.totalorder %s24, 0
        %s264 = scalar_select %p263, %s24, 0
        %s265 = smul.addr %s264, 6
        %s266 = smul.addr %s262, 6
        %s267 = sadd.s32 %s265, %s266
        %s268 = smul.addr %s267, 4
        %s269 = scalar_lea.vmem %s1, %s268
        %p270 = pneg %p82
        %p271 = pneg %p79
        %p272 = pneg %p103
        %p273 = pneg %p100
        %p274 = pneg %p124
        %p275 = pneg %p121
        %p276 = pneg %p145
        %p277 = pneg %p142
        %p278 = pneg %p173
        %p279 = pneg %p170
        %s280 = sand.u32 %s160, 1
        %s281 = scalar_lea.sflag [#allocation3], %s280
        %s282 = sand.u32 %s160, 1
        %s283 = smul.addr %s282, 128
        %s284 = scalar_lea.vmem [#allocation2], %s283
        %s285 = smul.u32 16, %s24
        %s286 = ssub.s32 18, %s285
        %p287 = scmp.lt.s32.totalorder %s286, 16
        %s288 = scalar_select %p287, %s286, 16
        %s289 = smul.u32 64, %s288
        %s290 = smul.u32 %s289, 3
        %p291 = scmp.lt.s32.totalorder %s23, 1
        %s292 = scalar_select %p291, %s23, 1
        %p293 = scmp.lt.s32.totalorder %s285, 17
        %s294 = scalar_select %p293, %s285, 17
        %s295 = smul.addr %s294, 3
        %s296 = smul.addr %s292, 54
        %s297 = sadd.s32 %s295, %s296
        %s298 = smul.addr %s297, 4
        %s299 = scalar_lea.vmem %s0, %s298
        %s300 = smul.u32 16, %s24
        %s301 = ssub.s32 18, %s300
        %p302 = scmp.lt.s32.totalorder %s301, 16
        %s303 = scalar_select %p302, %s301, 16
        %s304 = smul.u32 64, %s303
        %s305 = smul.u32 %s304, 3
        %p306 = scmp.lt.s32.totalorder %s23, 1
        %s307 = scalar_select %p306, %s23, 1
        %p308 = scmp.lt.s32.totalorder %s24, 0
        %s309 = scalar_select %p308, %s24, 0
        %s310 = smul.addr %s309, 6
        %s311 = smul.addr %s307, 6
        %s312 = sadd.s32 %s310, %s311
        %s313 = smul.addr %s312, 4
        %s314 = scalar_lea.vmem %s1, %s313
        %s315 = smul.u32 16, %s24
        %v317 = vld [vmem:[%s299] sm:$0xf]
        %v318 = vld [vmem:[%s299 + $0x4] sm:$0xf]
        %v319 = vld [vmem:[%s299 + $0x8] sm:$0x1]
        %v320 = vld [vmem:[%s299 + $0xc] sm:$0xf]
        %v321 = vld [vmem:[%s299 + $0x10] sm:$0xf]
        %v322 = vld [vmem:[%s299 + $0x14] sm:$0x1]
        %v323 = vld [vmem:[%s299 + $0x18] sm:$0xf]
        %v324 = vld [vmem:[%s299 + $0x1c] sm:$0xf]
        %v325 = vld [vmem:[%s299 + $0x20] sm:$0x1]
        %v326 = vld [vmem:[%s299 + $0x24] sm:$0xf]
        %v327 = vld [vmem:[%s299 + $0x28] sm:$0xf]
        %v328 = vld [vmem:[%s299 + $0x2c] sm:$0x1]
        %v329 = vld [vmem:[%s299 + $0x30] sm:$0xf]
        %v330 = vld [vmem:[%s299 + $0x34] sm:$0xf]
        %v331 = vld [vmem:[%s299 + $0x38] sm:$0x1]
        %v332 = vld [vmem:[%s299 + $0x3c] sm:$0xf]
        %v333 = vld [vmem:[%s299 + $0x40] sm:$0xf]
        %v334 = vld [vmem:[%s299 + $0x44] sm:$0x1]
        %v335 = vld [vmem:[%s299 + $0x48] sm:$0xf]
        %v336 = vld [vmem:[%s299 + $0x4c] sm:$0xf]
        %v337 = vld [vmem:[%s299 + $0x50] sm:$0x1]
        %v338 = vld [vmem:[%s299 + $0x54] sm:$0xf]
        %v339 = vld [vmem:[%s299 + $0x58] sm:$0xf]
        %v340 = vld [vmem:[%s299 + $0x5c] sm:$0x1]
        %v341 = vld [vmem:[%s299 + $0x60] sm:$0xf]
        %v342 = vld [vmem:[%s299 + $0x64] sm:$0xf]
        %v343 = vld [vmem:[%s299 + $0x68] sm:$0x1]
        %v344 = vld [vmem:[%s299 + $0x6c] sm:$0xf]
        %v345 = vld [vmem:[%s299 + $0x70] sm:$0xf]
        %v346 = vld [vmem:[%s299 + $0x74] sm:$0x1]
        %v347 = vld [vmem:[%s299 + $0x78] sm:$0xf]
        %v348 = vld [vmem:[%s299 + $0x7c] sm:$0xf]
        %v349 = vld [vmem:[%s299 + $0x80] sm:$0x1]
        %v350 = vld [vmem:[%s299 + $0x84] sm:$0xf]
        %v351 = vld [vmem:[%s299 + $0x88] sm:$0xf]
        %v352 = vld [vmem:[%s299 + $0x8c] sm:$0x1]
        %v353 = vld [vmem:[%s299 + $0x90] sm:$0xf]
        %v354 = vld [vmem:[%s299 + $0x94] sm:$0xf]
        %v355 = vld [vmem:[%s299 + $0x98] sm:$0x1]
        %v356 = vld [vmem:[%s299 + $0x9c] sm:$0xf]
        %v357 = vld [vmem:[%s299 + $0xa0] sm:$0xf]
        %v358 = vld [vmem:[%s299 + $0xa4] sm:$0x1]
        %v359 = vld [vmem:[%s299 + $0xa8] sm:$0xf]
        %v360 = vld [vmem:[%s299 + $0xac] sm:$0xf]
        %v361 = vld [vmem:[%s299 + $0xb0] sm:$0x1]
        %v362 = vld [vmem:[%s299 + $0xb4] sm:$0xf]
        %v363 = vld [vmem:[%s299 + $0xb8] sm:$0xf]
        %v364 = vld [vmem:[%s299 + $0xbc] sm:$0x1]
        %v365 = vld [vmem:[%s314] sm:$0xf]
        %v366 = vld [vmem:[%s314 + $0x4] sm:$0xf]
        %v367 = vld [vmem:[%s314 + $0x8] sm:$0x1]
        %v368 = vld [vmem:[%s314 + $0xc] sm:$0xf]
        %v369 = vld [vmem:[%s314 + $0x10] sm:$0xf]
        %v370 = vld [vmem:[%s314 + $0x14] sm:$0x1]
        %v371 = vld [vmem:[%s2] sm:$0xf]
        %v372 = vld [vmem:[%s2 + $0x4] sm:$0xf]
        %v373 = vld [vmem:[%s2 + $0x8] sm:$0xf]
        %v374 = vld [vmem:[%s2 + $0xc] sm:$0xf]
        %v375 = vld [vmem:[%s2 + $0x10] sm:$0xf]
        %v376 = vld [vmem:[%s2 + $0x14] sm:$0xf]
        %v377 = vld [vmem:[%s2 + $0x18] sm:$0xf]
        %v378 = vld [vmem:[%s2 + $0x1c] sm:$0xf]
        %v379 = vld [vmem:[%s2 + $0x20] sm:$0xf]
        %v380 = vld [vmem:[%s2 + $0x24] sm:$0xf]
        %v381 = vld [vmem:[%s2 + $0x28] sm:$0xf]
        %v382 = vld [vmem:[%s2 + $0x2c] sm:$0xf]
        %v383 = vld [vmem:[%s2 + $0x30] sm:$0xf]
        %v384 = vld [vmem:[%s2 + $0x34] sm:$0xf]
        %v385 = vld [vmem:[%s2 + $0x38] sm:$0xf]
        %v386 = vld [vmem:[%s2 + $0x3c] sm:$0xf]
        %vm387 = vsmask.f32 3328
        %vm388 = vsmask.f32 7440
        %vm389 = vmor %vm387, %vm388
        %v391 = vshrl.u32 %v317, 16
        %v393 = vrot.slane %v391, 4
        %v394 = vshll.u32 %v317, 16
        %v396 = vrot.slane %v394, 5
        %v397 = vor.u32 %v393, %v396
        %v398 = vrot.slane %v397, 4
        %v400 = vshll.u32 %v318, 16
        %v402 = vrot.slane %v400, 5
        %v403 = vsel %vm389, %v398, %v402
        %v404 = vshrl.u32 %v318, 16
        %v406 = vrot.slane %v404, 4
        %v407 = vor.u32 %v406, %v402
        %v408 = vrot.slane %v407, 4
        %v410 = vshll.u32 %v319, 16
        %v412 = vrot.slane %v410, 5
        %v413 = vsel %vm389, %v408, %v412
        %v415 = vshrl.u32 %v320, 16
        %v417 = vrot.slane %v415, 4
        %v418 = vshll.u32 %v320, 16
        %v420 = vrot.slane %v418, 5
        %v421 = vor.u32 %v417, %v420
        %v422 = vrot.slane %v421, 4
        %v424 = vshll.u32 %v321, 16
        %v426 = vrot.slane %v424, 5
        %v427 = vsel %vm389, %v422, %v426
        %v428 = vshrl.u32 %v321, 16
        %v430 = vrot.slane %v428, 4
        %v431 = vor.u32 %v430, %v426
        %v432 = vrot.slane %v431, 4
        %v434 = vshll.u32 %v322, 16
        %v436 = vrot.slane %v434, 5
        %v437 = vsel %vm389, %v432, %v436
        %v439 = vshrl.u32 %v323, 16
        %v441 = vrot.slane %v439, 4
        %v442 = vshll.u32 %v323, 16
        %v444 = vrot.slane %v442, 5
        %v445 = vor.u32 %v441, %v444
        %v446 = vrot.slane %v445, 4
        %v448 = vshll.u32 %v324, 16
        %v450 = vrot.slane %v448, 5
        %v451 = vsel %vm389, %v446, %v450
        %v452 = vshrl.u32 %v324, 16
        %v454 = vrot.slane %v452, 4
        %v455 = vor.u32 %v454, %v450
        %v456 = vrot.slane %v455, 4
        %v458 = vshll.u32 %v325, 16
        %v460 = vrot.slane %v458, 5
        %v461 = vsel %vm389, %v456, %v460
        %v463 = vshrl.u32 %v326, 16
        %v465 = vrot.slane %v463, 4
        %v466 = vshll.u32 %v326, 16
        %v468 = vrot.slane %v466, 5
        %v469 = vor.u32 %v465, %v468
        %v470 = vrot.slane %v469, 4
        %v472 = vshll.u32 %v327, 16
        %v474 = vrot.slane %v472, 5
        %v475 = vsel %vm389, %v470, %v474
        %v476 = vshrl.u32 %v327, 16
        %v478 = vrot.slane %v476, 4
        %v479 = vor.u32 %v478, %v474
        %v480 = vrot.slane %v479, 4
        %v482 = vshll.u32 %v328, 16
        %v484 = vrot.slane %v482, 5
        %v485 = vsel %vm389, %v480, %v484
        %v487 = vshrl.u32 %v329, 16
        %v489 = vrot.slane %v487, 4
        %v490 = vshll.u32 %v329, 16
        %v492 = vrot.slane %v490, 5
        %v493 = vor.u32 %v489, %v492
        %v494 = vrot.slane %v493, 4
        %v496 = vshll.u32 %v330, 16
        %v498 = vrot.slane %v496, 5
        %v499 = vsel %vm389, %v494, %v498
        %v500 = vshrl.u32 %v330, 16
        %v502 = vrot.slane %v500, 4
        %v503 = vor.u32 %v502, %v498
        %v504 = vrot.slane %v503, 4
        %v506 = vshll.u32 %v331, 16
        %v508 = vrot.slane %v506, 5
        %v509 = vsel %vm389, %v504, %v508
        %v511 = vshrl.u32 %v332, 16
        %v513 = vrot.slane %v511, 4
        %v514 = vshll.u32 %v332, 16
        %v516 = vrot.slane %v514, 5
        %v517 = vor.u32 %v513, %v516
        %v518 = vrot.slane %v517, 4
        %v520 = vshll.u32 %v333, 16
        %v522 = vrot.slane %v520, 5
        %v523 = vsel %vm389, %v518, %v522
        %v524 = vshrl.u32 %v333, 16
        %v526 = vrot.slane %v524, 4
        %v527 = vor.u32 %v526, %v522
        %v528 = vrot.slane %v527, 4
        %v530 = vshll.u32 %v334, 16
        %v532 = vrot.slane %v530, 5
        %v533 = vsel %vm389, %v528, %v532
        %v535 = vshrl.u32 %v335, 16
        %v537 = vrot.slane %v535, 4
        %v538 = vshll.u32 %v335, 16
        %v540 = vrot.slane %v538, 5
        %v541 = vor.u32 %v537, %v540
        %v542 = vrot.slane %v541, 4
        %v544 = vshll.u32 %v336, 16
        %v546 = vrot.slane %v544, 5
        %v547 = vsel %vm389, %v542, %v546
        %v548 = vshrl.u32 %v336, 16
        %v550 = vrot.slane %v548, 4
        %v551 = vor.u32 %v550, %v546
        %v552 = vrot.slane %v551, 4
        %v554 = vshll.u32 %v337, 16
        %v556 = vrot.slane %v554, 5
        %v557 = vsel %vm389, %v552, %v556
        %v559 = vshrl.u32 %v338, 16
        %v561 = vrot.slane %v559, 4
        %v562 = vshll.u32 %v338, 16
        %v564 = vrot.slane %v562, 5
        %v565 = vor.u32 %v561, %v564
        %v566 = vrot.slane %v565, 4
        %v568 = vshll.u32 %v339, 16
        %v570 = vrot.slane %v568, 5
        %v571 = vsel %vm389, %v566, %v570
        %v572 = vshrl.u32 %v339, 16
        %v574 = vrot.slane %v572, 4
        %v575 = vor.u32 %v574, %v570
        %v576 = vrot.slane %v575, 4
        %v578 = vshll.u32 %v340, 16
        %v580 = vrot.slane %v578, 5
        %v581 = vsel %vm389, %v576, %v580
        %v583 = vshrl.u32 %v341, 16
        %v585 = vrot.slane %v583, 4
        %v586 = vshll.u32 %v341, 16
        %v588 = vrot.slane %v586, 5
        %v589 = vor.u32 %v585, %v588
        %v590 = vrot.slane %v589, 4
        %v592 = vshll.u32 %v342, 16
        %v594 = vrot.slane %v592, 5
        %v595 = vsel %vm389, %v590, %v594
        %v596 = vshrl.u32 %v342, 16
        %v598 = vrot.slane %v596, 4
        %v599 = vor.u32 %v598, %v594
        %v600 = vrot.slane %v599, 4
        %v602 = vshll.u32 %v343, 16
        %v604 = vrot.slane %v602, 5
        %v605 = vsel %vm389, %v600, %v604
        %v607 = vshrl.u32 %v344, 16
        %v609 = vrot.slane %v607, 4
        %v610 = vshll.u32 %v344, 16
        %v612 = vrot.slane %v610, 5
        %v613 = vor.u32 %v609, %v612
        %v614 = vrot.slane %v613, 4
        %v616 = vshll.u32 %v345, 16
        %v618 = vrot.slane %v616, 5
        %v619 = vsel %vm389, %v614, %v618
        %v620 = vshrl.u32 %v345, 16
        %v622 = vrot.slane %v620, 4
        %v623 = vor.u32 %v622, %v618
        %v624 = vrot.slane %v623, 4
        %v626 = vshll.u32 %v346, 16
        %v628 = vrot.slane %v626, 5
        %v629 = vsel %vm389, %v624, %v628
        %v631 = vshrl.u32 %v347, 16
        %v633 = vrot.slane %v631, 4
        %v634 = vshll.u32 %v347, 16
        %v636 = vrot.slane %v634, 5
        %v637 = vor.u32 %v633, %v636
        %v638 = vrot.slane %v637, 4
        %v640 = vshll.u32 %v348, 16
        %v642 = vrot.slane %v640, 5
        %v643 = vsel %vm389, %v638, %v642
        %v644 = vshrl.u32 %v348, 16
        %v646 = vrot.slane %v644, 4
        %v647 = vor.u32 %v646, %v642
        %v648 = vrot.slane %v647, 4
        %v650 = vshll.u32 %v349, 16
        %v652 = vrot.slane %v650, 5
        %v653 = vsel %vm389, %v648, %v652
        %v655 = vshrl.u32 %v350, 16
        %v657 = vrot.slane %v655, 4
        %v658 = vshll.u32 %v350, 16
        %v660 = vrot.slane %v658, 5
        %v661 = vor.u32 %v657, %v660
        %v662 = vrot.slane %v661, 4
        %v664 = vshll.u32 %v351, 16
        %v666 = vrot.slane %v664, 5
        %v667 = vsel %vm389, %v662, %v666
        %v668 = vshrl.u32 %v351, 16
        %v670 = vrot.slane %v668, 4
        %v671 = vor.u32 %v670, %v666
        %v672 = vrot.slane %v671, 4
        %v674 = vshll.u32 %v352, 16
        %v676 = vrot.slane %v674, 5
        %v677 = vsel %vm389, %v672, %v676
        %v679 = vshrl.u32 %v353, 16
        %v681 = vrot.slane %v679, 4
        %v682 = vshll.u32 %v353, 16
        %v684 = vrot.slane %v682, 5
        %v685 = vor.u32 %v681, %v684
        %v686 = vrot.slane %v685, 4
        %v688 = vshll.u32 %v354, 16
        %v690 = vrot.slane %v688, 5
        %v691 = vsel %vm389, %v686, %v690
        %v692 = vshrl.u32 %v354, 16
        %v694 = vrot.slane %v692, 4
        %v695 = vor.u32 %v694, %v690
        %v696 = vrot.slane %v695, 4
        %v698 = vshll.u32 %v355, 16
        %v700 = vrot.slane %v698, 5
        %v701 = vsel %vm389, %v696, %v700
        %v703 = vshrl.u32 %v356, 16
        %v705 = vrot.slane %v703, 4
        %v706 = vshll.u32 %v356, 16
        %v708 = vrot.slane %v706, 5
        %v709 = vor.u32 %v705, %v708
        %v710 = vrot.slane %v709, 4
        %v712 = vshll.u32 %v357, 16
        %v714 = vrot.slane %v712, 5
        %v715 = vsel %vm389, %v710, %v714
        %v716 = vshrl.u32 %v357, 16
        %v718 = vrot.slane %v716, 4
        %v719 = vor.u32 %v718, %v714
        %v720 = vrot.slane %v719, 4
        %v722 = vshll.u32 %v358, 16
        %v724 = vrot.slane %v722, 5
        %v725 = vsel %vm389, %v720, %v724
        %v727 = vshrl.u32 %v359, 16
        %v729 = vrot.slane %v727, 4
        %v730 = vshll.u32 %v359, 16
        %v732 = vrot.slane %v730, 5
        %v733 = vor.u32 %v729, %v732
        %v734 = vrot.slane %v733, 4
        %v736 = vshll.u32 %v360, 16
        %v738 = vrot.slane %v736, 5
        %v739 = vsel %vm389, %v734, %v738
        %v740 = vshrl.u32 %v360, 16
        %v742 = vrot.slane %v740, 4
        %v743 = vor.u32 %v742, %v738
        %v744 = vrot.slane %v743, 4
        %v746 = vshll.u32 %v361, 16
        %v748 = vrot.slane %v746, 5
        %v749 = vsel %vm389, %v744, %v748
        %v751 = vshrl.u32 %v362, 16
        %v753 = vrot.slane %v751, 4
        %v754 = vshll.u32 %v362, 16
        %v756 = vrot.slane %v754, 5
        %v757 = vor.u32 %v753, %v756
        %v758 = vrot.slane %v757, 4
        %v760 = vshll.u32 %v363, 16
        %v762 = vrot.slane %v760, 5
        %v763 = vsel %vm389, %v758, %v762
        %v764 = vshrl.u32 %v363, 16
        %v766 = vrot.slane %v764, 4
        %v767 = vor.u32 %v766, %v762
        %v768 = vrot.slane %v767, 4
        %v770 = vshll.u32 %v364, 16
        %v772 = vrot.slane %v770, 5
        %v773 = vsel %vm389, %v768, %v772
        %s774 = scalar_lea.vmem %s2, 64
        %v775 = vld [vmem:[%s774] sm:$0xf]
        %v776 = vld [vmem:[%s774 + $0x4] sm:$0xf]
        %v777 = vld [vmem:[%s774 + $0x8] sm:$0xf]
        %v778 = vld [vmem:[%s774 + $0xc] sm:$0xf]
        %v779 = vld [vmem:[%s774 + $0x10] sm:$0xf]
        %v780 = vld [vmem:[%s774 + $0x14] sm:$0xf]
        %v781 = vld [vmem:[%s774 + $0x18] sm:$0xf]
        %v782 = vld [vmem:[%s774 + $0x1c] sm:$0xf]
        %v783 = vld [vmem:[%s774 + $0x20] sm:$0xf]
        %v784 = vld [vmem:[%s774 + $0x24] sm:$0xf]
        %v785 = vld [vmem:[%s774 + $0x28] sm:$0xf]
        %v786 = vld [vmem:[%s774 + $0x2c] sm:$0xf]
        %v787 = vld [vmem:[%s774 + $0x30] sm:$0xf]
        %v788 = vld [vmem:[%s774 + $0x34] sm:$0xf]
        %v789 = vld [vmem:[%s774 + $0x38] sm:$0xf]
        %v790 = vld [vmem:[%s774 + $0x3c] sm:$0xf]
        %v791 = vunpack.c.l.b16 %v403
        %v792 = vunpack.c.l.b16 %v413
        %v793 = vunpack.c.l.b16 %v427
        %v794 = vunpack.c.l.b16 %v437
        %v795 = vunpack.c.l.b16 %v451
        %v796 = vunpack.c.l.b16 %v461
        %v797 = vunpack.c.l.b16 %v475
        %v798 = vunpack.c.l.b16 %v485
        %v799 = vunpack.c.l.b16 %v499
        %v800 = vunpack.c.l.b16 %v509
        %v801 = vunpack.c.l.b16 %v523
        %v802 = vunpack.c.l.b16 %v533
        %v803 = vunpack.c.l.b16 %v547
        %v804 = vunpack.c.l.b16 %v557
        %v805 = vunpack.c.l.b16 %v571
        %v806 = vunpack.c.l.b16 %v581
        %v807 = vunpack.c.l.b16 %v595
        %v808 = vunpack.c.l.b16 %v605
        %v809 = vunpack.c.l.b16 %v619
        %v810 = vunpack.c.l.b16 %v629
        %v811 = vunpack.c.l.b16 %v643
        %v812 = vunpack.c.l.b16 %v653
        %v813 = vunpack.c.l.b16 %v667
        %v814 = vunpack.c.l.b16 %v677
        %v815 = vunpack.c.l.b16 %v691
        %v816 = vunpack.c.l.b16 %v701
        %v817 = vunpack.c.l.b16 %v715
        %v818 = vunpack.c.l.b16 %v725
        %v819 = vunpack.c.l.b16 %v739
        %v820 = vunpack.c.l.b16 %v749
        %v821 = vunpack.c.l.b16 %v763
        %v822 = vunpack.c.l.b16 %v773
        %v823 = vpack.c.b16 %v792, %v791
        %v824 = vpack.c.b16 %v794, %v793
        %v825 = vpack.c.b16 %v796, %v795
        %v826 = vpack.c.b16 %v798, %v797
        %v827 = vpack.c.b16 %v800, %v799
        %v828 = vpack.c.b16 %v802, %v801
        %v829 = vpack.c.b16 %v804, %v803
        %v830 = vpack.c.b16 %v806, %v805
        %v831 = vpack.c.b16 %v808, %v807
        %v832 = vpack.c.b16 %v810, %v809
        %v833 = vpack.c.b16 %v812, %v811
        %v834 = vpack.c.b16 %v814, %v813
        %v835 = vpack.c.b16 %v816, %v815
        %v836 = vpack.c.b16 %v818, %v817
        %v837 = vpack.c.b16 %v820, %v819
        %v838 = vpack.c.b16 %v822, %v821
        %v871 = vunpack.c.l.b16 %v775
        %v872 = vunpack.c.l.b16 %v776
        %v873 = vunpack.c.l.b16 %v777
        %v874 = vunpack.c.l.b16 %v778
        %v875 = vunpack.c.l.b16 %v779
        %v876 = vunpack.c.l.b16 %v780
        %v877 = vunpack.c.l.b16 %v781
        %v878 = vunpack.c.l.b16 %v782
        %v879 = vunpack.c.l.b16 %v783
        %v880 = vunpack.c.l.b16 %v784
        %v881 = vunpack.c.l.b16 %v785
        %v882 = vunpack.c.l.b16 %v786
        %v883 = vunpack.c.l.b16 %v787
        %v884 = vunpack.c.l.b16 %v788
        %v885 = vunpack.c.l.b16 %v789
        %v886 = vunpack.c.l.b16 %v790
        %v887 = vpack.c.b16 %v872, %v871
        %v888 = vpack.c.b16 %v874, %v873
        %v889 = vpack.c.b16 %v876, %v875
        %v890 = vpack.c.b16 %v878, %v877
        %v891 = vpack.c.b16 %v880, %v879
        %v892 = vpack.c.b16 %v882, %v881
        %v893 = vpack.c.b16 %v884, %v883
        %v894 = vpack.c.b16 %v886, %v885
        %903 = vmatprep.subr.bf16.mxu0 0
        %904 = vmatpush1.bf16.msra.mxu0 %v887
        %905 = vmatprep.subr.bf16.mxu0 0
        %906 = vmatpush1.bf16.msra.mxu0 %v888
        %907 = vmatprep.subr.bf16.mxu0 0
        %908 = vmatpush1.bf16.msra.mxu0 %v889
        %909 = vmatprep.subr.bf16.mxu0 0
        %910 = vmatpush1.bf16.msra.mxu0 %v890
        %911 = vmatprep.subr.bf16.mxu0 0
        %912 = vmatpush1.bf16.msra.mxu0 %v891
        %913 = vmatprep.subr.bf16.mxu0 0
        %914 = vmatpush1.bf16.msra.mxu0 %v892
        %915 = vmatprep.subr.bf16.mxu0 0
        %916 = vmatpush1.bf16.msra.mxu0 %v893
        %917 = vmatprep.subr.bf16.mxu0 0
        %918 = vmatpush1.bf16.msra.mxu0 %v894
        %919 = vmatprep.subr.bf16.mxu0 0
        %920 = vmatpush1.bf16.msra.mxu0 0
        %921 = vmatprep.subr.bf16.mxu0 0
        %922 = vmatpush1.bf16.msra.mxu0 0
        %923 = vmatprep.subr.bf16.mxu0 0
        %924 = vmatpush1.bf16.msra.mxu0 0
        %925 = vmatprep.subr.bf16.mxu0 0
        %926 = vmatpush1.bf16.msra.mxu0 0
        %927 = vmatprep.subr.bf16.mxu0 0
        %928 = vmatpush1.bf16.msra.mxu0 0
        %929 = vmatprep.subr.bf16.mxu0 0
        %930 = vmatpush1.bf16.msra.mxu0 0
        %931 = vmatprep.subr.bf16.mxu0 0
        %932 = vmatpush1.bf16.msra.mxu0 0
        %933 = vmatprep.subr.bf16.mxu0 0
        %934 = vmatpush1.bf16.msra.mxu0 0
        %935 = vmatprep.mubr.bf16.mxu0 0
        %936 = vmatmul.mubr.bf16.gmra.mrb[0].mxu0 %v823
        %v937 = vpop.f32.mrb[0].mxu0
        %v938 = vadd.f32 0.0, %v937
        %v939 = vpop.f32.mrb[0].mxu0
        %v940 = vpop.f32.mrb[0].mxu0
        %v941 = vadd.f32 0.0, %v940
        %v942 = vpop.f32.mrb[0].mxu0
        %943 = vmatprep.mubr.bf16.mxu0 0
        %944 = vmatmul.mubr.bf16.gmra.mrb[0].mxu0 %v824
        %v945 = vpop.f32.mrb[0].mxu0
        %v946 = vadd.f32 0.0, %v945
        %v947 = vpop.f32.mrb[0].mxu0
        %v948 = vpop.f32.mrb[0].mxu0
        %v949 = vadd.f32 0.0, %v948
        %v950 = vpop.f32.mrb[0].mxu0
        %951 = vmatprep.mubr.bf16.mxu0 0
        %952 = vmatmul.mubr.bf16.gmra.mrb[0].mxu0 %v825
        %v953 = vpop.f32.mrb[0].mxu0
        %v954 = vadd.f32 0.0, %v953
        %v955 = vpop.f32.mrb[0].mxu0
        %v956 = vpop.f32.mrb[0].mxu0
        %v957 = vadd.f32 0.0, %v956
        %v958 = vpop.f32.mrb[0].mxu0
        %959 = vmatprep.mubr.bf16.mxu0 0
        %960 = vmatmul.mubr.bf16.gmra.mrb[0].mxu0 %v826
        %v961 = vpop.f32.mrb[0].mxu0
        %v962 = vadd.f32 0.0, %v961
        %v963 = vpop.f32.mrb[0].mxu0
        %v964 = vpop.f32.mrb[0].mxu0
        %v965 = vadd.f32 0.0, %v964
        %v966 = vpop.f32.mrb[0].mxu0
        %967 = vmatprep.mubr.bf16.mxu0 0
        %968 = vmatmul.mubr.bf16.gmra.mrb[0].mxu0 %v827
        %v969 = vpop.f32.mrb[0].mxu0
        %v970 = vadd.f32 0.0, %v969
        %v971 = vpop.f32.mrb[0].mxu0
        %v972 = vpop.f32.mrb[0].mxu0
        %v973 = vadd.f32 0.0, %v972
        %v974 = vpop.f32.mrb[0].mxu0
        %975 = vmatprep.mubr.bf16.mxu0 0
        %976 = vmatmul.mubr.bf16.gmra.mrb[0].mxu0 %v828
        %v977 = vpop.f32.mrb[0].mxu0
        %v978 = vadd.f32 0.0, %v977
        %v979 = vpop.f32.mrb[0].mxu0
        %v980 = vpop.f32.mrb[0].mxu0
        %v981 = vadd.f32 0.0, %v980
        %v982 = vpop.f32.mrb[0].mxu0
        %983 = vmatprep.mubr.bf16.mxu0 0
        %984 = vmatmul.mubr.bf16.gmra.mrb[0].mxu0 %v829
        %v985 = vpop.f32.mrb[0].mxu0
        %v986 = vadd.f32 0.0, %v985
        %v987 = vpop.f32.mrb[0].mxu0
        %v988 = vpop.f32.mrb[0].mxu0
        %v989 = vadd.f32 0.0, %v988
        %v990 = vpop.f32.mrb[0].mxu0
        %991 = vmatprep.mubr.bf16.mxu0 0
        %992 = vmatmul.mubr.bf16.gmra.mrb[0].mxu0 %v830
        %v993 = vpop.f32.mrb[0].mxu0
        %v994 = vadd.f32 0.0, %v993
        %v995 = vpop.f32.mrb[0].mxu0
        %v996 = vpop.f32.mrb[0].mxu0
        %v997 = vadd.f32 0.0, %v996
        %v998 = vpop.f32.mrb[0].mxu0
        %999 = vmatprep.mubr.bf16.mxu0 0
        %1000 = vmatmul.mubr.bf16.gmra.mrb[0].mxu0 %v831
        %v1001 = vpop.f32.mrb[0].mxu0
        %v1002 = vadd.f32 0.0, %v1001
        %v1003 = vpop.f32.mrb[0].mxu0
        %v1004 = vpop.f32.mrb[0].mxu0
        %v1005 = vadd.f32 0.0, %v1004
        %v1006 = vpop.f32.mrb[0].mxu0
        %1007 = vmatprep.mubr.bf16.mxu0 0
        %1008 = vmatmul.mubr.bf16.gmra.mrb[0].mxu0 %v832
        %v1009 = vpop.f32.mrb[0].mxu0
        %v1010 = vadd.f32 0.0, %v1009
        %v1011 = vpop.f32.mrb[0].mxu0
        %v1012 = vpop.f32.mrb[0].mxu0
        %v1013 = vadd.f32 0.0, %v1012
        %v1014 = vpop.f32.mrb[0].mxu0
        %1015 = vmatprep.mubr.bf16.mxu0 0
        %1016 = vmatmul.mubr.bf16.gmra.mrb[0].mxu0 %v833
        %v1017 = vpop.f32.mrb[0].mxu0
        %v1018 = vadd.f32 0.0, %v1017
        %v1019 = vpop.f32.mrb[0].mxu0
        %v1020 = vpop.f32.mrb[0].mxu0
        %v1021 = vadd.f32 0.0, %v1020
        %v1022 = vpop.f32.mrb[0].mxu0
        %1023 = vmatprep.mubr.bf16.mxu0 0
        %1024 = vmatmul.mubr.bf16.gmra.mrb[0].mxu0 %v834
        %v1025 = vpop.f32.mrb[0].mxu0
        %v1026 = vadd.f32 0.0, %v1025
        %v1027 = vpop.f32.mrb[0].mxu0
        %v1028 = vpop.f32.mrb[0].mxu0
        %v1029 = vadd.f32 0.0, %v1028
        %v1030 = vpop.f32.mrb[0].mxu0
        %1031 = vmatprep.mubr.bf16.mxu0 0
        %1032 = vmatmul.mubr.bf16.gmra.mrb[0].mxu0 %v835
        %v1033 = vpop.f32.mrb[0].mxu0
        %v1034 = vadd.f32 0.0, %v1033
        %v1035 = vpop.f32.mrb[0].mxu0
        %v1036 = vpop.f32.mrb[0].mxu0
        %v1037 = vadd.f32 0.0, %v1036
        %v1038 = vpop.f32.mrb[0].mxu0
        %1039 = vmatprep.mubr.bf16.mxu0 0
        %1040 = vmatmul.mubr.bf16.gmra.mrb[0].mxu0 %v836
        %v1041 = vpop.f32.mrb[0].mxu0
        %v1042 = vadd.f32 0.0, %v1041
        %v1043 = vpop.f32.mrb[0].mxu0
        %v1044 = vpop.f32.mrb[0].mxu0
        %v1045 = vadd.f32 0.0, %v1044
        %v1046 = vpop.f32.mrb[0].mxu0
        %1047 = vmatprep.mubr.bf16.mxu0 0
        %1048 = vmatmul.mubr.bf16.gmra.mrb[0].mxu0 %v837
        %v1049 = vpop.f32.mrb[0].mxu0
        %v1050 = vadd.f32 0.0, %v1049
        %v1051 = vpop.f32.mrb[0].mxu0
        %v1052 = vpop.f32.mrb[0].mxu0
        %v1053 = vadd.f32 0.0, %v1052
        %v1054 = vpop.f32.mrb[0].mxu0
        %1055 = vmatprep.mubr.bf16.mxu0 0
        %1056 = vmatmul.mubr.bf16.gmra.mrb[0].mxu0 %v838
        %v1057 = vpop.f32.mrb[0].mxu0
        %v1058 = vadd.f32 0.0, %v1057
        %v1059 = vpop.f32.mrb[0].mxu0
        %v1060 = vpop.f32.mrb[0].mxu0
        %v1061 = vadd.f32 0.0, %v1060
        %v1062 = vpop.f32.mrb[0].mxu0
        %1063 = vdwg.mxu0
        %v1096 = vunpack.c.l.b16 %v317
        %v1097 = vunpack.c.l.b16 %v318
        %v1098 = vunpack.c.l.b16 %v320
        %v1099 = vunpack.c.l.b16 %v321
        %v1100 = vunpack.c.l.b16 %v323
        %v1101 = vunpack.c.l.b16 %v324
        %v1102 = vunpack.c.l.b16 %v326
        %v1103 = vunpack.c.l.b16 %v327
        %v1104 = vunpack.c.l.b16 %v329
        %v1105 = vunpack.c.l.b16 %v330
        %v1106 = vunpack.c.l.b16 %v332
        %v1107 = vunpack.c.l.b16 %v333
        %v1108 = vunpack.c.l.b16 %v335
        %v1109 = vunpack.c.l.b16 %v336
        %v1110 = vunpack.c.l.b16 %v338
        %v1111 = vunpack.c.l.b16 %v339
        %v1112 = vunpack.c.l.b16 %v341
        %v1113 = vunpack.c.l.b16 %v342
        %v1114 = vunpack.c.l.b16 %v344
        %v1115 = vunpack.c.l.b16 %v345
        %v1116 = vunpack.c.l.b16 %v347
        %v1117 = vunpack.c.l.b16 %v348
        %v1118 = vunpack.c.l.b16 %v350
        %v1119 = vunpack.c.l.b16 %v351
        %v1120 = vunpack.c.l.b16 %v353
        %v1121 = vunpack.c.l.b16 %v354
        %v1122 = vunpack.c.l.b16 %v356
        %v1123 = vunpack.c.l.b16 %v357
        %v1124 = vunpack.c.l.b16 %v359
        %v1125 = vunpack.c.l.b16 %v360
        %v1126 = vunpack.c.l.b16 %v362
        %v1127 = vunpack.c.l.b16 %v363
        %v1128 = vpack.c.b16 %v1097, %v1096
        %v1129 = vpack.c.b16 %v1099, %v1098
        %v1130 = vpack.c.b16 %v1101, %v1100
        %v1131 = vpack.c.b16 %v1103, %v1102
        %v1132 = vpack.c.b16 %v1105, %v1104
        %v1133 = vpack.c.b16 %v1107, %v1106
        %v1134 = vpack.c.b16 %v1109, %v1108
        %v1135 = vpack.c.b16 %v1111, %v1110
        %v1136 = vpack.c.b16 %v1113, %v1112
        %v1137 = vpack.c.b16 %v1115, %v1114
        %v1138 = vpack.c.b16 %v1117, %v1116
        %v1139 = vpack.c.b16 %v1119, %v1118
        %v1140 = vpack.c.b16 %v1121, %v1120
        %v1141 = vpack.c.b16 %v1123, %v1122
        %v1142 = vpack.c.b16 %v1125, %v1124
        %v1143 = vpack.c.b16 %v1127, %v1126
        %v1176 = vunpack.c.l.b16 %v371
        %v1177 = vunpack.c.l.b16 %v372
        %v1178 = vunpack.c.l.b16 %v373
        %v1179 = vunpack.c.l.b16 %v374
        %v1180 = vunpack.c.l.b16 %v375
        %v1181 = vunpack.c.l.b16 %v376
        %v1182 = vunpack.c.l.b16 %v377
        %v1183 = vunpack.c.l.b16 %v378
        %v1184 = vunpack.c.l.b16 %v379
        %v1185 = vunpack.c.l.b16 %v380
        %v1186 = vunpack.c.l.b16 %v381
        %v1187 = vunpack.c.l.b16 %v382
        %v1188 = vunpack.c.l.b16 %v383
        %v1189 = vunpack.c.l.b16 %v384
        %v1190 = vunpack.c.l.b16 %v385
        %v1191 = vunpack.c.l.b16 %v386
        %v1192 = vpack.c.b16 %v1177, %v1176
        %v1193 = vpack.c.b16 %v1179, %v1178
        %v1194 = vpack.c.b16 %v1181, %v1180
        %v1195 = vpack.c.b16 %v1183, %v1182
        %v1196 = vpack.c.b16 %v1185, %v1184
        %v1197 = vpack.c.b16 %v1187, %v1186
        %v1198 = vpack.c.b16 %v1189, %v1188
        %v1199 = vpack.c.b16 %v1191, %v1190
        %1208 = vmatprep.subr.bf16.mxu0 0
        %1209 = vmatpush1.bf16.msra.mxu0 %v1192
        %1210 = vmatprep.subr.bf16.mxu0 0
        %1211 = vmatpush1.bf16.msra.mxu0 %v1193
        %1212 = vmatprep.subr.bf16.mxu0 0
        %1213 = vmatpush1.bf16.msra.mxu0 %v1194
        %1214 = vmatprep.subr.bf16.mxu0 0
        %1215 = vmatpush1.bf16.msra.mxu0 %v1195
        %1216 = vmatprep.subr.bf16.mxu0 0
        %1217 = vmatpush1.bf16.msra.mxu0 %v1196
        %1218 = vmatprep.subr.bf16.mxu0 0
        %1219 = vmatpush1.bf16.msra.mxu0 %v1197
        %1220 = vmatprep.subr.bf16.mxu0 0
        %1221 = vmatpush1.bf16.msra.mxu0 %v1198
        %1222 = vmatprep.subr.bf16.mxu0 0
        %1223 = vmatpush1.bf16.msra.mxu0 %v1199
        %1224 = vmatprep.subr.bf16.mxu0 0
        %1225 = vmatpush1.bf16.msra.mxu0 0
        %1226 = vmatprep.subr.bf16.mxu0 0
        %1227 = vmatpush1.bf16.msra.mxu0 0
        %1228 = vmatprep.subr.bf16.mxu0 0
        %1229 = vmatpush1.bf16.msra.mxu0 0
        %1230 = vmatprep.subr.bf16.mxu0 0
        %1231 = vmatpush1.bf16.msra.mxu0 0
        %1232 = vmatprep.subr.bf16.mxu0 0
        %1233 = vmatpush1.bf16.msra.mxu0 0
        %1234 = vmatprep.subr.bf16.mxu0 0
        %1235 = vmatpush1.bf16.msra.mxu0 0
        %1236 = vmatprep.subr.bf16.mxu0 0
        %1237 = vmatpush1.bf16.msra.mxu0 0
        %1238 = vmatprep.subr.bf16.mxu0 0
        %1239 = vmatpush1.bf16.msra.mxu0 0
        %1240 = vmatprep.mubr.bf16.mxu0 0
        %1241 = vmatmul.mubr.bf16.gmra.mrb[0].mxu0 %v1128
        %v1242 = vpop.f32.mrb[0].mxu0
        %v1243 = vadd.f32 %v938, %v1242
        %v1244 = vpop.f32.mrb[0].mxu0
        %v1245 = vpop.f32.mrb[0].mxu0
        %v1246 = vadd.f32 %v941, %v1245
        %v1247 = vpop.f32.mrb[0].mxu0
        %1248 = vmatprep.mubr.bf16.mxu0 0
        %1249 = vmatmul.mubr.bf16.gmra.mrb[0].mxu0 %v1129
        %v1250 = vpop.f32.mrb[0].mxu0
        %v1251 = vadd.f32 %v946, %v1250
        %v1252 = vpop.f32.mrb[0].mxu0
        %v1253 = vpop.f32.mrb[0].mxu0
        %v1254 = vadd.f32 %v949, %v1253
        %v1255 = vpop.f32.mrb[0].mxu0
        %1256 = vmatprep.mubr.bf16.mxu0 0
        %1257 = vmatmul.mubr.bf16.gmra.mrb[0].mxu0 %v1130
        %v1258 = vpop.f32.mrb[0].mxu0
        %v1259 = vadd.f32 %v954, %v1258
        %v1260 = vpop.f32.mrb[0].mxu0
        %v1261 = vpop.f32.mrb[0].mxu0
        %v1262 = vadd.f32 %v957, %v1261
        %v1263 = vpop.f32.mrb[0].mxu0
        %1264 = vmatprep.mubr.bf16.mxu0 0
        %1265 = vmatmul.mubr.bf16.gmra.mrb[0].mxu0 %v1131
        %v1266 = vpop.f32.mrb[0].mxu0
        %v1267 = vadd.f32 %v962, %v1266
        %v1268 = vpop.f32.mrb[0].mxu0
        %v1269 = vpop.f32.mrb[0].mxu0
        %v1270 = vadd.f32 %v965, %v1269
        %v1271 = vpop.f32.mrb[0].mxu0
        %1272 = vmatprep.mubr.bf16.mxu0 0
        %1273 = vmatmul.mubr.bf16.gmra.mrb[0].mxu0 %v1132
        %v1274 = vpop.f32.mrb[0].mxu0
        %v1275 = vadd.f32 %v970, %v1274
        %v1276 = vpop.f32.mrb[0].mxu0
        %v1277 = vpop.f32.mrb[0].mxu0
        %v1278 = vadd.f32 %v973, %v1277
        %v1279 = vpop.f32.mrb[0].mxu0
        %1280 = vmatprep.mubr.bf16.mxu0 0
        %1281 = vmatmul.mubr.bf16.gmra.mrb[0].mxu0 %v1133
        %v1282 = vpop.f32.mrb[0].mxu0
        %v1283 = vadd.f32 %v978, %v1282
        %v1284 = vpop.f32.mrb[0].mxu0
        %v1285 = vpop.f32.mrb[0].mxu0
        %v1286 = vadd.f32 %v981, %v1285
        %v1287 = vpop.f32.mrb[0].mxu0
        %1288 = vmatprep.mubr.bf16.mxu0 0
        %1289 = vmatmul.mubr.bf16.gmra.mrb[0].mxu0 %v1134
        %v1290 = vpop.f32.mrb[0].mxu0
        %v1291 = vadd.f32 %v986, %v1290
        %v1292 = vpop.f32.mrb[0].mxu0
        %v1293 = vpop.f32.mrb[0].mxu0
        %v1294 = vadd.f32 %v989, %v1293
        %v1295 = vpop.f32.mrb[0].mxu0
        %1296 = vmatprep.mubr.bf16.mxu0 0
        %1297 = vmatmul.mubr.bf16.gmra.mrb[0].mxu0 %v1135
        %v1298 = vpop.f32.mrb[0].mxu0
        %v1299 = vadd.f32 %v994, %v1298
        %v1300 = vpop.f32.mrb[0].mxu0
        %v1301 = vpop.f32.mrb[0].mxu0
        %v1302 = vadd.f32 %v997, %v1301
        %v1303 = vpop.f32.mrb[0].mxu0
        %1304 = vmatprep.mubr.bf16.mxu0 0
        %1305 = vmatmul.mubr.bf16.gmra.mrb[0].mxu0 %v1136
        %v1306 = vpop.f32.mrb[0].mxu0
        %v1307 = vadd.f32 %v1002, %v1306
        %v1308 = vpop.f32.mrb[0].mxu0
        %v1309 = vpop.f32.mrb[0].mxu0
        %v1310 = vadd.f32 %v1005, %v1309
        %v1311 = vpop.f32.mrb[0].mxu0
        %1312 = vmatprep.mubr.bf16.mxu0 0
        %1313 = vmatmul.mubr.bf16.gmra.mrb[0].mxu0 %v1137
        %v1314 = vpop.f32.mrb[0].mxu0
        %v1315 = vadd.f32 %v1010, %v1314
        %v1316 = vpop.f32.mrb[0].mxu0
        %v1317 = vpop.f32.mrb[0].mxu0
        %v1318 = vadd.f32 %v1013, %v1317
        %v1319 = vpop.f32.mrb[0].mxu0
        %1320 = vmatprep.mubr.bf16.mxu0 0
        %1321 = vmatmul.mubr.bf16.gmra.mrb[0].mxu0 %v1138
        %v1322 = vpop.f32.mrb[0].mxu0
        %v1323 = vadd.f32 %v1018, %v1322
        %v1324 = vpop.f32.mrb[0].mxu0
        %v1325 = vpop.f32.mrb[0].mxu0
        %v1326 = vadd.f32 %v1021, %v1325
        %v1327 = vpop.f32.mrb[0].mxu0
        %1328 = vmatprep.mubr.bf16.mxu0 0
        %1329 = vmatmul.mubr.bf16.gmra.mrb[0].mxu0 %v1139
        %v1330 = vpop.f32.mrb[0].mxu0
        %v1331 = vadd.f32 %v1026, %v1330
        %v1332 = vpop.f32.mrb[0].mxu0
        %v1333 = vpop.f32.mrb[0].mxu0
        %v1334 = vadd.f32 %v1029, %v1333
        %v1335 = vpop.f32.mrb[0].mxu0
        %1336 = vmatprep.mubr.bf16.mxu0 0
        %1337 = vmatmul.mubr.bf16.gmra.mrb[0].mxu0 %v1140
        %v1338 = vpop.f32.mrb[0].mxu0
        %v1339 = vadd.f32 %v1034, %v1338
        %v1340 = vpop.f32.mrb[0].mxu0
        %v1341 = vpop.f32.mrb[0].mxu0
        %v1342 = vadd.f32 %v1037, %v1341
        %v1343 = vpop.f32.mrb[0].mxu0
        %1344 = vmatprep.mubr.bf16.mxu0 0
        %1345 = vmatmul.mubr.bf16.gmra.mrb[0].mxu0 %v1141
        %v1346 = vpop.f32.mrb[0].mxu0
        %v1347 = vadd.f32 %v1042, %v1346
        %v1348 = vpop.f32.mrb[0].mxu0
        %v1349 = vpop.f32.mrb[0].mxu0
        %v1350 = vadd.f32 %v1045, %v1349
        %v1351 = vpop.f32.mrb[0].mxu0
        %1352 = vmatprep.mubr.bf16.mxu0 0
        %1353 = vmatmul.mubr.bf16.gmra.mrb[0].mxu0 %v1142
        %v1354 = vpop.f32.mrb[0].mxu0
        %v1355 = vadd.f32 %v1050, %v1354
        %v1356 = vpop.f32.mrb[0].mxu0
        %v1357 = vpop.f32.mrb[0].mxu0
        %v1358 = vadd.f32 %v1053, %v1357
        %v1359 = vpop.f32.mrb[0].mxu0
        %1360 = vmatprep.mubr.bf16.mxu0 0
        %1361 = vmatmul.mubr.bf16.gmra.mrb[0].mxu0 %v1143
        %v1362 = vpop.f32.mrb[0].mxu0
        %v1363 = vadd.f32 %v1058, %v1362
        %v1364 = vpop.f32.mrb[0].mxu0
        %v1365 = vpop.f32.mrb[0].mxu0
        %v1366 = vadd.f32 %v1061, %v1365
        %v1367 = vpop.f32.mrb[0].mxu0
        %1368 = vdwg.mxu0
        %vm1385 = vcmask 1042432
        %vm1386 = vcmask 1046532
        %vm1387 = vmor %vm1385, %vm1386
        %v1388 = vrot.slane %v317, 5
        %v1389 = vrot.slane %v1388, 4
        %v1390 = vrot.slane %v318, 5
        %v1391 = vsel %vm1387, %v1389, %v1390
        %v1392 = vrot.slane %v1390, 4
        %v1393 = vrot.slane %v319, 5
        %v1394 = vsel %vm1387, %v1392, %v1393
        %v1395 = vrot.slane %v320, 5
        %v1396 = vrot.slane %v1395, 4
        %v1397 = vrot.slane %v321, 5
        %v1398 = vsel %vm1387, %v1396, %v1397
        %v1399 = vrot.slane %v1397, 4
        %v1400 = vrot.slane %v322, 5
        %v1401 = vsel %vm1387, %v1399, %v1400
        %v1402 = vrot.slane %v323, 5
        %v1403 = vrot.slane %v1402, 4
        %v1404 = vrot.slane %v324, 5
        %v1405 = vsel %vm1387, %v1403, %v1404
        %v1406 = vrot.slane %v1404, 4
        %v1407 = vrot.slane %v325, 5
        %v1408 = vsel %vm1387, %v1406, %v1407
        %v1409 = vrot.slane %v326, 5
        %v1410 = vrot.slane %v1409, 4
        %v1411 = vrot.slane %v327, 5
        %v1412 = vsel %vm1387, %v1410, %v1411
        %v1413 = vrot.slane %v1411, 4
        %v1414 = vrot.slane %v328, 5
        %v1415 = vsel %vm1387, %v1413, %v1414
        %v1416 = vrot.slane %v329, 5
        %v1417 = vrot.slane %v1416, 4
        %v1418 = vrot.slane %v330, 5
        %v1419 = vsel %vm1387, %v1417, %v1418
        %v1420 = vrot.slane %v1418, 4
        %v1421 = vrot.slane %v331, 5
        %v1422 = vsel %vm1387, %v1420, %v1421
        %v1423 = vrot.slane %v332, 5
        %v1424 = vrot.slane %v1423, 4
        %v1425 = vrot.slane %v333, 5
        %v1426 = vsel %vm1387, %v1424, %v1425
        %v1427 = vrot.slane %v1425, 4
        %v1428 = vrot.slane %v334, 5
        %v1429 = vsel %vm1387, %v1427, %v1428
        %v1430 = vrot.slane %v335, 5
        %v1431 = vrot.slane %v1430, 4
        %v1432 = vrot.slane %v336, 5
        %v1433 = vsel %vm1387, %v1431, %v1432
        %v1434 = vrot.slane %v1432, 4
        %v1435 = vrot.slane %v337, 5
        %v1436 = vsel %vm1387, %v1434, %v1435
        %v1437 = vrot.slane %v338, 5
        %v1438 = vrot.slane %v1437, 4
        %v1439 = vrot.slane %v339, 5
        %v1440 = vsel %vm1387, %v1438, %v1439
        %v1441 = vrot.slane %v1439, 4
        %v1442 = vrot.slane %v340, 5
        %v1443 = vsel %vm1387, %v1441, %v1442
        %v1444 = vrot.slane %v341, 5
        %v1445 = vrot.slane %v1444, 4
        %v1446 = vrot.slane %v342, 5
        %v1447 = vsel %vm1387, %v1445, %v1446
        %v1448 = vrot.slane %v1446, 4
        %v1449 = vrot.slane %v343, 5
        %v1450 = vsel %vm1387, %v1448, %v1449
        %v1451 = vrot.slane %v344, 5
        %v1452 = vrot.slane %v1451, 4
        %v1453 = vrot.slane %v345, 5
        %v1454 = vsel %vm1387, %v1452, %v1453
        %v1455 = vrot.slane %v1453, 4
        %v1456 = vrot.slane %v346, 5
        %v1457 = vsel %vm1387, %v1455, %v1456
        %v1458 = vrot.slane %v347, 5
        %v1459 = vrot.slane %v1458, 4
        %v1460 = vrot.slane %v348, 5
        %v1461 = vsel %vm1387, %v1459, %v1460
        %v1462 = vrot.slane %v1460, 4
        %v1463 = vrot.slane %v349, 5
        %v1464 = vsel %vm1387, %v1462, %v1463
        %v1465 = vrot.slane %v350, 5
        %v1466 = vrot.slane %v1465, 4
        %v1467 = vrot.slane %v351, 5
        %v1468 = vsel %vm1387, %v1466, %v1467
        %v1469 = vrot.slane %v1467, 4
        %v1470 = vrot.slane %v352, 5
        %v1471 = vsel %vm1387, %v1469, %v1470
        %v1472 = vrot.slane %v353, 5
        %v1473 = vrot.slane %v1472, 4
        %v1474 = vrot.slane %v354, 5
        %v1475 = vsel %vm1387, %v1473, %v1474
        %v1476 = vrot.slane %v1474, 4
        %v1477 = vrot.slane %v355, 5
        %v1478 = vsel %vm1387, %v1476, %v1477
        %v1479 = vrot.slane %v356, 5
        %v1480 = vrot.slane %v1479, 4
        %v1481 = vrot.slane %v357, 5
        %v1482 = vsel %vm1387, %v1480, %v1481
        %v1483 = vrot.slane %v1481, 4
        %v1484 = vrot.slane %v358, 5
        %v1485 = vsel %vm1387, %v1483, %v1484
        %v1486 = vrot.slane %v359, 5
        %v1487 = vrot.slane %v1486, 4
        %v1488 = vrot.slane %v360, 5
        %v1489 = vsel %vm1387, %v1487, %v1488
        %v1490 = vrot.slane %v1488, 4
        %v1491 = vrot.slane %v361, 5
        %v1492 = vsel %vm1387, %v1490, %v1491
        %v1493 = vrot.slane %v362, 5
        %v1494 = vrot.slane %v1493, 4
        %v1495 = vrot.slane %v363, 5
        %v1496 = vsel %vm1387, %v1494, %v1495
        %v1497 = vrot.slane %v1495, 4
        %v1498 = vrot.slane %v364, 5
        %v1499 = vsel %vm1387, %v1497, %v1498
        %s1500 = scalar_lea.vmem %s2, 128
        %v1501 = vld [vmem:[%s1500] sm:$0xf]
        %v1502 = vld [vmem:[%s1500 + $0x4] sm:$0xf]
        %v1503 = vld [vmem:[%s1500 + $0x8] sm:$0xf]
        %v1504 = vld [vmem:[%s1500 + $0xc] sm:$0xf]
        %v1505 = vld [vmem:[%s1500 + $0x10] sm:$0xf]
        %v1506 = vld [vmem:[%s1500 + $0x14] sm:$0xf]
        %v1507 = vld [vmem:[%s1500 + $0x18] sm:$0xf]
        %v1508 = vld [vmem:[%s1500 + $0x1c] sm:$0xf]
        %v1509 = vld [vmem:[%s1500 + $0x20] sm:$0xf]
        %v1510 = vld [vmem:[%s1500 + $0x24] sm:$0xf]
        %v1511 = vld [vmem:[%s1500 + $0x28] sm:$0xf]
        %v1512 = vld [vmem:[%s1500 + $0x2c] sm:$0xf]
        %v1513 = vld [vmem:[%s1500 + $0x30] sm:$0xf]
        %v1514 = vld [vmem:[%s1500 + $0x34] sm:$0xf]
        %v1515 = vld [vmem:[%s1500 + $0x38] sm:$0xf]
        %v1516 = vld [vmem:[%s1500 + $0x3c] sm:$0xf]
        %v1517 = vunpack.c.l.b16 %v1391
        %v1518 = vunpack.c.l.b16 %v1394
        %v1519 = vunpack.c.l.b16 %v1398
        %v1520 = vunpack.c.l.b16 %v1401
        %v1521 = vunpack.c.l.b16 %v1405
        %v1522 = vunpack.c.l.b16 %v1408
        %v1523 = vunpack.c.l.b16 %v1412
        %v1524 = vunpack.c.l.b16 %v1415
        %v1525 = vunpack.c.l.b16 %v1419
        %v1526 = vunpack.c.l.b16 %v1422
        %v1527 = vunpack.c.l.b16 %v1426
        %v1528 = vunpack.c.l.b16 %v1429
        %v1529 = vunpack.c.l.b16 %v1433
        %v1530 = vunpack.c.l.b16 %v1436
        %v1531 = vunpack.c.l.b16 %v1440
        %v1532 = vunpack.c.l.b16 %v1443
        %v1533 = vunpack.c.l.b16 %v1447
        %v1534 = vunpack.c.l.b16 %v1450
        %v1535 = vunpack.c.l.b16 %v1454
        %v1536 = vunpack.c.l.b16 %v1457
        %v1537 = vunpack.c.l.b16 %v1461
        %v1538 = vunpack.c.l.b16 %v1464
        %v1539 = vunpack.c.l.b16 %v1468
        %v1540 = vunpack.c.l.b16 %v1471
        %v1541 = vunpack.c.l.b16 %v1475
        %v1542 = vunpack.c.l.b16 %v1478
        %v1543 = vunpack.c.l.b16 %v1482
        %v1544 = vunpack.c.l.b16 %v1485
        %v1545 = vunpack.c.l.b16 %v1489
        %v1546 = vunpack.c.l.b16 %v1492
        %v1547 = vunpack.c.l.b16 %v1496
        %v1548 = vunpack.c.l.b16 %v1499
        %v1549 = vpack.c.b16 %v1518, %v1517
        %v1550 = vpack.c.b16 %v1520, %v1519
        %v1551 = vpack.c.b16 %v1522, %v1521
        %v1552 = vpack.c.b16 %v1524, %v1523
        %v1553 = vpack.c.b16 %v1526, %v1525
        %v1554 = vpack.c.b16 %v1528, %v1527
        %v1555 = vpack.c.b16 %v1530, %v1529
        %v1556 = vpack.c.b16 %v1532, %v1531
        %v1557 = vpack.c.b16 %v1534, %v1533
        %v1558 = vpack.c.b16 %v1536, %v1535
        %v1559 = vpack.c.b16 %v1538, %v1537
        %v1560 = vpack.c.b16 %v1540, %v1539
        %v1561 = vpack.c.b16 %v1542, %v1541
        %v1562 = vpack.c.b16 %v1544, %v1543
        %v1563 = vpack.c.b16 %v1546, %v1545
        %v1564 = vpack.c.b16 %v1548, %v1547
        %v1597 = vunpack.c.l.b16 %v1501
        %v1598 = vunpack.c.l.b16 %v1502
        %v1599 = vunpack.c.l.b16 %v1503
        %v1600 = vunpack.c.l.b16 %v1504
        %v1601 = vunpack.c.l.b16 %v1505
        %v1602 = vunpack.c.l.b16 %v1506
        %v1603 = vunpack.c.l.b16 %v1507
        %v1604 = vunpack.c.l.b16 %v1508
        %v1605 = vunpack.c.l.b16 %v1509
        %v1606 = vunpack.c.l.b16 %v1510
        %v1607 = vunpack.c.l.b16 %v1511
        %v1608 = vunpack.c.l.b16 %v1512
        %v1609 = vunpack.c.l.b16 %v1513
        %v1610 = vunpack.c.l.b16 %v1514
        %v1611 = vunpack.c.l.b16 %v1515
        %v1612 = vunpack.c.l.b16 %v1516
        %v1613 = vpack.c.b16 %v1598, %v1597
        %v1614 = vpack.c.b16 %v1600, %v1599
        %v1615 = vpack.c.b16 %v1602, %v1601
        %v1616 = vpack.c.b16 %v1604, %v1603
        %v1617 = vpack.c.b16 %v1606, %v1605
        %v1618 = vpack.c.b16 %v1608, %v1607
        %v1619 = vpack.c.b16 %v1610, %v1609
        %v1620 = vpack.c.b16 %v1612, %v1611
        %1629 = vmatprep.subr.bf16.mxu0 0
        %1630 = vmatpush1.bf16.msra.mxu0 %v1613
        %1631 = vmatprep.subr.bf16.mxu0 0
        %1632 = vmatpush1.bf16.msra.mxu0 %v1614
        %1633 = vmatprep.subr.bf16.mxu0 0
        %1634 = vmatpush1.bf16.msra.mxu0 %v1615
        %1635 = vmatprep.subr.bf16.mxu0 0
        %1636 = vmatpush1.bf16.msra.mxu0 %v1616
        %1637 = vmatprep.subr.bf16.mxu0 0
        %1638 = vmatpush1.bf16.msra.mxu0 %v1617
        %1639 = vmatprep.subr.bf16.mxu0 0
        %1640 = vmatpush1.bf16.msra.mxu0 %v1618
        %1641 = vmatprep.subr.bf16.mxu0 0
        %1642 = vmatpush1.bf16.msra.mxu0 %v1619
        %1643 = vmatprep.subr.bf16.mxu0 0
        %1644 = vmatpush1.bf16.msra.mxu0 %v1620
        %1645 = vmatprep.subr.bf16.mxu0 0
        %1646 = vmatpush1.bf16.msra.mxu0 0
        %1647 = vmatprep.subr.bf16.mxu0 0
        %1648 = vmatpush1.bf16.msra.mxu0 0
        %1649 = vmatprep.subr.bf16.mxu0 0
        %1650 = vmatpush1.bf16.msra.mxu0 0
        %1651 = vmatprep.subr.bf16.mxu0 0
        %1652 = vmatpush1.bf16.msra.mxu0 0
        %1653 = vmatprep.subr.bf16.mxu0 0
        %1654 = vmatpush1.bf16.msra.mxu0 0
        %1655 = vmatprep.subr.bf16.mxu0 0
        %1656 = vmatpush1.bf16.msra.mxu0 0
        %1657 = vmatprep.subr.bf16.mxu0 0
        %1658 = vmatpush1.bf16.msra.mxu0 0
        %1659 = vmatprep.subr.bf16.mxu0 0
        %1660 = vmatpush1.bf16.msra.mxu0 0
        %1661 = vmatprep.mubr.bf16.mxu0 0
        %1662 = vmatmul.mubr.bf16.gmra.mrb[0].mxu0 %v1549
        %v1663 = vpop.f32.mrb[0].mxu0
        %v1664 = vadd.f32 0.0, %v1663
        %v1665 = vpop.f32.mrb[0].mxu0
        %v1666 = vpop.f32.mrb[0].mxu0
        %v1667 = vadd.f32 0.0, %v1666
        %v1668 = vpop.f32.mrb[0].mxu0
        %1669 = vmatprep.mubr.bf16.mxu0 0
        %1670 = vmatmul.mubr.bf16.gmra.mrb[0].mxu0 %v1550
        %v1671 = vpop.f32.mrb[0].mxu0
        %v1672 = vadd.f32 0.0, %v1671
        %v1673 = vpop.f32.mrb[0].mxu0
        %v1674 = vpop.f32.mrb[0].mxu0
        %v1675 = vadd.f32 0.0, %v1674
        %v1676 = vpop.f32.mrb[0].mxu0
        %1677 = vmatprep.mubr.bf16.mxu0 0
        %1678 = vmatmul.mubr.bf16.gmra.mrb[0].mxu0 %v1551
        %v1679 = vpop.f32.mrb[0].mxu0
        %v1680 = vadd.f32 0.0, %v1679
        %v1681 = vpop.f32.mrb[0].mxu0
        %v1682 = vpop.f32.mrb[0].mxu0
        %v1683 = vadd.f32 0.0, %v1682
        %v1684 = vpop.f32.mrb[0].mxu0
        %1685 = vmatprep.mubr.bf16.mxu0 0
        %1686 = vmatmul.mubr.bf16.gmra.mrb[0].mxu0 %v1552
        %v1687 = vpop.f32.mrb[0].mxu0
        %v1688 = vadd.f32 0.0, %v1687
        %v1689 = vpop.f32.mrb[0].mxu0
        %v1690 = vpop.f32.mrb[0].mxu0
        %v1691 = vadd.f32 0.0, %v1690
        %v1692 = vpop.f32.mrb[0].mxu0
        %1693 = vmatprep.mubr.bf16.mxu0 0
        %1694 = vmatmul.mubr.bf16.gmra.mrb[0].mxu0 %v1553
        %v1695 = vpop.f32.mrb[0].mxu0
        %v1696 = vadd.f32 0.0, %v1695
        %v1697 = vpop.f32.mrb[0].mxu0
        %v1698 = vpop.f32.mrb[0].mxu0
        %v1699 = vadd.f32 0.0, %v1698
        %v1700 = vpop.f32.mrb[0].mxu0
        %1701 = vmatprep.mubr.bf16.mxu0 0
        %1702 = vmatmul.mubr.bf16.gmra.mrb[0].mxu0 %v1554
        %v1703 = vpop.f32.mrb[0].mxu0
        %v1704 = vadd.f32 0.0, %v1703
        %v1705 = vpop.f32.mrb[0].mxu0
        %v1706 = vpop.f32.mrb[0].mxu0
        %v1707 = vadd.f32 0.0, %v1706
        %v1708 = vpop.f32.mrb[0].mxu0
        %1709 = vmatprep.mubr.bf16.mxu0 0
        %1710 = vmatmul.mubr.bf16.gmra.mrb[0].mxu0 %v1555
        %v1711 = vpop.f32.mrb[0].mxu0
        %v1712 = vadd.f32 0.0, %v1711
        %v1713 = vpop.f32.mrb[0].mxu0
        %v1714 = vpop.f32.mrb[0].mxu0
        %v1715 = vadd.f32 0.0, %v1714
        %v1716 = vpop.f32.mrb[0].mxu0
        %1717 = vmatprep.mubr.bf16.mxu0 0
        %1718 = vmatmul.mubr.bf16.gmra.mrb[0].mxu0 %v1556
        %v1719 = vpop.f32.mrb[0].mxu0
        %v1720 = vadd.f32 0.0, %v1719
        %v1721 = vpop.f32.mrb[0].mxu0
        %v1722 = vpop.f32.mrb[0].mxu0
        %v1723 = vadd.f32 0.0, %v1722
        %v1724 = vpop.f32.mrb[0].mxu0
        %1725 = vmatprep.mubr.bf16.mxu0 0
        %1726 = vmatmul.mubr.bf16.gmra.mrb[0].mxu0 %v1557
        %v1727 = vpop.f32.mrb[0].mxu0
        %v1728 = vadd.f32 0.0, %v1727
        %v1729 = vpop.f32.mrb[0].mxu0
        %v1730 = vpop.f32.mrb[0].mxu0
        %v1731 = vadd.f32 0.0, %v1730
        %v1732 = vpop.f32.mrb[0].mxu0
        %1733 = vmatprep.mubr.bf16.mxu0 0
        %1734 = vmatmul.mubr.bf16.gmra.mrb[0].mxu0 %v1558
        %v1735 = vpop.f32.mrb[0].mxu0
        %v1736 = vadd.f32 0.0, %v1735
        %v1737 = vpop.f32.mrb[0].mxu0
        %v1738 = vpop.f32.mrb[0].mxu0
        %v1739 = vadd.f32 0.0, %v1738
        %v1740 = vpop.f32.mrb[0].mxu0
        %1741 = vmatprep.mubr.bf16.mxu0 0
        %1742 = vmatmul.mubr.bf16.gmra.mrb[0].mxu0 %v1559
        %v1743 = vpop.f32.mrb[0].mxu0
        %v1744 = vadd.f32 0.0, %v1743
        %v1745 = vpop.f32.mrb[0].mxu0
        %v1746 = vpop.f32.mrb[0].mxu0
        %v1747 = vadd.f32 0.0, %v1746
        %v1748 = vpop.f32.mrb[0].mxu0
        %1749 = vmatprep.mubr.bf16.mxu0 0
        %1750 = vmatmul.mubr.bf16.gmra.mrb[0].mxu0 %v1560
        %v1751 = vpop.f32.mrb[0].mxu0
        %v1752 = vadd.f32 0.0, %v1751
        %v1753 = vpop.f32.mrb[0].mxu0
        %v1754 = vpop.f32.mrb[0].mxu0
        %v1755 = vadd.f32 0.0, %v1754
        %v1756 = vpop.f32.mrb[0].mxu0
        %1757 = vmatprep.mubr.bf16.mxu0 0
        %1758 = vmatmul.mubr.bf16.gmra.mrb[0].mxu0 %v1561
        %v1759 = vpop.f32.mrb[0].mxu0
        %v1760 = vadd.f32 0.0, %v1759
        %v1761 = vpop.f32.mrb[0].mxu0
        %v1762 = vpop.f32.mrb[0].mxu0
        %v1763 = vadd.f32 0.0, %v1762
        %v1764 = vpop.f32.mrb[0].mxu0
        %1765 = vmatprep.mubr.bf16.mxu0 0
        %1766 = vmatmul.mubr.bf16.gmra.mrb[0].mxu0 %v1562
        %v1767 = vpop.f32.mrb[0].mxu0
        %v1768 = vadd.f32 0.0, %v1767
        %v1769 = vpop.f32.mrb[0].mxu0
        %v1770 = vpop.f32.mrb[0].mxu0
        %v1771 = vadd.f32 0.0, %v1770
        %v1772 = vpop.f32.mrb[0].mxu0
        %1773 = vmatprep.mubr.bf16.mxu0 0
        %1774 = vmatmul.mubr.bf16.gmra.mrb[0].mxu0 %v1563
        %v1775 = vpop.f32.mrb[0].mxu0
        %v1776 = vadd.f32 0.0, %v1775
        %v1777 = vpop.f32.mrb[0].mxu0
        %v1778 = vpop.f32.mrb[0].mxu0
        %v1779 = vadd.f32 0.0, %v1778
        %v1780 = vpop.f32.mrb[0].mxu0
        %1781 = vmatprep.mubr.bf16.mxu0 0
        %1782 = vmatmul.mubr.bf16.gmra.mrb[0].mxu0 %v1564
        %v1783 = vpop.f32.mrb[0].mxu0
        %v1784 = vadd.f32 0.0, %v1783
        %v1785 = vpop.f32.mrb[0].mxu0
        %v1786 = vpop.f32.mrb[0].mxu0
        %v1787 = vadd.f32 0.0, %v1786
        %v1788 = vpop.f32.mrb[0].mxu0
        %1789 = vdwg.mxu0
        %v1790 = vadd.f32 %v1243, %v1664
        %v1791 = vadd.f32 %v1246, %v1667
        %v1792 = vadd.f32 %v1251, %v1672
        %v1793 = vadd.f32 %v1254, %v1675
        %v1794 = vadd.f32 %v1259, %v1680
        %v1795 = vadd.f32 %v1262, %v1683
        %v1796 = vadd.f32 %v1267, %v1688
        %v1797 = vadd.f32 %v1270, %v1691
        %v1798 = vadd.f32 %v1275, %v1696
        %v1799 = vadd.f32 %v1278, %v1699
        %v1800 = vadd.f32 %v1283, %v1704
        %v1801 = vadd.f32 %v1286, %v1707
        %v1802 = vadd.f32 %v1291, %v1712
        %v1803 = vadd.f32 %v1294, %v1715
        %v1804 = vadd.f32 %v1299, %v1720
        %v1805 = vadd.f32 %v1302, %v1723
        %v1806 = vadd.f32 %v1307, %v1728
        %v1807 = vadd.f32 %v1310, %v1731
        %v1808 = vadd.f32 %v1315, %v1736
        %v1809 = vadd.f32 %v1318, %v1739
        %v1810 = vadd.f32 %v1323, %v1744
        %v1811 = vadd.f32 %v1326, %v1747
        %v1812 = vadd.f32 %v1331, %v1752
        %v1813 = vadd.f32 %v1334, %v1755
        %v1814 = vadd.f32 %v1339, %v1760
        %v1815 = vadd.f32 %v1342, %v1763
        %v1816 = vadd.f32 %v1347, %v1768
        %v1817 = vadd.f32 %v1350, %v1771
        %v1818 = vadd.f32 %v1355, %v1776
        %v1819 = vadd.f32 %v1358, %v1779
        %v1820 = vadd.f32 %v1363, %v1784
        %v1821 = vadd.f32 %v1366, %v1787
        %s1822 = scalar_lea.vmem %s2, 192
        %v1823 = vld [vmem:[%s1822] sm:$0xf]
        %v1824 = vld [vmem:[%s1822 + $0x4] sm:$0xf]
        %v1825 = vld [vmem:[%s1822 + $0x8] sm:$0xf]
        %v1826 = vld [vmem:[%s1822 + $0xc] sm:$0xf]
        %v1827 = vld [vmem:[%s1822 + $0x10] sm:$0xf]
        %v1828 = vld [vmem:[%s1822 + $0x14] sm:$0xf]
        %v1829 = vld [vmem:[%s1822 + $0x18] sm:$0xf]
        %v1830 = vld [vmem:[%s1822 + $0x1c] sm:$0xf]
        %v1831 = vld [vmem:[%s1822 + $0x20] sm:$0xf]
        %v1832 = vld [vmem:[%s1822 + $0x24] sm:$0xf]
        %v1833 = vld [vmem:[%s1822 + $0x28] sm:$0xf]
        %v1834 = vld [vmem:[%s1822 + $0x2c] sm:$0xf]
        %v1835 = vld [vmem:[%s1822 + $0x30] sm:$0xf]
        %v1836 = vld [vmem:[%s1822 + $0x34] sm:$0xf]
        %v1837 = vld [vmem:[%s1822 + $0x38] sm:$0xf]
        %v1838 = vld [vmem:[%s1822 + $0x3c] sm:$0xf]
        %v1841 = vunpack.c.l.b16 %v365
        %v1842 = vunpack.c.l.b16 %v366
        %v1843 = vpack.c.b16 %v1842, %v1841
        %v1861 = vunpack.c.l.b16 %v1823
        %v1862 = vunpack.c.l.b16 %v1824
        %v1863 = vunpack.c.l.b16 %v1825
        %v1864 = vunpack.c.l.b16 %v1826
        %v1865 = vunpack.c.l.b16 %v1827
        %v1866 = vunpack.c.l.b16 %v1828
        %v1867 = vunpack.c.l.b16 %v1829
        %v1868 = vunpack.c.l.b16 %v1830
        %v1869 = vunpack.c.l.b16 %v1831
        %v1870 = vunpack.c.l.b16 %v1832
        %v1871 = vunpack.c.l.b16 %v1833
        %v1872 = vunpack.c.l.b16 %v1834
        %v1873 = vunpack.c.l.b16 %v1835
        %v1874 = vunpack.c.l.b16 %v1836
        %v1875 = vunpack.c.l.b16 %v1837
        %v1876 = vunpack.c.l.b16 %v1838
        %v1877 = vpack.c.b16 %v1862, %v1861
        %v1878 = vpack.c.b16 %v1864, %v1863
        %v1879 = vpack.c.b16 %v1866, %v1865
        %v1880 = vpack.c.b16 %v1868, %v1867
        %v1881 = vpack.c.b16 %v1870, %v1869
        %v1882 = vpack.c.b16 %v1872, %v1871
        %v1883 = vpack.c.b16 %v1874, %v1873
        %v1884 = vpack.c.b16 %v1876, %v1875
        %1893 = vmatprep.subr.bf16.mxu0 0
        %1894 = vmatpush1.bf16.msra.mxu0 %v1877
        %1895 = vmatprep.subr.bf16.mxu0 0
        %1896 = vmatpush1.bf16.msra.mxu0 %v1878
        %1897 = vmatprep.subr.bf16.mxu0 0
        %1898 = vmatpush1.bf16.msra.mxu0 %v1879
        %1899 = vmatprep.subr.bf16.mxu0 0
        %1900 = vmatpush1.bf16.msra.mxu0 %v1880
        %1901 = vmatprep.subr.bf16.mxu0 0
        %1902 = vmatpush1.bf16.msra.mxu0 %v1881
        %1903 = vmatprep.subr.bf16.mxu0 0
        %1904 = vmatpush1.bf16.msra.mxu0 %v1882
        %1905 = vmatprep.subr.bf16.mxu0 0
        %1906 = vmatpush1.bf16.msra.mxu0 %v1883
        %1907 = vmatprep.subr.bf16.mxu0 0
        %1908 = vmatpush1.bf16.msra.mxu0 %v1884
        %1909 = vmatprep.subr.bf16.mxu0 0
        %1910 = vmatpush1.bf16.msra.mxu0 0
        %1911 = vmatprep.subr.bf16.mxu0 0
        %1912 = vmatpush1.bf16.msra.mxu0 0
        %1913 = vmatprep.subr.bf16.mxu0 0
        %1914 = vmatpush1.bf16.msra.mxu0 0
        %1915 = vmatprep.subr.bf16.mxu0 0
        %1916 = vmatpush1.bf16.msra.mxu0 0
        %1917 = vmatprep.subr.bf16.mxu0 0
        %1918 = vmatpush1.bf16.msra.mxu0 0
        %1919 = vmatprep.subr.bf16.mxu0 0
        %1920 = vmatpush1.bf16.msra.mxu0 0
        %1921 = vmatprep.subr.bf16.mxu0 0
        %1922 = vmatpush1.bf16.msra.mxu0 0
        %1923 = vmatprep.subr.bf16.mxu0 0
        %1924 = vmatpush1.bf16.msra.mxu0 0
        %1925 = vmatprep.mubr.bf16.mxu0 0
        %1926 = vmatmul.mubr.bf16.gmra.mrb[0].mxu0 %v1129
        %v1927 = vpop.f32.mrb[0].mxu0
        %v1928 = vadd.f32 0.0, %v1927
        %v1929 = vpop.f32.mrb[0].mxu0
        %v1930 = vpop.f32.mrb[0].mxu0
        %v1931 = vadd.f32 0.0, %v1930
        %v1932 = vpop.f32.mrb[0].mxu0
        %1933 = vmatprep.mubr.bf16.mxu0 0
        %1934 = vmatmul.mubr.bf16.gmra.mrb[0].mxu0 %v1130
        %v1935 = vpop.f32.mrb[0].mxu0
        %v1936 = vadd.f32 0.0, %v1935
        %v1937 = vpop.f32.mrb[0].mxu0
        %v1938 = vpop.f32.mrb[0].mxu0
        %v1939 = vadd.f32 0.0, %v1938
        %v1940 = vpop.f32.mrb[0].mxu0
        %1941 = vmatprep.mubr.bf16.mxu0 0
        %1942 = vmatmul.mubr.bf16.gmra.mrb[0].mxu0 %v1131
        %v1943 = vpop.f32.mrb[0].mxu0
        %v1944 = vadd.f32 0.0, %v1943
        %v1945 = vpop.f32.mrb[0].mxu0
        %v1946 = vpop.f32.mrb[0].mxu0
        %v1947 = vadd.f32 0.0, %v1946
        %v1948 = vpop.f32.mrb[0].mxu0
        %1949 = vmatprep.mubr.bf16.mxu0 0
        %1950 = vmatmul.mubr.bf16.gmra.mrb[0].mxu0 %v1132
        %v1951 = vpop.f32.mrb[0].mxu0
        %v1952 = vadd.f32 0.0, %v1951
        %v1953 = vpop.f32.mrb[0].mxu0
        %v1954 = vpop.f32.mrb[0].mxu0
        %v1955 = vadd.f32 0.0, %v1954
        %v1956 = vpop.f32.mrb[0].mxu0
        %1957 = vmatprep.mubr.bf16.mxu0 0
        %1958 = vmatmul.mubr.bf16.gmra.mrb[0].mxu0 %v1133
        %v1959 = vpop.f32.mrb[0].mxu0
        %v1960 = vadd.f32 0.0, %v1959
        %v1961 = vpop.f32.mrb[0].mxu0
        %v1962 = vpop.f32.mrb[0].mxu0
        %v1963 = vadd.f32 0.0, %v1962
        %v1964 = vpop.f32.mrb[0].mxu0
        %1965 = vmatprep.mubr.bf16.mxu0 0
        %1966 = vmatmul.mubr.bf16.gmra.mrb[0].mxu0 %v1134
        %v1967 = vpop.f32.mrb[0].mxu0
        %v1968 = vadd.f32 0.0, %v1967
        %v1969 = vpop.f32.mrb[0].mxu0
        %v1970 = vpop.f32.mrb[0].mxu0
        %v1971 = vadd.f32 0.0, %v1970
        %v1972 = vpop.f32.mrb[0].mxu0
        %1973 = vmatprep.mubr.bf16.mxu0 0
        %1974 = vmatmul.mubr.bf16.gmra.mrb[0].mxu0 %v1135
        %v1975 = vpop.f32.mrb[0].mxu0
        %v1976 = vadd.f32 0.0, %v1975
        %v1977 = vpop.f32.mrb[0].mxu0
        %v1978 = vpop.f32.mrb[0].mxu0
        %v1979 = vadd.f32 0.0, %v1978
        %v1980 = vpop.f32.mrb[0].mxu0
        %1981 = vmatprep.mubr.bf16.mxu0 0
        %1982 = vmatmul.mubr.bf16.gmra.mrb[0].mxu0 %v1136
        %v1983 = vpop.f32.mrb[0].mxu0
        %v1984 = vadd.f32 0.0, %v1983
        %v1985 = vpop.f32.mrb[0].mxu0
        %v1986 = vpop.f32.mrb[0].mxu0
        %v1987 = vadd.f32 0.0, %v1986
        %v1988 = vpop.f32.mrb[0].mxu0
        %1989 = vmatprep.mubr.bf16.mxu0 0
        %1990 = vmatmul.mubr.bf16.gmra.mrb[0].mxu0 %v1137
        %v1991 = vpop.f32.mrb[0].mxu0
        %v1992 = vadd.f32 0.0, %v1991
        %v1993 = vpop.f32.mrb[0].mxu0
        %v1994 = vpop.f32.mrb[0].mxu0
        %v1995 = vadd.f32 0.0, %v1994
        %v1996 = vpop.f32.mrb[0].mxu0
        %1997 = vmatprep.mubr.bf16.mxu0 0
        %1998 = vmatmul.mubr.bf16.gmra.mrb[0].mxu0 %v1138
        %v1999 = vpop.f32.mrb[0].mxu0
        %v2000 = vadd.f32 0.0, %v1999
        %v2001 = vpop.f32.mrb[0].mxu0
        %v2002 = vpop.f32.mrb[0].mxu0
        %v2003 = vadd.f32 0.0, %v2002
        %v2004 = vpop.f32.mrb[0].mxu0
        %2005 = vmatprep.mubr.bf16.mxu0 0
        %2006 = vmatmul.mubr.bf16.gmra.mrb[0].mxu0 %v1139
        %v2007 = vpop.f32.mrb[0].mxu0
        %v2008 = vadd.f32 0.0, %v2007
        %v2009 = vpop.f32.mrb[0].mxu0
        %v2010 = vpop.f32.mrb[0].mxu0
        %v2011 = vadd.f32 0.0, %v2010
        %v2012 = vpop.f32.mrb[0].mxu0
        %2013 = vmatprep.mubr.bf16.mxu0 0
        %2014 = vmatmul.mubr.bf16.gmra.mrb[0].mxu0 %v1140
        %v2015 = vpop.f32.mrb[0].mxu0
        %v2016 = vadd.f32 0.0, %v2015
        %v2017 = vpop.f32.mrb[0].mxu0
        %v2018 = vpop.f32.mrb[0].mxu0
        %v2019 = vadd.f32 0.0, %v2018
        %v2020 = vpop.f32.mrb[0].mxu0
        %2021 = vmatprep.mubr.bf16.mxu0 0
        %2022 = vmatmul.mubr.bf16.gmra.mrb[0].mxu0 %v1141
        %v2023 = vpop.f32.mrb[0].mxu0
        %v2024 = vadd.f32 0.0, %v2023
        %v2025 = vpop.f32.mrb[0].mxu0
        %v2026 = vpop.f32.mrb[0].mxu0
        %v2027 = vadd.f32 0.0, %v2026
        %v2028 = vpop.f32.mrb[0].mxu0
        %2029 = vmatprep.mubr.bf16.mxu0 0
        %2030 = vmatmul.mubr.bf16.gmra.mrb[0].mxu0 %v1142
        %v2031 = vpop.f32.mrb[0].mxu0
        %v2032 = vadd.f32 0.0, %v2031
        %v2033 = vpop.f32.mrb[0].mxu0
        %v2034 = vpop.f32.mrb[0].mxu0
        %v2035 = vadd.f32 0.0, %v2034
        %v2036 = vpop.f32.mrb[0].mxu0
        %2037 = vmatprep.mubr.bf16.mxu0 0
        %2038 = vmatmul.mubr.bf16.gmra.mrb[0].mxu0 %v1143
        %v2039 = vpop.f32.mrb[0].mxu0
        %v2040 = vadd.f32 0.0, %v2039
        %v2041 = vpop.f32.mrb[0].mxu0
        %v2042 = vpop.f32.mrb[0].mxu0
        %v2043 = vadd.f32 0.0, %v2042
        %v2044 = vpop.f32.mrb[0].mxu0
        %2045 = vmatprep.mubr.bf16.mxu0 0
        %2046 = vmatmul.mubr.bf16.gmra.mrb[0].mxu0 %v1843
        %v2047 = vpop.f32.mrb[0].mxu0
        %v2048 = vadd.f32 0.0, %v2047
        %v2049 = vpop.f32.mrb[0].mxu0
        %v2050 = vpop.f32.mrb[0].mxu0
        %v2051 = vadd.f32 0.0, %v2050
        %v2052 = vpop.f32.mrb[0].mxu0
        %2053 = vdwg.mxu0
        %v2054 = vadd.f32 %v1790, %v1928
        %v2055 = vadd.f32 %v1791, %v1931
        %v2056 = vadd.f32 %v1792, %v1936
        %v2057 = vadd.f32 %v1793, %v1939
        %v2058 = vadd.f32 %v1794, %v1944
        %v2059 = vadd.f32 %v1795, %v1947
        %v2060 = vadd.f32 %v1796, %v1952
        %v2061 = vadd.f32 %v1797, %v1955
        %v2062 = vadd.f32 %v1798, %v1960
        %v2063 = vadd.f32 %v1799, %v1963
        %v2064 = vadd.f32 %v1800, %v1968
        %v2065 = vadd.f32 %v1801, %v1971
        %v2066 = vadd.f32 %v1802, %v1976
        %v2067 = vadd.f32 %v1803, %v1979
        %v2068 = vadd.f32 %v1804, %v1984
        %v2069 = vadd.f32 %v1805, %v1987
        %v2070 = vadd.f32 %v1806, %v1992
        %v2071 = vadd.f32 %v1807, %v1995
        %v2072 = vadd.f32 %v1808, %v2000
        %v2073 = vadd.f32 %v1809, %v2003
        %v2074 = vadd.f32 %v1810, %v2008
        %v2075 = vadd.f32 %v1811, %v2011
        %v2076 = vadd.f32 %v1812, %v2016
        %v2077 = vadd.f32 %v1813, %v2019
        %v2078 = vadd.f32 %v1814, %v2024
        %v2079 = vadd.f32 %v1815, %v2027
        %v2080 = vadd.f32 %v1816, %v2032
        %v2081 = vadd.f32 %v1817, %v2035
        %v2082 = vadd.f32 %v1818, %v2040
        %v2083 = vadd.f32 %v1819, %v2043
        %v2084 = vadd.f32 %v1820, %v2048
        %v2085 = vadd.f32 %v1821, %v2051
        %v2087 = vshrl.u32 %v365, 16
        %v2089 = vrot.slane %v2087, 4
        %v2090 = vshll.u32 %v365, 16
        %v2092 = vrot.slane %v2090, 5
        %v2093 = vor.u32 %v2089, %v2092
        %v2094 = vrot.slane %v2093, 4
        %v2096 = vshll.u32 %v366, 16
        %v2098 = vrot.slane %v2096, 5
        %v2099 = vsel %vm389, %v2094, %v2098
        %v2100 = vshrl.u32 %v366, 16
        %v2102 = vrot.slane %v2100, 4
        %v2103 = vor.u32 %v2102, %v2098
        %v2104 = vrot.slane %v2103, 4
        %v2106 = vshll.u32 %v367, 16
        %v2108 = vrot.slane %v2106, 5
        %v2109 = vsel %vm389, %v2104, %v2108
        %s2110 = scalar_lea.vmem %s2, 256
        %v2111 = vld [vmem:[%s2110] sm:$0xf]
        %v2112 = vld [vmem:[%s2110 + $0x4] sm:$0xf]
        %v2113 = vld [vmem:[%s2110 + $0x8] sm:$0xf]
        %v2114 = vld [vmem:[%s2110 + $0xc] sm:$0xf]
        %v2115 = vld [vmem:[%s2110 + $0x10] sm:$0xf]
        %v2116 = vld [vmem:[%s2110 + $0x14] sm:$0xf]
        %v2117 = vld [vmem:[%s2110 + $0x18] sm:$0xf]
        %v2118 = vld [vmem:[%s2110 + $0x1c] sm:$0xf]
        %v2119 = vld [vmem:[%s2110 + $0x20] sm:$0xf]
        %v2120 = vld [vmem:[%s2110 + $0x24] sm:$0xf]
        %v2121 = vld [vmem:[%s2110 + $0x28] sm:$0xf]
        %v2122 = vld [vmem:[%s2110 + $0x2c] sm:$0xf]
        %v2123 = vld [vmem:[%s2110 + $0x30] sm:$0xf]
        %v2124 = vld [vmem:[%s2110 + $0x34] sm:$0xf]
        %v2125 = vld [vmem:[%s2110 + $0x38] sm:$0xf]
        %v2126 = vld [vmem:[%s2110 + $0x3c] sm:$0xf]
        %v2127 = vunpack.c.l.b16 %v2099
        %v2128 = vunpack.c.l.b16 %v2109
        %v2129 = vpack.c.b16 %v2128, %v2127
        %v2147 = vunpack.c.l.b16 %v2111
        %v2148 = vunpack.c.l.b16 %v2112
        %v2149 = vunpack.c.l.b16 %v2113
        %v2150 = vunpack.c.l.b16 %v2114
        %v2151 = vunpack.c.l.b16 %v2115
        %v2152 = vunpack.c.l.b16 %v2116
        %v2153 = vunpack.c.l.b16 %v2117
        %v2154 = vunpack.c.l.b16 %v2118
        %v2155 = vunpack.c.l.b16 %v2119
        %v2156 = vunpack.c.l.b16 %v2120
        %v2157 = vunpack.c.l.b16 %v2121
        %v2158 = vunpack.c.l.b16 %v2122
        %v2159 = vunpack.c.l.b16 %v2123
        %v2160 = vunpack.c.l.b16 %v2124
        %v2161 = vunpack.c.l.b16 %v2125
        %v2162 = vunpack.c.l.b16 %v2126
        %v2163 = vpack.c.b16 %v2148, %v2147
        %v2164 = vpack.c.b16 %v2150, %v2149
        %v2165 = vpack.c.b16 %v2152, %v2151
        %v2166 = vpack.c.b16 %v2154, %v2153
        %v2167 = vpack.c.b16 %v2156, %v2155
        %v2168 = vpack.c.b16 %v2158, %v2157
        %v2169 = vpack.c.b16 %v2160, %v2159
        %v2170 = vpack.c.b16 %v2162, %v2161
        %2179 = vmatprep.subr.bf16.mxu0 0
        %2180 = vmatpush1.bf16.msra.mxu0 %v2163
        %2181 = vmatprep.subr.bf16.mxu0 0
        %2182 = vmatpush1.bf16.msra.mxu0 %v2164
        %2183 = vmatprep.subr.bf16.mxu0 0
        %2184 = vmatpush1.bf16.msra.mxu0 %v2165
        %2185 = vmatprep.subr.bf16.mxu0 0
        %2186 = vmatpush1.bf16.msra.mxu0 %v2166
        %2187 = vmatprep.subr.bf16.mxu0 0
        %2188 = vmatpush1.bf16.msra.mxu0 %v2167
        %2189 = vmatprep.subr.bf16.mxu0 0
        %2190 = vmatpush1.bf16.msra.mxu0 %v2168
        %2191 = vmatprep.subr.bf16.mxu0 0
        %2192 = vmatpush1.bf16.msra.mxu0 %v2169
        %2193 = vmatprep.subr.bf16.mxu0 0
        %2194 = vmatpush1.bf16.msra.mxu0 %v2170
        %2195 = vmatprep.subr.bf16.mxu0 0
        %2196 = vmatpush1.bf16.msra.mxu0 0
        %2197 = vmatprep.subr.bf16.mxu0 0
        %2198 = vmatpush1.bf16.msra.mxu0 0
        %2199 = vmatprep.subr.bf16.mxu0 0
        %2200 = vmatpush1.bf16.msra.mxu0 0
        %2201 = vmatprep.subr.bf16.mxu0 0
        %2202 = vmatpush1.bf16.msra.mxu0 0
        %2203 = vmatprep.subr.bf16.mxu0 0
        %2204 = vmatpush1.bf16.msra.mxu0 0
        %2205 = vmatprep.subr.bf16.mxu0 0
        %2206 = vmatpush1.bf16.msra.mxu0 0
        %2207 = vmatprep.subr.bf16.mxu0 0
        %2208 = vmatpush1.bf16.msra.mxu0 0
        %2209 = vmatprep.subr.bf16.mxu0 0
        %2210 = vmatpush1.bf16.msra.mxu0 0
        %2211 = vmatprep.mubr.bf16.mxu0 0
        %2212 = vmatmul.mubr.bf16.gmra.mrb[0].mxu0 %v824
        %v2213 = vpop.f32.mrb[0].mxu0
        %v2214 = vadd.f32 0.0, %v2213
        %v2215 = vpop.f32.mrb[0].mxu0
        %v2216 = vpop.f32.mrb[0].mxu0
        %v2217 = vadd.f32 0.0, %v2216
        %v2218 = vpop.f32.mrb[0].mxu0
        %2219 = vmatprep.mubr.bf16.mxu0 0
        %2220 = vmatmul.mubr.bf16.gmra.mrb[0].mxu0 %v825
        %v2221 = vpop.f32.mrb[0].mxu0
        %v2222 = vadd.f32 0.0, %v2221
        %v2223 = vpop.f32.mrb[0].mxu0
        %v2224 = vpop.f32.mrb[0].mxu0
        %v2225 = vadd.f32 0.0, %v2224
        %v2226 = vpop.f32.mrb[0].mxu0
        %2227 = vmatprep.mubr.bf16.mxu0 0
        %2228 = vmatmul.mubr.bf16.gmra.mrb[0].mxu0 %v826
        %v2229 = vpop.f32.mrb[0].mxu0
        %v2230 = vadd.f32 0.0, %v2229
        %v2231 = vpop.f32.mrb[0].mxu0
        %v2232 = vpop.f32.mrb[0].mxu0
        %v2233 = vadd.f32 0.0, %v2232
        %v2234 = vpop.f32.mrb[0].mxu0
        %2235 = vmatprep.mubr.bf16.mxu0 0
        %2236 = vmatmul.mubr.bf16.gmra.mrb[0].mxu0 %v827
        %v2237 = vpop.f32.mrb[0].mxu0
        %v2238 = vadd.f32 0.0, %v2237
        %v2239 = vpop.f32.mrb[0].mxu0
        %v2240 = vpop.f32.mrb[0].mxu0
        %v2241 = vadd.f32 0.0, %v2240
        %v2242 = vpop.f32.mrb[0].mxu0
        %2243 = vmatprep.mubr.bf16.mxu0 0
        %2244 = vmatmul.mubr.bf16.gmra.mrb[0].mxu0 %v828
        %v2245 = vpop.f32.mrb[0].mxu0
        %v2246 = vadd.f32 0.0, %v2245
        %v2247 = vpop.f32.mrb[0].mxu0
        %v2248 = vpop.f32.mrb[0].mxu0
        %v2249 = vadd.f32 0.0, %v2248
        %v2250 = vpop.f32.mrb[0].mxu0
        %2251 = vmatprep.mubr.bf16.mxu0 0
        %2252 = vmatmul.mubr.bf16.gmra.mrb[0].mxu0 %v829
        %v2253 = vpop.f32.mrb[0].mxu0
        %v2254 = vadd.f32 0.0, %v2253
        %v2255 = vpop.f32.mrb[0].mxu0
        %v2256 = vpop.f32.mrb[0].mxu0
        %v2257 = vadd.f32 0.0, %v2256
        %v2258 = vpop.f32.mrb[0].mxu0
        %2259 = vmatprep.mubr.bf16.mxu0 0
        %2260 = vmatmul.mubr.bf16.gmra.mrb[0].mxu0 %v830
        %v2261 = vpop.f32.mrb[0].mxu0
        %v2262 = vadd.f32 0.0, %v2261
        %v2263 = vpop.f32.mrb[0].mxu0
        %v2264 = vpop.f32.mrb[0].mxu0
        %v2265 = vadd.f32 0.0, %v2264
        %v2266 = vpop.f32.mrb[0].mxu0
        %2267 = vmatprep.mubr.bf16.mxu0 0
        %2268 = vmatmul.mubr.bf16.gmra.mrb[0].mxu0 %v831
        %v2269 = vpop.f32.mrb[0].mxu0
        %v2270 = vadd.f32 0.0, %v2269
        %v2271 = vpop.f32.mrb[0].mxu0
        %v2272 = vpop.f32.mrb[0].mxu0
        %v2273 = vadd.f32 0.0, %v2272
        %v2274 = vpop.f32.mrb[0].mxu0
        %2275 = vmatprep.mubr.bf16.mxu0 0
        %2276 = vmatmul.mubr.bf16.gmra.mrb[0].mxu0 %v832
        %v2277 = vpop.f32.mrb[0].mxu0
        %v2278 = vadd.f32 0.0, %v2277
        %v2279 = vpop.f32.mrb[0].mxu0
        %v2280 = vpop.f32.mrb[0].mxu0
        %v2281 = vadd.f32 0.0, %v2280
        %v2282 = vpop.f32.mrb[0].mxu0
        %2283 = vmatprep.mubr.bf16.mxu0 0
        %2284 = vmatmul.mubr.bf16.gmra.mrb[0].mxu0 %v833
        %v2285 = vpop.f32.mrb[0].mxu0
        %v2286 = vadd.f32 0.0, %v2285
        %v2287 = vpop.f32.mrb[0].mxu0
        %v2288 = vpop.f32.mrb[0].mxu0
        %v2289 = vadd.f32 0.0, %v2288
        %v2290 = vpop.f32.mrb[0].mxu0
        %2291 = vmatprep.mubr.bf16.mxu0 0
        %2292 = vmatmul.mubr.bf16.gmra.mrb[0].mxu0 %v834
        %v2293 = vpop.f32.mrb[0].mxu0
        %v2294 = vadd.f32 0.0, %v2293
        %v2295 = vpop.f32.mrb[0].mxu0
        %v2296 = vpop.f32.mrb[0].mxu0
        %v2297 = vadd.f32 0.0, %v2296
        %v2298 = vpop.f32.mrb[0].mxu0
        %2299 = vmatprep.mubr.bf16.mxu0 0
        %2300 = vmatmul.mubr.bf16.gmra.mrb[0].mxu0 %v835
        %v2301 = vpop.f32.mrb[0].mxu0
        %v2302 = vadd.f32 0.0, %v2301
        %v2303 = vpop.f32.mrb[0].mxu0
        %v2304 = vpop.f32.mrb[0].mxu0
        %v2305 = vadd.f32 0.0, %v2304
        %v2306 = vpop.f32.mrb[0].mxu0
        %2307 = vmatprep.mubr.bf16.mxu0 0
        %2308 = vmatmul.mubr.bf16.gmra.mrb[0].mxu0 %v836
        %v2309 = vpop.f32.mrb[0].mxu0
        %v2310 = vadd.f32 0.0, %v2309
        %v2311 = vpop.f32.mrb[0].mxu0
        %v2312 = vpop.f32.mrb[0].mxu0
        %v2313 = vadd.f32 0.0, %v2312
        %v2314 = vpop.f32.mrb[0].mxu0
        %2315 = vmatprep.mubr.bf16.mxu0 0
        %2316 = vmatmul.mubr.bf16.gmra.mrb[0].mxu0 %v837
        %v2317 = vpop.f32.mrb[0].mxu0
        %v2318 = vadd.f32 0.0, %v2317
        %v2319 = vpop.f32.mrb[0].mxu0
        %v2320 = vpop.f32.mrb[0].mxu0
        %v2321 = vadd.f32 0.0, %v2320
        %v2322 = vpop.f32.mrb[0].mxu0
        %2323 = vmatprep.mubr.bf16.mxu0 0
        %2324 = vmatmul.mubr.bf16.gmra.mrb[0].mxu0 %v838
        %v2325 = vpop.f32.mrb[0].mxu0
        %v2326 = vadd.f32 0.0, %v2325
        %v2327 = vpop.f32.mrb[0].mxu0
        %v2328 = vpop.f32.mrb[0].mxu0
        %v2329 = vadd.f32 0.0, %v2328
        %v2330 = vpop.f32.mrb[0].mxu0
        %2331 = vmatprep.mubr.bf16.mxu0 0
        %2332 = vmatmul.mubr.bf16.gmra.mrb[0].mxu0 %v2129
        %v2333 = vpop.f32.mrb[0].mxu0
        %v2334 = vadd.f32 0.0, %v2333
        %v2335 = vpop.f32.mrb[0].mxu0
        %v2336 = vpop.f32.mrb[0].mxu0
        %v2337 = vadd.f32 0.0, %v2336
        %v2338 = vpop.f32.mrb[0].mxu0
        %2339 = vdwg.mxu0
        %v2340 = vadd.f32 %v2054, %v2214
        %v2341 = vadd.f32 %v2055, %v2217
        %v2342 = vadd.f32 %v2056, %v2222
        %v2343 = vadd.f32 %v2057, %v2225
        %v2344 = vadd.f32 %v2058, %v2230
        %v2345 = vadd.f32 %v2059, %v2233
        %v2346 = vadd.f32 %v2060, %v2238
        %v2347 = vadd.f32 %v2061, %v2241
        %v2348 = vadd.f32 %v2062, %v2246
        %v2349 = vadd.f32 %v2063, %v2249
        %v2350 = vadd.f32 %v2064, %v2254
        %v2351 = vadd.f32 %v2065, %v2257
        %v2352 = vadd.f32 %v2066, %v2262
        %v2353 = vadd.f32 %v2067, %v2265
        %v2354 = vadd.f32 %v2068, %v2270
        %v2355 = vadd.f32 %v2069, %v2273
        %v2356 = vadd.f32 %v2070, %v2278
        %v2357 = vadd.f32 %v2071, %v2281
        %v2358 = vadd.f32 %v2072, %v2286
        %v2359 = vadd.f32 %v2073, %v2289
        %v2360 = vadd.f32 %v2074, %v2294
        %v2361 = vadd.f32 %v2075, %v2297
        %v2362 = vadd.f32 %v2076, %v2302
        %v2363 = vadd.f32 %v2077, %v2305
        %v2364 = vadd.f32 %v2078, %v2310
        %v2365 = vadd.f32 %v2079, %v2313
        %v2366 = vadd.f32 %v2080, %v2318
        %v2367 = vadd.f32 %v2081, %v2321
        %v2368 = vadd.f32 %v2082, %v2326
        %v2369 = vadd.f32 %v2083, %v2329
        %v2370 = vadd.f32 %v2084, %v2334
        %v2371 = vadd.f32 %v2085, %v2337
        %v2373 = vrot.slane %v365, 5
        %v2374 = vrot.slane %v2373, 4
        %v2375 = vrot.slane %v366, 5
        %v2376 = vsel %vm1387, %v2374, %v2375
        %v2377 = vrot.slane %v2375, 4
        %v2378 = vrot.slane %v367, 5
        %v2379 = vsel %vm1387, %v2377, %v2378
        %s2380 = scalar_lea.vmem %s2, 320
        %v2381 = vld [vmem:[%s2380] sm:$0xf]
        %v2382 = vld [vmem:[%s2380 + $0x4] sm:$0xf]
        %v2383 = vld [vmem:[%s2380 + $0x8] sm:$0xf]
        %v2384 = vld [vmem:[%s2380 + $0xc] sm:$0xf]
        %v2385 = vld [vmem:[%s2380 + $0x10] sm:$0xf]
        %v2386 = vld [vmem:[%s2380 + $0x14] sm:$0xf]
        %v2387 = vld [vmem:[%s2380 + $0x18] sm:$0xf]
        %v2388 = vld [vmem:[%s2380 + $0x1c] sm:$0xf]
        %v2389 = vld [vmem:[%s2380 + $0x20] sm:$0xf]
        %v2390 = vld [vmem:[%s2380 + $0x24] sm:$0xf]
        %v2391 = vld [vmem:[%s2380 + $0x28] sm:$0xf]
        %v2392 = vld [vmem:[%s2380 + $0x2c] sm:$0xf]
        %v2393 = vld [vmem:[%s2380 + $0x30] sm:$0xf]
        %v2394 = vld [vmem:[%s2380 + $0x34] sm:$0xf]
        %v2395 = vld [vmem:[%s2380 + $0x38] sm:$0xf]
        %v2396 = vld [vmem:[%s2380 + $0x3c] sm:$0xf]
        %v2397 = vunpack.c.l.b16 %v2376
        %v2398 = vunpack.c.l.b16 %v2379
        %v2399 = vpack.c.b16 %v2398, %v2397
        %v2417 = vunpack.c.l.b16 %v2381
        %v2418 = vunpack.c.l.b16 %v2382
        %v2419 = vunpack.c.l.b16 %v2383
        %v2420 = vunpack.c.l.b16 %v2384
        %v2421 = vunpack.c.l.b16 %v2385
        %v2422 = vunpack.c.l.b16 %v2386
        %v2423 = vunpack.c.l.b16 %v2387
        %v2424 = vunpack.c.l.b16 %v2388
        %v2425 = vunpack.c.l.b16 %v2389
        %v2426 = vunpack.c.l.b16 %v2390
        %v2427 = vunpack.c.l.b16 %v2391
        %v2428 = vunpack.c.l.b16 %v2392
        %v2429 = vunpack.c.l.b16 %v2393
        %v2430 = vunpack.c.l.b16 %v2394
        %v2431 = vunpack.c.l.b16 %v2395
        %v2432 = vunpack.c.l.b16 %v2396
        %v2433 = vpack.c.b16 %v2418, %v2417
        %v2434 = vpack.c.b16 %v2420, %v2419
        %v2435 = vpack.c.b16 %v2422, %v2421
        %v2436 = vpack.c.b16 %v2424, %v2423
        %v2437 = vpack.c.b16 %v2426, %v2425
        %v2438 = vpack.c.b16 %v2428, %v2427
        %v2439 = vpack.c.b16 %v2430, %v2429
        %v2440 = vpack.c.b16 %v2432, %v2431
        %2449 = vmatprep.subr.bf16.mxu0 0
        %2450 = vmatpush1.bf16.msra.mxu0 %v2433
        %2451 = vmatprep.subr.bf16.mxu0 0
        %2452 = vmatpush1.bf16.msra.mxu0 %v2434
        %2453 = vmatprep.subr.bf16.mxu0 0
        %2454 = vmatpush1.bf16.msra.mxu0 %v2435
        %2455 = vmatprep.subr.bf16.mxu0 0
        %2456 = vmatpush1.bf16.msra.mxu0 %v2436
        %2457 = vmatprep.subr.bf16.mxu0 0
        %2458 = vmatpush1.bf16.msra.mxu0 %v2437
        %2459 = vmatprep.subr.bf16.mxu0 0
        %2460 = vmatpush1.bf16.msra.mxu0 %v2438
        %2461 = vmatprep.subr.bf16.mxu0 0
        %2462 = vmatpush1.bf16.msra.mxu0 %v2439
        %2463 = vmatprep.subr.bf16.mxu0 0
        %2464 = vmatpush1.bf16.msra.mxu0 %v2440
        %2465 = vmatprep.subr.bf16.mxu0 0
        %2466 = vmatpush1.bf16.msra.mxu0 0
        %2467 = vmatprep.subr.bf16.mxu0 0
        %2468 = vmatpush1.bf16.msra.mxu0 0
        %2469 = vmatprep.subr.bf16.mxu0 0
        %2470 = vmatpush1.bf16.msra.mxu0 0
        %2471 = vmatprep.subr.bf16.mxu0 0
        %2472 = vmatpush1.bf16.msra.mxu0 0
        %2473 = vmatprep.subr.bf16.mxu0 0
        %2474 = vmatpush1.bf16.msra.mxu0 0
        %2475 = vmatprep.subr.bf16.mxu0 0
        %2476 = vmatpush1.bf16.msra.mxu0 0
        %2477 = vmatprep.subr.bf16.mxu0 0
        %2478 = vmatpush1.bf16.msra.mxu0 0
        %2479 = vmatprep.subr.bf16.mxu0 0
        %2480 = vmatpush1.bf16.msra.mxu0 0
        %2481 = vmatprep.mubr.bf16.mxu0 0
        %2482 = vmatmul.mubr.bf16.gmra.mrb[0].mxu0 %v1550
        %v2483 = vpop.f32.mrb[0].mxu0
        %v2484 = vadd.f32 0.0, %v2483
        %v2485 = vpop.f32.mrb[0].mxu0
        %v2486 = vpop.f32.mrb[0].mxu0
        %v2487 = vadd.f32 0.0, %v2486
        %v2488 = vpop.f32.mrb[0].mxu0
        %2489 = vmatprep.mubr.bf16.mxu0 0
        %2490 = vmatmul.mubr.bf16.gmra.mrb[0].mxu0 %v1551
        %v2491 = vpop.f32.mrb[0].mxu0
        %v2492 = vadd.f32 0.0, %v2491
        %v2493 = vpop.f32.mrb[0].mxu0
        %v2494 = vpop.f32.mrb[0].mxu0
        %v2495 = vadd.f32 0.0, %v2494
        %v2496 = vpop.f32.mrb[0].mxu0
        %2497 = vmatprep.mubr.bf16.mxu0 0
        %2498 = vmatmul.mubr.bf16.gmra.mrb[0].mxu0 %v1552
        %v2499 = vpop.f32.mrb[0].mxu0
        %v2500 = vadd.f32 0.0, %v2499
        %v2501 = vpop.f32.mrb[0].mxu0
        %v2502 = vpop.f32.mrb[0].mxu0
        %v2503 = vadd.f32 0.0, %v2502
        %v2504 = vpop.f32.mrb[0].mxu0
        %2505 = vmatprep.mubr.bf16.mxu0 0
        %2506 = vmatmul.mubr.bf16.gmra.mrb[0].mxu0 %v1553
        %v2507 = vpop.f32.mrb[0].mxu0
        %v2508 = vadd.f32 0.0, %v2507
        %v2509 = vpop.f32.mrb[0].mxu0
        %v2510 = vpop.f32.mrb[0].mxu0
        %v2511 = vadd.f32 0.0, %v2510
        %v2512 = vpop.f32.mrb[0].mxu0
        %2513 = vmatprep.mubr.bf16.mxu0 0
        %2514 = vmatmul.mubr.bf16.gmra.mrb[0].mxu0 %v1554
        %v2515 = vpop.f32.mrb[0].mxu0
        %v2516 = vadd.f32 0.0, %v2515
        %v2517 = vpop.f32.mrb[0].mxu0
        %v2518 = vpop.f32.mrb[0].mxu0
        %v2519 = vadd.f32 0.0, %v2518
        %v2520 = vpop.f32.mrb[0].mxu0
        %2521 = vmatprep.mubr.bf16.mxu0 0
        %2522 = vmatmul.mubr.bf16.gmra.mrb[0].mxu0 %v1555
        %v2523 = vpop.f32.mrb[0].mxu0
        %v2524 = vadd.f32 0.0, %v2523
        %v2525 = vpop.f32.mrb[0].mxu0
        %v2526 = vpop.f32.mrb[0].mxu0
        %v2527 = vadd.f32 0.0, %v2526
        %v2528 = vpop.f32.mrb[0].mxu0
        %2529 = vmatprep.mubr.bf16.mxu0 0
        %2530 = vmatmul.mubr.bf16.gmra.mrb[0].mxu0 %v1556
        %v2531 = vpop.f32.mrb[0].mxu0
        %v2532 = vadd.f32 0.0, %v2531
        %v2533 = vpop.f32.mrb[0].mxu0
        %v2534 = vpop.f32.mrb[0].mxu0
        %v2535 = vadd.f32 0.0, %v2534
        %v2536 = vpop.f32.mrb[0].mxu0
        %2537 = vmatprep.mubr.bf16.mxu0 0
        %2538 = vmatmul.mubr.bf16.gmra.mrb[0].mxu0 %v1557
        %v2539 = vpop.f32.mrb[0].mxu0
        %v2540 = vadd.f32 0.0, %v2539
        %v2541 = vpop.f32.mrb[0].mxu0
        %v2542 = vpop.f32.mrb[0].mxu0
        %v2543 = vadd.f32 0.0, %v2542
        %v2544 = vpop.f32.mrb[0].mxu0
        %2545 = vmatprep.mubr.bf16.mxu0 0
        %2546 = vmatmul.mubr.bf16.gmra.mrb[0].mxu0 %v1558
        %v2547 = vpop.f32.mrb[0].mxu0
        %v2548 = vadd.f32 0.0, %v2547
        %v2549 = vpop.f32.mrb[0].mxu0
        %v2550 = vpop.f32.mrb[0].mxu0
        %v2551 = vadd.f32 0.0, %v2550
        %v2552 = vpop.f32.mrb[0].mxu0
        %2553 = vmatprep.mubr.bf16.mxu0 0
        %2554 = vmatmul.mubr.bf16.gmra.mrb[0].mxu0 %v1559
        %v2555 = vpop.f32.mrb[0].mxu0
        %v2556 = vadd.f32 0.0, %v2555
        %v2557 = vpop.f32.mrb[0].mxu0
        %v2558 = vpop.f32.mrb[0].mxu0
        %v2559 = vadd.f32 0.0, %v2558
        %v2560 = vpop.f32.mrb[0].mxu0
        %2561 = vmatprep.mubr.bf16.mxu0 0
        %2562 = vmatmul.mubr.bf16.gmra.mrb[0].mxu0 %v1560
        %v2563 = vpop.f32.mrb[0].mxu0
        %v2564 = vadd.f32 0.0, %v2563
        %v2565 = vpop.f32.mrb[0].mxu0
        %v2566 = vpop.f32.mrb[0].mxu0
        %v2567 = vadd.f32 0.0, %v2566
        %v2568 = vpop.f32.mrb[0].mxu0
        %2569 = vmatprep.mubr.bf16.mxu0 0
        %2570 = vmatmul.mubr.bf16.gmra.mrb[0].mxu0 %v1561
        %v2571 = vpop.f32.mrb[0].mxu0
        %v2572 = vadd.f32 0.0, %v2571
        %v2573 = vpop.f32.mrb[0].mxu0
        %v2574 = vpop.f32.mrb[0].mxu0
        %v2575 = vadd.f32 0.0, %v2574
        %v2576 = vpop.f32.mrb[0].mxu0
        %2577 = vmatprep.mubr.bf16.mxu0 0
        %2578 = vmatmul.mubr.bf16.gmra.mrb[0].mxu0 %v1562
        %v2579 = vpop.f32.mrb[0].mxu0
        %v2580 = vadd.f32 0.0, %v2579
        %v2581 = vpop.f32.mrb[0].mxu0
        %v2582 = vpop.f32.mrb[0].mxu0
        %v2583 = vadd.f32 0.0, %v2582
        %v2584 = vpop.f32.mrb[0].mxu0
        %2585 = vmatprep.mubr.bf16.mxu0 0
        %2586 = vmatmul.mubr.bf16.gmra.mrb[0].mxu0 %v1563
        %v2587 = vpop.f32.mrb[0].mxu0
        %v2588 = vadd.f32 0.0, %v2587
        %v2589 = vpop.f32.mrb[0].mxu0
        %v2590 = vpop.f32.mrb[0].mxu0
        %v2591 = vadd.f32 0.0, %v2590
        %v2592 = vpop.f32.mrb[0].mxu0
        %2593 = vmatprep.mubr.bf16.mxu0 0
        %2594 = vmatmul.mubr.bf16.gmra.mrb[0].mxu0 %v1564
        %v2595 = vpop.f32.mrb[0].mxu0
        %v2596 = vadd.f32 0.0, %v2595
        %v2597 = vpop.f32.mrb[0].mxu0
        %v2598 = vpop.f32.mrb[0].mxu0
        %v2599 = vadd.f32 0.0, %v2598
        %v2600 = vpop.f32.mrb[0].mxu0
        %2601 = vmatprep.mubr.bf16.mxu0 0
        %2602 = vmatmul.mubr.bf16.gmra.mrb[0].mxu0 %v2399
        %v2603 = vpop.f32.mrb[0].mxu0
        %v2604 = vadd.f32 0.0, %v2603
        %v2605 = vpop.f32.mrb[0].mxu0
        %v2606 = vpop.f32.mrb[0].mxu0
        %v2607 = vadd.f32 0.0, %v2606
        %v2608 = vpop.f32.mrb[0].mxu0
        %2609 = vdwg.mxu0
        %v2610 = vadd.f32 %v2340, %v2484
        %v2611 = vadd.f32 %v2341, %v2487
        %v2612 = vadd.f32 %v2342, %v2492
        %v2613 = vadd.f32 %v2343, %v2495
        %v2614 = vadd.f32 %v2344, %v2500
        %v2615 = vadd.f32 %v2345, %v2503
        %v2616 = vadd.f32 %v2346, %v2508
        %v2617 = vadd.f32 %v2347, %v2511
        %v2618 = vadd.f32 %v2348, %v2516
        %v2619 = vadd.f32 %v2349, %v2519
        %v2620 = vadd.f32 %v2350, %v2524
        %v2621 = vadd.f32 %v2351, %v2527
        %v2622 = vadd.f32 %v2352, %v2532
        %v2623 = vadd.f32 %v2353, %v2535
        %v2624 = vadd.f32 %v2354, %v2540
        %v2625 = vadd.f32 %v2355, %v2543
        %v2626 = vadd.f32 %v2356, %v2548
        %v2627 = vadd.f32 %v2357, %v2551
        %v2628 = vadd.f32 %v2358, %v2556
        %v2629 = vadd.f32 %v2359, %v2559
        %v2630 = vadd.f32 %v2360, %v2564
        %v2631 = vadd.f32 %v2361, %v2567
        %v2632 = vadd.f32 %v2362, %v2572
        %v2633 = vadd.f32 %v2363, %v2575
        %v2634 = vadd.f32 %v2364, %v2580
        %v2635 = vadd.f32 %v2365, %v2583
        %v2636 = vadd.f32 %v2366, %v2588
        %v2637 = vadd.f32 %v2367, %v2591
        %v2638 = vadd.f32 %v2368, %v2596
        %v2639 = vadd.f32 %v2369, %v2599
        %v2640 = vadd.f32 %v2370, %v2604
        %v2641 = vadd.f32 %v2371, %v2607
        %s2642 = scalar_lea.vmem %s2, 384
        %v2643 = vld [vmem:[%s2642] sm:$0xf]
        %v2644 = vld [vmem:[%s2642 + $0x4] sm:$0xf]
        %v2645 = vld [vmem:[%s2642 + $0x8] sm:$0xf]
        %v2646 = vld [vmem:[%s2642 + $0xc] sm:$0xf]
        %v2647 = vld [vmem:[%s2642 + $0x10] sm:$0xf]
        %v2648 = vld [vmem:[%s2642 + $0x14] sm:$0xf]
        %v2649 = vld [vmem:[%s2642 + $0x18] sm:$0xf]
        %v2650 = vld [vmem:[%s2642 + $0x1c] sm:$0xf]
        %v2651 = vld [vmem:[%s2642 + $0x20] sm:$0xf]
        %v2652 = vld [vmem:[%s2642 + $0x24] sm:$0xf]
        %v2653 = vld [vmem:[%s2642 + $0x28] sm:$0xf]
        %v2654 = vld [vmem:[%s2642 + $0x2c] sm:$0xf]
        %v2655 = vld [vmem:[%s2642 + $0x30] sm:$0xf]
        %v2656 = vld [vmem:[%s2642 + $0x34] sm:$0xf]
        %v2657 = vld [vmem:[%s2642 + $0x38] sm:$0xf]
        %v2658 = vld [vmem:[%s2642 + $0x3c] sm:$0xf]
        %v2661 = vunpack.c.l.b16 %v368
        %v2662 = vunpack.c.l.b16 %v369
        %v2663 = vpack.c.b16 %v2662, %v2661
        %v2681 = vunpack.c.l.b16 %v2643
        %v2682 = vunpack.c.l.b16 %v2644
        %v2683 = vunpack.c.l.b16 %v2645
        %v2684 = vunpack.c.l.b16 %v2646
        %v2685 = vunpack.c.l.b16 %v2647
        %v2686 = vunpack.c.l.b16 %v2648
        %v2687 = vunpack.c.l.b16 %v2649
        %v2688 = vunpack.c.l.b16 %v2650
        %v2689 = vunpack.c.l.b16 %v2651
        %v2690 = vunpack.c.l.b16 %v2652
        %v2691 = vunpack.c.l.b16 %v2653
        %v2692 = vunpack.c.l.b16 %v2654
        %v2693 = vunpack.c.l.b16 %v2655
        %v2694 = vunpack.c.l.b16 %v2656
        %v2695 = vunpack.c.l.b16 %v2657
        %v2696 = vunpack.c.l.b16 %v2658
        %v2697 = vpack.c.b16 %v2682, %v2681
        %v2698 = vpack.c.b16 %v2684, %v2683
        %v2699 = vpack.c.b16 %v2686, %v2685
        %v2700 = vpack.c.b16 %v2688, %v2687
        %v2701 = vpack.c.b16 %v2690, %v2689
        %v2702 = vpack.c.b16 %v2692, %v2691
        %v2703 = vpack.c.b16 %v2694, %v2693
        %v2704 = vpack.c.b16 %v2696, %v2695
        %2713 = vmatprep.subr.bf16.mxu0 0
        %2714 = vmatpush1.bf16.msra.mxu0 %v2697
        %2715 = vmatprep.subr.bf16.mxu0 0
        %2716 = vmatpush1.bf16.msra.mxu0 %v2698
        %2717 = vmatprep.subr.bf16.mxu0 0
        %2718 = vmatpush1.bf16.msra.mxu0 %v2699
        %2719 = vmatprep.subr.bf16.mxu0 0
        %2720 = vmatpush1.bf16.msra.mxu0 %v2700
        %2721 = vmatprep.subr.bf16.mxu0 0
        %2722 = vmatpush1.bf16.msra.mxu0 %v2701
        %2723 = vmatprep.subr.bf16.mxu0 0
        %2724 = vmatpush1.bf16.msra.mxu0 %v2702
        %2725 = vmatprep.subr.bf16.mxu0 0
        %2726 = vmatpush1.bf16.msra.mxu0 %v2703
        %2727 = vmatprep.subr.bf16.mxu0 0
        %2728 = vmatpush1.bf16.msra.mxu0 %v2704
        %2729 = vmatprep.subr.bf16.mxu0 0
        %2730 = vmatpush1.bf16.msra.mxu0 0
        %2731 = vmatprep.subr.bf16.mxu0 0
        %2732 = vmatpush1.bf16.msra.mxu0 0
        %2733 = vmatprep.subr.bf16.mxu0 0
        %2734 = vmatpush1.bf16.msra.mxu0 0
        %2735 = vmatprep.subr.bf16.mxu0 0
        %2736 = vmatpush1.bf16.msra.mxu0 0
        %2737 = vmatprep.subr.bf16.mxu0 0
        %2738 = vmatpush1.bf16.msra.mxu0 0
        %2739 = vmatprep.subr.bf16.mxu0 0
        %2740 = vmatpush1.bf16.msra.mxu0 0
        %2741 = vmatprep.subr.bf16.mxu0 0
        %2742 = vmatpush1.bf16.msra.mxu0 0
        %2743 = vmatprep.subr.bf16.mxu0 0
        %2744 = vmatpush1.bf16.msra.mxu0 0
        %2745 = vmatprep.mubr.bf16.mxu0 0
        %2746 = vmatmul.mubr.bf16.gmra.mrb[0].mxu0 %v1130
        %v2747 = vpop.f32.mrb[0].mxu0
        %v2748 = vadd.f32 0.0, %v2747
        %v2749 = vpop.f32.mrb[0].mxu0
        %v2750 = vpop.f32.mrb[0].mxu0
        %v2751 = vadd.f32 0.0, %v2750
        %v2752 = vpop.f32.mrb[0].mxu0
        %2753 = vmatprep.mubr.bf16.mxu0 0
        %2754 = vmatmul.mubr.bf16.gmra.mrb[0].mxu0 %v1131
        %v2755 = vpop.f32.mrb[0].mxu0
        %v2756 = vadd.f32 0.0, %v2755
        %v2757 = vpop.f32.mrb[0].mxu0
        %v2758 = vpop.f32.mrb[0].mxu0
        %v2759 = vadd.f32 0.0, %v2758
        %v2760 = vpop.f32.mrb[0].mxu0
        %2761 = vmatprep.mubr.bf16.mxu0 0
        %2762 = vmatmul.mubr.bf16.gmra.mrb[0].mxu0 %v1132
        %v2763 = vpop.f32.mrb[0].mxu0
        %v2764 = vadd.f32 0.0, %v2763
        %v2765 = vpop.f32.mrb[0].mxu0
        %v2766 = vpop.f32.mrb[0].mxu0
        %v2767 = vadd.f32 0.0, %v2766
        %v2768 = vpop.f32.mrb[0].mxu0
        %2769 = vmatprep.mubr.bf16.mxu0 0
        %2770 = vmatmul.mubr.bf16.gmra.mrb[0].mxu0 %v1133
        %v2771 = vpop.f32.mrb[0].mxu0
        %v2772 = vadd.f32 0.0, %v2771
        %v2773 = vpop.f32.mrb[0].mxu0
        %v2774 = vpop.f32.mrb[0].mxu0
        %v2775 = vadd.f32 0.0, %v2774
        %v2776 = vpop.f32.mrb[0].mxu0
        %2777 = vmatprep.mubr.bf16.mxu0 0
        %2778 = vmatmul.mubr.bf16.gmra.mrb[0].mxu0 %v1134
        %v2779 = vpop.f32.mrb[0].mxu0
        %v2780 = vadd.f32 0.0, %v2779
        %v2781 = vpop.f32.mrb[0].mxu0
        %v2782 = vpop.f32.mrb[0].mxu0
        %v2783 = vadd.f32 0.0, %v2782
        %v2784 = vpop.f32.mrb[0].mxu0
        %2785 = vmatprep.mubr.bf16.mxu0 0
        %2786 = vmatmul.mubr.bf16.gmra.mrb[0].mxu0 %v1135
        %v2787 = vpop.f32.mrb[0].mxu0
        %v2788 = vadd.f32 0.0, %v2787
        %v2789 = vpop.f32.mrb[0].mxu0
        %v2790 = vpop.f32.mrb[0].mxu0
        %v2791 = vadd.f32 0.0, %v2790
        %v2792 = vpop.f32.mrb[0].mxu0
        %2793 = vmatprep.mubr.bf16.mxu0 0
        %2794 = vmatmul.mubr.bf16.gmra.mrb[0].mxu0 %v1136
        %v2795 = vpop.f32.mrb[0].mxu0
        %v2796 = vadd.f32 0.0, %v2795
        %v2797 = vpop.f32.mrb[0].mxu0
        %v2798 = vpop.f32.mrb[0].mxu0
        %v2799 = vadd.f32 0.0, %v2798
        %v2800 = vpop.f32.mrb[0].mxu0
        %2801 = vmatprep.mubr.bf16.mxu0 0
        %2802 = vmatmul.mubr.bf16.gmra.mrb[0].mxu0 %v1137
        %v2803 = vpop.f32.mrb[0].mxu0
        %v2804 = vadd.f32 0.0, %v2803
        %v2805 = vpop.f32.mrb[0].mxu0
        %v2806 = vpop.f32.mrb[0].mxu0
        %v2807 = vadd.f32 0.0, %v2806
        %v2808 = vpop.f32.mrb[0].mxu0
        %2809 = vmatprep.mubr.bf16.mxu0 0
        %2810 = vmatmul.mubr.bf16.gmra.mrb[0].mxu0 %v1138
        %v2811 = vpop.f32.mrb[0].mxu0
        %v2812 = vadd.f32 0.0, %v2811
        %v2813 = vpop.f32.mrb[0].mxu0
        %v2814 = vpop.f32.mrb[0].mxu0
        %v2815 = vadd.f32 0.0, %v2814
        %v2816 = vpop.f32.mrb[0].mxu0
        %2817 = vmatprep.mubr.bf16.mxu0 0
        %2818 = vmatmul.mubr.bf16.gmra.mrb[0].mxu0 %v1139
        %v2819 = vpop.f32.mrb[0].mxu0
        %v2820 = vadd.f32 0.0, %v2819
        %v2821 = vpop.f32.mrb[0].mxu0
        %v2822 = vpop.f32.mrb[0].mxu0
        %v2823 = vadd.f32 0.0, %v2822
        %v2824 = vpop.f32.mrb[0].mxu0
        %2825 = vmatprep.mubr.bf16.mxu0 0
        %2826 = vmatmul.mubr.bf16.gmra.mrb[0].mxu0 %v1140
        %v2827 = vpop.f32.mrb[0].mxu0
        %v2828 = vadd.f32 0.0, %v2827
        %v2829 = vpop.f32.mrb[0].mxu0
        %v2830 = vpop.f32.mrb[0].mxu0
        %v2831 = vadd.f32 0.0, %v2830
        %v2832 = vpop.f32.mrb[0].mxu0
        %2833 = vmatprep.mubr.bf16.mxu0 0
        %2834 = vmatmul.mubr.bf16.gmra.mrb[0].mxu0 %v1141
        %v2835 = vpop.f32.mrb[0].mxu0
        %v2836 = vadd.f32 0.0, %v2835
        %v2837 = vpop.f32.mrb[0].mxu0
        %v2838 = vpop.f32.mrb[0].mxu0
        %v2839 = vadd.f32 0.0, %v2838
        %v2840 = vpop.f32.mrb[0].mxu0
        %2841 = vmatprep.mubr.bf16.mxu0 0
        %2842 = vmatmul.mubr.bf16.gmra.mrb[0].mxu0 %v1142
        %v2843 = vpop.f32.mrb[0].mxu0
        %v2844 = vadd.f32 0.0, %v2843
        %v2845 = vpop.f32.mrb[0].mxu0
        %v2846 = vpop.f32.mrb[0].mxu0
        %v2847 = vadd.f32 0.0, %v2846
        %v2848 = vpop.f32.mrb[0].mxu0
        %2849 = vmatprep.mubr.bf16.mxu0 0
        %2850 = vmatmul.mubr.bf16.gmra.mrb[0].mxu0 %v1143
        %v2851 = vpop.f32.mrb[0].mxu0
        %v2852 = vadd.f32 0.0, %v2851
        %v2853 = vpop.f32.mrb[0].mxu0
        %v2854 = vpop.f32.mrb[0].mxu0
        %v2855 = vadd.f32 0.0, %v2854
        %v2856 = vpop.f32.mrb[0].mxu0
        %2857 = vmatprep.mubr.bf16.mxu0 0
        %2858 = vmatmul.mubr.bf16.gmra.mrb[0].mxu0 %v1843
        %v2859 = vpop.f32.mrb[0].mxu0
        %v2860 = vadd.f32 0.0, %v2859
        %v2861 = vpop.f32.mrb[0].mxu0
        %v2862 = vpop.f32.mrb[0].mxu0
        %v2863 = vadd.f32 0.0, %v2862
        %v2864 = vpop.f32.mrb[0].mxu0
        %2865 = vmatprep.mubr.bf16.mxu0 0
        %2866 = vmatmul.mubr.bf16.gmra.mrb[0].mxu0 %v2663
        %v2867 = vpop.f32.mrb[0].mxu0
        %v2868 = vadd.f32 0.0, %v2867
        %v2869 = vpop.f32.mrb[0].mxu0
        %v2870 = vpop.f32.mrb[0].mxu0
        %v2871 = vadd.f32 0.0, %v2870
        %v2872 = vpop.f32.mrb[0].mxu0
        %2873 = vdwg.mxu0
        %v2874 = vadd.f32 %v2610, %v2748
        %v2875 = vadd.f32 %v2611, %v2751
        %v2876 = vadd.f32 %v2612, %v2756
        %v2877 = vadd.f32 %v2613, %v2759
        %v2878 = vadd.f32 %v2614, %v2764
        %v2879 = vadd.f32 %v2615, %v2767
        %v2880 = vadd.f32 %v2616, %v2772
        %v2881 = vadd.f32 %v2617, %v2775
        %v2882 = vadd.f32 %v2618, %v2780
        %v2883 = vadd.f32 %v2619, %v2783
        %v2884 = vadd.f32 %v2620, %v2788
        %v2885 = vadd.f32 %v2621, %v2791
        %v2886 = vadd.f32 %v2622, %v2796
        %v2887 = vadd.f32 %v2623, %v2799
        %v2888 = vadd.f32 %v2624, %v2804
        %v2889 = vadd.f32 %v2625, %v2807
        %v2890 = vadd.f32 %v2626, %v2812
        %v2891 = vadd.f32 %v2627, %v2815
        %v2892 = vadd.f32 %v2628, %v2820
        %v2893 = vadd.f32 %v2629, %v2823
        %v2894 = vadd.f32 %v2630, %v2828
        %v2895 = vadd.f32 %v2631, %v2831
        %v2896 = vadd.f32 %v2632, %v2836
        %v2897 = vadd.f32 %v2633, %v2839
        %v2898 = vadd.f32 %v2634, %v2844
        %v2899 = vadd.f32 %v2635, %v2847
        %v2900 = vadd.f32 %v2636, %v2852
        %v2901 = vadd.f32 %v2637, %v2855
        %v2902 = vadd.f32 %v2638, %v2860
        %v2903 = vadd.f32 %v2639, %v2863
        %v2904 = vadd.f32 %v2640, %v2868
        %v2905 = vadd.f32 %v2641, %v2871
        %v2907 = vshrl.u32 %v368, 16
        %v2909 = vrot.slane %v2907, 4
        %v2910 = vshll.u32 %v368, 16
        %v2912 = vrot.slane %v2910, 5
        %v2913 = vor.u32 %v2909, %v2912
        %v2914 = vrot.slane %v2913, 4
        %v2916 = vshll.u32 %v369, 16
        %v2918 = vrot.slane %v2916, 5
        %v2919 = vsel %vm389, %v2914, %v2918
        %v2920 = vshrl.u32 %v369, 16
        %v2922 = vrot.slane %v2920, 4
        %v2923 = vor.u32 %v2922, %v2918
        %v2924 = vrot.slane %v2923, 4
        %v2926 = vshll.u32 %v370, 16
        %v2928 = vrot.slane %v2926, 5
        %v2929 = vsel %vm389, %v2924, %v2928
        %s2930 = scalar_lea.vmem %s2, 448
        %v2931 = vld [vmem:[%s2930] sm:$0xf]
        %v2932 = vld [vmem:[%s2930 + $0x4] sm:$0xf]
        %v2933 = vld [vmem:[%s2930 + $0x8] sm:$0xf]
        %v2934 = vld [vmem:[%s2930 + $0xc] sm:$0xf]
        %v2935 = vld [vmem:[%s2930 + $0x10] sm:$0xf]
        %v2936 = vld [vmem:[%s2930 + $0x14] sm:$0xf]
        %v2937 = vld [vmem:[%s2930 + $0x18] sm:$0xf]
        %v2938 = vld [vmem:[%s2930 + $0x1c] sm:$0xf]
        %v2939 = vld [vmem:[%s2930 + $0x20] sm:$0xf]
        %v2940 = vld [vmem:[%s2930 + $0x24] sm:$0xf]
        %v2941 = vld [vmem:[%s2930 + $0x28] sm:$0xf]
        %v2942 = vld [vmem:[%s2930 + $0x2c] sm:$0xf]
        %v2943 = vld [vmem:[%s2930 + $0x30] sm:$0xf]
        %v2944 = vld [vmem:[%s2930 + $0x34] sm:$0xf]
        %v2945 = vld [vmem:[%s2930 + $0x38] sm:$0xf]
        %v2946 = vld [vmem:[%s2930 + $0x3c] sm:$0xf]
        %v2947 = vunpack.c.l.b16 %v2919
        %v2948 = vunpack.c.l.b16 %v2929
        %v2949 = vpack.c.b16 %v2948, %v2947
        %v2967 = vunpack.c.l.b16 %v2931
        %v2968 = vunpack.c.l.b16 %v2932
        %v2969 = vunpack.c.l.b16 %v2933
        %v2970 = vunpack.c.l.b16 %v2934
        %v2971 = vunpack.c.l.b16 %v2935
        %v2972 = vunpack.c.l.b16 %v2936
        %v2973 = vunpack.c.l.b16 %v2937
        %v2974 = vunpack.c.l.b16 %v2938
        %v2975 = vunpack.c.l.b16 %v2939
        %v2976 = vunpack.c.l.b16 %v2940
        %v2977 = vunpack.c.l.b16 %v2941
        %v2978 = vunpack.c.l.b16 %v2942
        %v2979 = vunpack.c.l.b16 %v2943
        %v2980 = vunpack.c.l.b16 %v2944
        %v2981 = vunpack.c.l.b16 %v2945
        %v2982 = vunpack.c.l.b16 %v2946
        %v2983 = vpack.c.b16 %v2968, %v2967
        %v2984 = vpack.c.b16 %v2970, %v2969
        %v2985 = vpack.c.b16 %v2972, %v2971
        %v2986 = vpack.c.b16 %v2974, %v2973
        %v2987 = vpack.c.b16 %v2976, %v2975
        %v2988 = vpack.c.b16 %v2978, %v2977
        %v2989 = vpack.c.b16 %v2980, %v2979
        %v2990 = vpack.c.b16 %v2982, %v2981
        %2999 = vmatprep.subr.bf16.mxu0 0
        %3000 = vmatpush1.bf16.msra.mxu0 %v2983
        %3001 = vmatprep.subr.bf16.mxu0 0
        %3002 = vmatpush1.bf16.msra.mxu0 %v2984
        %3003 = vmatprep.subr.bf16.mxu0 0
        %3004 = vmatpush1.bf16.msra.mxu0 %v2985
        %3005 = vmatprep.subr.bf16.mxu0 0
        %3006 = vmatpush1.bf16.msra.mxu0 %v2986
        %3007 = vmatprep.subr.bf16.mxu0 0
        %3008 = vmatpush1.bf16.msra.mxu0 %v2987
        %3009 = vmatprep.subr.bf16.mxu0 0
        %3010 = vmatpush1.bf16.msra.mxu0 %v2988
        %3011 = vmatprep.subr.bf16.mxu0 0
        %3012 = vmatpush1.bf16.msra.mxu0 %v2989
        %3013 = vmatprep.subr.bf16.mxu0 0
        %3014 = vmatpush1.bf16.msra.mxu0 %v2990
        %3015 = vmatprep.subr.bf16.mxu0 0
        %3016 = vmatpush1.bf16.msra.mxu0 0
        %3017 = vmatprep.subr.bf16.mxu0 0
        %3018 = vmatpush1.bf16.msra.mxu0 0
        %3019 = vmatprep.subr.bf16.mxu0 0
        %3020 = vmatpush1.bf16.msra.mxu0 0
        %3021 = vmatprep.subr.bf16.mxu0 0
        %3022 = vmatpush1.bf16.msra.mxu0 0
        %3023 = vmatprep.subr.bf16.mxu0 0
        %3024 = vmatpush1.bf16.msra.mxu0 0
        %3025 = vmatprep.subr.bf16.mxu0 0
        %3026 = vmatpush1.bf16.msra.mxu0 0
        %3027 = vmatprep.subr.bf16.mxu0 0
        %3028 = vmatpush1.bf16.msra.mxu0 0
        %3029 = vmatprep.subr.bf16.mxu0 0
        %3030 = vmatpush1.bf16.msra.mxu0 0
        %3031 = vmatprep.mubr.bf16.mxu0 0
        %3032 = vmatmul.mubr.bf16.gmra.mrb[0].mxu0 %v825
        %v3033 = vpop.f32.mrb[0].mxu0
        %v3034 = vadd.f32 0.0, %v3033
        %v3035 = vpop.f32.mrb[0].mxu0
        %v3036 = vpop.f32.mrb[0].mxu0
        %v3037 = vadd.f32 0.0, %v3036
        %v3038 = vpop.f32.mrb[0].mxu0
        %3039 = vmatprep.mubr.bf16.mxu0 0
        %3040 = vmatmul.mubr.bf16.gmra.mrb[0].mxu0 %v826
        %v3041 = vpop.f32.mrb[0].mxu0
        %v3042 = vadd.f32 0.0, %v3041
        %v3043 = vpop.f32.mrb[0].mxu0
        %v3044 = vpop.f32.mrb[0].mxu0
        %v3045 = vadd.f32 0.0, %v3044
        %v3046 = vpop.f32.mrb[0].mxu0
        %3047 = vmatprep.mubr.bf16.mxu0 0
        %3048 = vmatmul.mubr.bf16.gmra.mrb[0].mxu0 %v827
        %v3049 = vpop.f32.mrb[0].mxu0
        %v3050 = vadd.f32 0.0, %v3049
        %v3051 = vpop.f32.mrb[0].mxu0
        %v3052 = vpop.f32.mrb[0].mxu0
        %v3053 = vadd.f32 0.0, %v3052
        %v3054 = vpop.f32.mrb[0].mxu0
        %3055 = vmatprep.mubr.bf16.mxu0 0
        %3056 = vmatmul.mubr.bf16.gmra.mrb[0].mxu0 %v828
        %v3057 = vpop.f32.mrb[0].mxu0
        %v3058 = vadd.f32 0.0, %v3057
        %v3059 = vpop.f32.mrb[0].mxu0
        %v3060 = vpop.f32.mrb[0].mxu0
        %v3061 = vadd.f32 0.0, %v3060
        %v3062 = vpop.f32.mrb[0].mxu0
        %3063 = vmatprep.mubr.bf16.mxu0 0
        %3064 = vmatmul.mubr.bf16.gmra.mrb[0].mxu0 %v829
        %v3065 = vpop.f32.mrb[0].mxu0
        %v3066 = vadd.f32 0.0, %v3065
        %v3067 = vpop.f32.mrb[0].mxu0
        %v3068 = vpop.f32.mrb[0].mxu0
        %v3069 = vadd.f32 0.0, %v3068
        %v3070 = vpop.f32.mrb[0].mxu0
        %3071 = vmatprep.mubr.bf16.mxu0 0
        %3072 = vmatmul.mubr.bf16.gmra.mrb[0].mxu0 %v830
        %v3073 = vpop.f32.mrb[0].mxu0
        %v3074 = vadd.f32 0.0, %v3073
        %v3075 = vpop.f32.mrb[0].mxu0
        %v3076 = vpop.f32.mrb[0].mxu0
        %v3077 = vadd.f32 0.0, %v3076
        %v3078 = vpop.f32.mrb[0].mxu0
        %3079 = vmatprep.mubr.bf16.mxu0 0
        %3080 = vmatmul.mubr.bf16.gmra.mrb[0].mxu0 %v831
        %v3081 = vpop.f32.mrb[0].mxu0
        %v3082 = vadd.f32 0.0, %v3081
        %v3083 = vpop.f32.mrb[0].mxu0
        %v3084 = vpop.f32.mrb[0].mxu0
        %v3085 = vadd.f32 0.0, %v3084
        %v3086 = vpop.f32.mrb[0].mxu0
        %3087 = vmatprep.mubr.bf16.mxu0 0
        %3088 = vmatmul.mubr.bf16.gmra.mrb[0].mxu0 %v832
        %v3089 = vpop.f32.mrb[0].mxu0
        %v3090 = vadd.f32 0.0, %v3089
        %v3091 = vpop.f32.mrb[0].mxu0
        %v3092 = vpop.f32.mrb[0].mxu0
        %v3093 = vadd.f32 0.0, %v3092
        %v3094 = vpop.f32.mrb[0].mxu0
        %3095 = vmatprep.mubr.bf16.mxu0 0
        %3096 = vmatmul.mubr.bf16.gmra.mrb[0].mxu0 %v833
        %v3097 = vpop.f32.mrb[0].mxu0
        %v3098 = vadd.f32 0.0, %v3097
        %v3099 = vpop.f32.mrb[0].mxu0
        %v3100 = vpop.f32.mrb[0].mxu0
        %v3101 = vadd.f32 0.0, %v3100
        %v3102 = vpop.f32.mrb[0].mxu0
        %3103 = vmatprep.mubr.bf16.mxu0 0
        %3104 = vmatmul.mubr.bf16.gmra.mrb[0].mxu0 %v834
        %v3105 = vpop.f32.mrb[0].mxu0
        %v3106 = vadd.f32 0.0, %v3105
        %v3107 = vpop.f32.mrb[0].mxu0
        %v3108 = vpop.f32.mrb[0].mxu0
        %v3109 = vadd.f32 0.0, %v3108
        %v3110 = vpop.f32.mrb[0].mxu0
        %3111 = vmatprep.mubr.bf16.mxu0 0
        %3112 = vmatmul.mubr.bf16.gmra.mrb[0].mxu0 %v835
        %v3113 = vpop.f32.mrb[0].mxu0
        %v3114 = vadd.f32 0.0, %v3113
        %v3115 = vpop.f32.mrb[0].mxu0
        %v3116 = vpop.f32.mrb[0].mxu0
        %v3117 = vadd.f32 0.0, %v3116
        %v3118 = vpop.f32.mrb[0].mxu0
        %3119 = vmatprep.mubr.bf16.mxu0 0
        %3120 = vmatmul.mubr.bf16.gmra.mrb[0].mxu0 %v836
        %v3121 = vpop.f32.mrb[0].mxu0
        %v3122 = vadd.f32 0.0, %v3121
        %v3123 = vpop.f32.mrb[0].mxu0
        %v3124 = vpop.f32.mrb[0].mxu0
        %v3125 = vadd.f32 0.0, %v3124
        %v3126 = vpop.f32.mrb[0].mxu0
        %3127 = vmatprep.mubr.bf16.mxu0 0
        %3128 = vmatmul.mubr.bf16.gmra.mrb[0].mxu0 %v837
        %v3129 = vpop.f32.mrb[0].mxu0
        %v3130 = vadd.f32 0.0, %v3129
        %v3131 = vpop.f32.mrb[0].mxu0
        %v3132 = vpop.f32.mrb[0].mxu0
        %v3133 = vadd.f32 0.0, %v3132
        %v3134 = vpop.f32.mrb[0].mxu0
        %3135 = vmatprep.mubr.bf16.mxu0 0
        %3136 = vmatmul.mubr.bf16.gmra.mrb[0].mxu0 %v838
        %v3137 = vpop.f32.mrb[0].mxu0
        %v3138 = vadd.f32 0.0, %v3137
        %v3139 = vpop.f32.mrb[0].mxu0
        %v3140 = vpop.f32.mrb[0].mxu0
        %v3141 = vadd.f32 0.0, %v3140
        %v3142 = vpop.f32.mrb[0].mxu0
        %3143 = vmatprep.mubr.bf16.mxu0 0
        %3144 = vmatmul.mubr.bf16.gmra.mrb[0].mxu0 %v2129
        %v3145 = vpop.f32.mrb[0].mxu0
        %v3146 = vadd.f32 0.0, %v3145
        %v3147 = vpop.f32.mrb[0].mxu0
        %v3148 = vpop.f32.mrb[0].mxu0
        %v3149 = vadd.f32 0.0, %v3148
        %v3150 = vpop.f32.mrb[0].mxu0
        %3151 = vmatprep.mubr.bf16.mxu0 0
        %3152 = vmatmul.mubr.bf16.gmra.mrb[0].mxu0 %v2949
        %v3153 = vpop.f32.mrb[0].mxu0
        %v3154 = vadd.f32 0.0, %v3153
        %v3155 = vpop.f32.mrb[0].mxu0
        %v3156 = vpop.f32.mrb[0].mxu0
        %v3157 = vadd.f32 0.0, %v3156
        %v3158 = vpop.f32.mrb[0].mxu0
        %3159 = vdwg.mxu0
        %v3160 = vadd.f32 %v2874, %v3034
        %v3161 = vadd.f32 %v2875, %v3037
        %v3162 = vadd.f32 %v2876, %v3042
        %v3163 = vadd.f32 %v2877, %v3045
        %v3164 = vadd.f32 %v2878, %v3050
        %v3165 = vadd.f32 %v2879, %v3053
        %v3166 = vadd.f32 %v2880, %v3058
        %v3167 = vadd.f32 %v2881, %v3061
        %v3168 = vadd.f32 %v2882, %v3066
        %v3169 = vadd.f32 %v2883, %v3069
        %v3170 = vadd.f32 %v2884, %v3074
        %v3171 = vadd.f32 %v2885, %v3077
        %v3172 = vadd.f32 %v2886, %v3082
        %v3173 = vadd.f32 %v2887, %v3085
        %v3174 = vadd.f32 %v2888, %v3090
        %v3175 = vadd.f32 %v2889, %v3093
        %v3176 = vadd.f32 %v2890, %v3098
        %v3177 = vadd.f32 %v2891, %v3101
        %v3178 = vadd.f32 %v2892, %v3106
        %v3179 = vadd.f32 %v2893, %v3109
        %v3180 = vadd.f32 %v2894, %v3114
        %v3181 = vadd.f32 %v2895, %v3117
        %v3182 = vadd.f32 %v2896, %v3122
        %v3183 = vadd.f32 %v2897, %v3125
        %v3184 = vadd.f32 %v2898, %v3130
        %v3185 = vadd.f32 %v2899, %v3133
        %v3186 = vadd.f32 %v2900, %v3138
        %v3187 = vadd.f32 %v2901, %v3141
        %v3188 = vadd.f32 %v2902, %v3146
        %v3189 = vadd.f32 %v2903, %v3149
        %v3190 = vadd.f32 %v2904, %v3154
        %v3191 = vadd.f32 %v2905, %v3157
        %v3193 = vrot.slane %v368, 5
        %v3194 = vrot.slane %v3193, 4
        %v3195 = vrot.slane %v369, 5
        %v3196 = vsel %vm1387, %v3194, %v3195
        %v3197 = vrot.slane %v3195, 4
        %v3198 = vrot.slane %v370, 5
        %v3199 = vsel %vm1387, %v3197, %v3198
        %s3200 = scalar_lea.vmem %s2, 512
        %v3201 = vld [vmem:[%s3200] sm:$0xf]
        %v3202 = vld [vmem:[%s3200 + $0x4] sm:$0xf]
        %v3203 = vld [vmem:[%s3200 + $0x8] sm:$0xf]
        %v3204 = vld [vmem:[%s3200 + $0xc] sm:$0xf]
        %v3205 = vld [vmem:[%s3200 + $0x10] sm:$0xf]
        %v3206 = vld [vmem:[%s3200 + $0x14] sm:$0xf]
        %v3207 = vld [vmem:[%s3200 + $0x18] sm:$0xf]
        %v3208 = vld [vmem:[%s3200 + $0x1c] sm:$0xf]
        %v3209 = vld [vmem:[%s3200 + $0x20] sm:$0xf]
        %v3210 = vld [vmem:[%s3200 + $0x24] sm:$0xf]
        %v3211 = vld [vmem:[%s3200 + $0x28] sm:$0xf]
        %v3212 = vld [vmem:[%s3200 + $0x2c] sm:$0xf]
        %v3213 = vld [vmem:[%s3200 + $0x30] sm:$0xf]
        %v3214 = vld [vmem:[%s3200 + $0x34] sm:$0xf]
        %v3215 = vld [vmem:[%s3200 + $0x38] sm:$0xf]
        %v3216 = vld [vmem:[%s3200 + $0x3c] sm:$0xf]
        %v3217 = vunpack.c.l.b16 %v3196
        %v3218 = vunpack.c.l.b16 %v3199
        %v3219 = vpack.c.b16 %v3218, %v3217
        %v3237 = vunpack.c.l.b16 %v3201
        %v3238 = vunpack.c.l.b16 %v3202
        %v3239 = vunpack.c.l.b16 %v3203
        %v3240 = vunpack.c.l.b16 %v3204
        %v3241 = vunpack.c.l.b16 %v3205
        %v3242 = vunpack.c.l.b16 %v3206
        %v3243 = vunpack.c.l.b16 %v3207
        %v3244 = vunpack.c.l.b16 %v3208
        %v3245 = vunpack.c.l.b16 %v3209
        %v3246 = vunpack.c.l.b16 %v3210
        %v3247 = vunpack.c.l.b16 %v3211
        %v3248 = vunpack.c.l.b16 %v3212
        %v3249 = vunpack.c.l.b16 %v3213
        %v3250 = vunpack.c.l.b16 %v3214
        %v3251 = vunpack.c.l.b16 %v3215
        %v3252 = vunpack.c.l.b16 %v3216
        %v3253 = vpack.c.b16 %v3238, %v3237
        %v3254 = vpack.c.b16 %v3240, %v3239
        %v3255 = vpack.c.b16 %v3242, %v3241
        %v3256 = vpack.c.b16 %v3244, %v3243
        %v3257 = vpack.c.b16 %v3246, %v3245
        %v3258 = vpack.c.b16 %v3248, %v3247
        %v3259 = vpack.c.b16 %v3250, %v3249
        %v3260 = vpack.c.b16 %v3252, %v3251
        %3269 = vmatprep.subr.bf16.mxu0 0
        %3270 = vmatpush1.bf16.msra.mxu0 %v3253
        %3271 = vmatprep.subr.bf16.mxu0 0
        %3272 = vmatpush1.bf16.msra.mxu0 %v3254
        %3273 = vmatprep.subr.bf16.mxu0 0
        %3274 = vmatpush1.bf16.msra.mxu0 %v3255
        %3275 = vmatprep.subr.bf16.mxu0 0
        %3276 = vmatpush1.bf16.msra.mxu0 %v3256
        %3277 = vmatprep.subr.bf16.mxu0 0
        %3278 = vmatpush1.bf16.msra.mxu0 %v3257
        %3279 = vmatprep.subr.bf16.mxu0 0
        %3280 = vmatpush1.bf16.msra.mxu0 %v3258
        %3281 = vmatprep.subr.bf16.mxu0 0
        %3282 = vmatpush1.bf16.msra.mxu0 %v3259
        %3283 = vmatprep.subr.bf16.mxu0 0
        %3284 = vmatpush1.bf16.msra.mxu0 %v3260
        %3285 = vmatprep.subr.bf16.mxu0 0
        %3286 = vmatpush1.bf16.msra.mxu0 0
        %3287 = vmatprep.subr.bf16.mxu0 0
        %3288 = vmatpush1.bf16.msra.mxu0 0
        %3289 = vmatprep.subr.bf16.mxu0 0
        %3290 = vmatpush1.bf16.msra.mxu0 0
        %3291 = vmatprep.subr.bf16.mxu0 0
        %3292 = vmatpush1.bf16.msra.mxu0 0
        %3293 = vmatprep.subr.bf16.mxu0 0
        %3294 = vmatpush1.bf16.msra.mxu0 0
        %3295 = vmatprep.subr.bf16.mxu0 0
        %3296 = vmatpush1.bf16.msra.mxu0 0
        %3297 = vmatprep.subr.bf16.mxu0 0
        %3298 = vmatpush1.bf16.msra.mxu0 0
        %3299 = vmatprep.subr.bf16.mxu0 0
        %3300 = vmatpush1.bf16.msra.mxu0 0
        %3301 = vmatprep.mubr.bf16.mxu0 0
        %3302 = vmatmul.mubr.bf16.gmra.mrb[0].mxu0 %v1551
        %v3303 = vpop.f32.mrb[0].mxu0
        %v3304 = vadd.f32 0.0, %v3303
        %v3305 = vpop.f32.mrb[0].mxu0
        %v3306 = vpop.f32.mrb[0].mxu0
        %v3307 = vadd.f32 0.0, %v3306
        %v3308 = vpop.f32.mrb[0].mxu0
        %3309 = vmatprep.mubr.bf16.mxu0 0
        %3310 = vmatmul.mubr.bf16.gmra.mrb[0].mxu0 %v1552
        %v3311 = vpop.f32.mrb[0].mxu0
        %v3312 = vadd.f32 0.0, %v3311
        %v3313 = vpop.f32.mrb[0].mxu0
        %v3314 = vpop.f32.mrb[0].mxu0
        %v3315 = vadd.f32 0.0, %v3314
        %v3316 = vpop.f32.mrb[0].mxu0
        %3317 = vmatprep.mubr.bf16.mxu0 0
        %3318 = vmatmul.mubr.bf16.gmra.mrb[0].mxu0 %v1553
        %v3319 = vpop.f32.mrb[0].mxu0
        %v3320 = vadd.f32 0.0, %v3319
        %v3321 = vpop.f32.mrb[0].mxu0
        %v3322 = vpop.f32.mrb[0].mxu0
        %v3323 = vadd.f32 0.0, %v3322
        %v3324 = vpop.f32.mrb[0].mxu0
        %3325 = vmatprep.mubr.bf16.mxu0 0
        %3326 = vmatmul.mubr.bf16.gmra.mrb[0].mxu0 %v1554
        %v3327 = vpop.f32.mrb[0].mxu0
        %v3328 = vadd.f32 0.0, %v3327
        %v3329 = vpop.f32.mrb[0].mxu0
        %v3330 = vpop.f32.mrb[0].mxu0
        %v3331 = vadd.f32 0.0, %v3330
        %v3332 = vpop.f32.mrb[0].mxu0
        %3333 = vmatprep.mubr.bf16.mxu0 0
        %3334 = vmatmul.mubr.bf16.gmra.mrb[0].mxu0 %v1555
        %v3335 = vpop.f32.mrb[0].mxu0
        %v3336 = vadd.f32 0.0, %v3335
        %v3337 = vpop.f32.mrb[0].mxu0
        %v3338 = vpop.f32.mrb[0].mxu0
        %v3339 = vadd.f32 0.0, %v3338
        %v3340 = vpop.f32.mrb[0].mxu0
        %3341 = vmatprep.mubr.bf16.mxu0 0
        %3342 = vmatmul.mubr.bf16.gmra.mrb[0].mxu0 %v1556
        %v3343 = vpop.f32.mrb[0].mxu0
        %v3344 = vadd.f32 0.0, %v3343
        %v3345 = vpop.f32.mrb[0].mxu0
        %v3346 = vpop.f32.mrb[0].mxu0
        %v3347 = vadd.f32 0.0, %v3346
        %v3348 = vpop.f32.mrb[0].mxu0
        %3349 = vmatprep.mubr.bf16.mxu0 0
        %3350 = vmatmul.mubr.bf16.gmra.mrb[0].mxu0 %v1557
        %v3351 = vpop.f32.mrb[0].mxu0
        %v3352 = vadd.f32 0.0, %v3351
        %v3353 = vpop.f32.mrb[0].mxu0
        %v3354 = vpop.f32.mrb[0].mxu0
        %v3355 = vadd.f32 0.0, %v3354
        %v3356 = vpop.f32.mrb[0].mxu0
        %3357 = vmatprep.mubr.bf16.mxu0 0
        %3358 = vmatmul.mubr.bf16.gmra.mrb[0].mxu0 %v1558
        %v3359 = vpop.f32.mrb[0].mxu0
        %v3360 = vadd.f32 0.0, %v3359
        %v3361 = vpop.f32.mrb[0].mxu0
        %v3362 = vpop.f32.mrb[0].mxu0
        %v3363 = vadd.f32 0.0, %v3362
        %v3364 = vpop.f32.mrb[0].mxu0
        %3365 = vmatprep.mubr.bf16.mxu0 0
        %3366 = vmatmul.mubr.bf16.gmra.mrb[0].mxu0 %v1559
        %v3367 = vpop.f32.mrb[0].mxu0
        %v3368 = vadd.f32 0.0, %v3367
        %v3369 = vpop.f32.mrb[0].mxu0
        %v3370 = vpop.f32.mrb[0].mxu0
        %v3371 = vadd.f32 0.0, %v3370
        %v3372 = vpop.f32.mrb[0].mxu0
        %3373 = vmatprep.mubr.bf16.mxu0 0
        %3374 = vmatmul.mubr.bf16.gmra.mrb[0].mxu0 %v1560
        %v3375 = vpop.f32.mrb[0].mxu0
        %v3376 = vadd.f32 0.0, %v3375
        %v3377 = vpop.f32.mrb[0].mxu0
        %v3378 = vpop.f32.mrb[0].mxu0
        %v3379 = vadd.f32 0.0, %v3378
        %v3380 = vpop.f32.mrb[0].mxu0
        %3381 = vmatprep.mubr.bf16.mxu0 0
        %3382 = vmatmul.mubr.bf16.gmra.mrb[0].mxu0 %v1561
        %v3383 = vpop.f32.mrb[0].mxu0
        %v3384 = vadd.f32 0.0, %v3383
        %v3385 = vpop.f32.mrb[0].mxu0
        %v3386 = vpop.f32.mrb[0].mxu0
        %v3387 = vadd.f32 0.0, %v3386
        %v3388 = vpop.f32.mrb[0].mxu0
        %3389 = vmatprep.mubr.bf16.mxu0 0
        %3390 = vmatmul.mubr.bf16.gmra.mrb[0].mxu0 %v1562
        %v3391 = vpop.f32.mrb[0].mxu0
        %v3392 = vadd.f32 0.0, %v3391
        %v3393 = vpop.f32.mrb[0].mxu0
        %v3394 = vpop.f32.mrb[0].mxu0
        %v3395 = vadd.f32 0.0, %v3394
        %v3396 = vpop.f32.mrb[0].mxu0
        %3397 = vmatprep.mubr.bf16.mxu0 0
        %3398 = vmatmul.mubr.bf16.gmra.mrb[0].mxu0 %v1563
        %v3399 = vpop.f32.mrb[0].mxu0
        %v3400 = vadd.f32 0.0, %v3399
        %v3401 = vpop.f32.mrb[0].mxu0
        %v3402 = vpop.f32.mrb[0].mxu0
        %v3403 = vadd.f32 0.0, %v3402
        %v3404 = vpop.f32.mrb[0].mxu0
        %3405 = vmatprep.mubr.bf16.mxu0 0
        %3406 = vmatmul.mubr.bf16.gmra.mrb[0].mxu0 %v1564
        %v3407 = vpop.f32.mrb[0].mxu0
        %v3408 = vadd.f32 0.0, %v3407
        %v3409 = vpop.f32.mrb[0].mxu0
        %v3410 = vpop.f32.mrb[0].mxu0
        %v3411 = vadd.f32 0.0, %v3410
        %v3412 = vpop.f32.mrb[0].mxu0
        %3413 = vmatprep.mubr.bf16.mxu0 0
        %3414 = vmatmul.mubr.bf16.gmra.mrb[0].mxu0 %v2399
        %v3415 = vpop.f32.mrb[0].mxu0
        %v3416 = vadd.f32 0.0, %v3415
        %v3417 = vpop.f32.mrb[0].mxu0
        %v3418 = vpop.f32.mrb[0].mxu0
        %v3419 = vadd.f32 0.0, %v3418
        %v3420 = vpop.f32.mrb[0].mxu0
        %3421 = vmatprep.mubr.bf16.mxu0 0
        %3422 = vmatmul.mubr.bf16.gmra.mrb[0].mxu0 %v3219
        %v3423 = vpop.f32.mrb[0].mxu0
        %v3424 = vadd.f32 0.0, %v3423
        %v3425 = vpop.f32.mrb[0].mxu0
        %v3426 = vpop.f32.mrb[0].mxu0
        %v3427 = vadd.f32 0.0, %v3426
        %v3428 = vpop.f32.mrb[0].mxu0
        %3429 = vdwg.mxu0
        %v3430 = vadd.f32 %v3160, %v3304
        %v3431 = vadd.f32 %v3161, %v3307
        %v3432 = vadd.f32 %v3162, %v3312
        %v3433 = vadd.f32 %v3163, %v3315
        %v3434 = vadd.f32 %v3164, %v3320
        %v3435 = vadd.f32 %v3165, %v3323
        %v3436 = vadd.f32 %v3166, %v3328
        %v3437 = vadd.f32 %v3167, %v3331
        %v3438 = vadd.f32 %v3168, %v3336
        %v3439 = vadd.f32 %v3169, %v3339
        %v3440 = vadd.f32 %v3170, %v3344
        %v3441 = vadd.f32 %v3171, %v3347
        %v3442 = vadd.f32 %v3172, %v3352
        %v3443 = vadd.f32 %v3173, %v3355
        %v3444 = vadd.f32 %v3174, %v3360
        %v3445 = vadd.f32 %v3175, %v3363
        %v3446 = vadd.f32 %v3176, %v3368
        %v3447 = vadd.f32 %v3177, %v3371
        %v3448 = vadd.f32 %v3178, %v3376
        %v3449 = vadd.f32 %v3179, %v3379
        %v3450 = vadd.f32 %v3180, %v3384
        %v3451 = vadd.f32 %v3181, %v3387
        %v3452 = vadd.f32 %v3182, %v3392
        %v3453 = vadd.f32 %v3183, %v3395
        %v3454 = vadd.f32 %v3184, %v3400
        %v3455 = vadd.f32 %v3185, %v3403
        %v3456 = vadd.f32 %v3186, %v3408
        %v3457 = vadd.f32 %v3187, %v3411
        %v3458 = vadd.f32 %v3188, %v3416
        %v3459 = vadd.f32 %v3189, %v3419
        %v3460 = vadd.f32 %v3190, %v3424
        %v3461 = vadd.f32 %v3191, %v3427
        %v3462 = vld [vmem:[%s3] sm:$0x1]
        %v3464 = vlaneseq
        %v3465 = vshrl.u32 %v3464, 7
        %v3466 = vsub.s32 0, %v3465
        %v3467 = vrot.slane %v3462, %v3466
        %v3469 = vmul.f32 %v3430, %v3467
        %v3470 = vmul.f32 %v3431, %v3467
        %v3471 = vmul.f32 %v3432, %v3467
        %v3472 = vmul.f32 %v3433, %v3467
        %v3473 = vmul.f32 %v3434, %v3467
        %v3474 = vmul.f32 %v3435, %v3467
        %v3475 = vmul.f32 %v3436, %v3467
        %v3476 = vmul.f32 %v3437, %v3467
        %v3477 = vmul.f32 %v3438, %v3467
        %v3478 = vmul.f32 %v3439, %v3467
        %v3479 = vmul.f32 %v3440, %v3467
        %v3480 = vmul.f32 %v3441, %v3467
        %v3481 = vmul.f32 %v3442, %v3467
        %v3482 = vmul.f32 %v3443, %v3467
        %v3483 = vmul.f32 %v3444, %v3467
        %v3484 = vmul.f32 %v3445, %v3467
        %v3485 = vmul.f32 %v3446, %v3467
        %v3486 = vmul.f32 %v3447, %v3467
        %v3487 = vmul.f32 %v3448, %v3467
        %v3488 = vmul.f32 %v3449, %v3467
        %v3489 = vmul.f32 %v3450, %v3467
        %v3490 = vmul.f32 %v3451, %v3467
        %v3491 = vmul.f32 %v3452, %v3467
        %v3492 = vmul.f32 %v3453, %v3467
        %v3493 = vmul.f32 %v3454, %v3467
        %v3494 = vmul.f32 %v3455, %v3467
        %v3495 = vmul.f32 %v3456, %v3467
        %v3496 = vmul.f32 %v3457, %v3467
        %v3497 = vmul.f32 %v3458, %v3467
        %v3498 = vmul.f32 %v3459, %v3467
        %v3499 = vmul.f32 %v3460, %v3467
        %v3500 = vmul.f32 %v3461, %v3467
        %v3501 = vld [vmem:[%s4] sm:$0x1]
        %v3503 = vlaneseq
        %v3504 = vshrl.u32 %v3503, 7
        %v3505 = vsub.s32 0, %v3504
        %v3506 = vrot.slane %v3501, %v3505
        %v3508 = vadd.f32 %v3469, %v3506
        %v3509 = vadd.f32 %v3470, %v3506
        %v3510 = vadd.f32 %v3471, %v3506
        %v3511 = vadd.f32 %v3472, %v3506
        %v3512 = vadd.f32 %v3473, %v3506
        %v3513 = vadd.f32 %v3474, %v3506
        %v3514 = vadd.f32 %v3475, %v3506
        %v3515 = vadd.f32 %v3476, %v3506
        %v3516 = vadd.f32 %v3477, %v3506
        %v3517 = vadd.f32 %v3478, %v3506
        %v3518 = vadd.f32 %v3479, %v3506
        %v3519 = vadd.f32 %v3480, %v3506
        %v3520 = vadd.f32 %v3481, %v3506
        %v3521 = vadd.f32 %v3482, %v3506
        %v3522 = vadd.f32 %v3483, %v3506
        %v3523 = vadd.f32 %v3484, %v3506
        %v3524 = vadd.f32 %v3485, %v3506
        %v3525 = vadd.f32 %v3486, %v3506
        %v3526 = vadd.f32 %v3487, %v3506
        %v3527 = vadd.f32 %v3488, %v3506
        %v3528 = vadd.f32 %v3489, %v3506
        %v3529 = vadd.f32 %v3490, %v3506
        %v3530 = vadd.f32 %v3491, %v3506
        %v3531 = vadd.f32 %v3492, %v3506
        %v3532 = vadd.f32 %v3493, %v3506
        %v3533 = vadd.f32 %v3494, %v3506
        %v3534 = vadd.f32 %v3495, %v3506
        %v3535 = vadd.f32 %v3496, %v3506
        %v3536 = vadd.f32 %v3497, %v3506
        %v3537 = vadd.f32 %v3498, %v3506
        %v3538 = vadd.f32 %v3499, %v3506
        %v3539 = vadd.f32 %v3500, %v3506
        %vm3540 = vcmp.gt.f32.partialorder %v3508, 0.0
        %vm3541 = vcmp.gt.f32.partialorder %v3509, 0.0
        %vm3542 = vcmp.gt.f32.partialorder %v3510, 0.0
        %vm3543 = vcmp.gt.f32.partialorder %v3511, 0.0
        %vm3544 = vcmp.gt.f32.partialorder %v3512, 0.0
        %vm3545 = vcmp.gt.f32.partialorder %v3513, 0.0
        %vm3546 = vcmp.gt.f32.partialorder %v3514, 0.0
        %vm3547 = vcmp.gt.f32.partialorder %v3515, 0.0
        %vm3548 = vcmp.gt.f32.partialorder %v3516, 0.0
        %vm3549 = vcmp.gt.f32.partialorder %v3517, 0.0
        %vm3550 = vcmp.gt.f32.partialorder %v3518, 0.0
        %vm3551 = vcmp.gt.f32.partialorder %v3519, 0.0
        %vm3552 = vcmp.gt.f32.partialorder %v3520, 0.0
        %vm3553 = vcmp.gt.f32.partialorder %v3521, 0.0
        %vm3554 = vcmp.gt.f32.partialorder %v3522, 0.0
        %vm3555 = vcmp.gt.f32.partialorder %v3523, 0.0
        %vm3556 = vcmp.gt.f32.partialorder %v3524, 0.0
        %vm3557 = vcmp.gt.f32.partialorder %v3525, 0.0
        %vm3558 = vcmp.gt.f32.partialorder %v3526, 0.0
        %vm3559 = vcmp.gt.f32.partialorder %v3527, 0.0
        %vm3560 = vcmp.gt.f32.partialorder %v3528, 0.0
        %vm3561 = vcmp.gt.f32.partialorder %v3529, 0.0
        %vm3562 = vcmp.gt.f32.partialorder %v3530, 0.0
        %vm3563 = vcmp.gt.f32.partialorder %v3531, 0.0
        %vm3564 = vcmp.gt.f32.partialorder %v3532, 0.0
        %vm3565 = vcmp.gt.f32.partialorder %v3533, 0.0
        %vm3566 = vcmp.gt.f32.partialorder %v3534, 0.0
        %vm3567 = vcmp.gt.f32.partialorder %v3535, 0.0
        %vm3568 = vcmp.gt.f32.partialorder %v3536, 0.0
        %vm3569 = vcmp.gt.f32.partialorder %v3537, 0.0
        %vm3570 = vcmp.gt.f32.partialorder %v3538, 0.0
        %vm3571 = vcmp.gt.f32.partialorder %v3539, 0.0
        %v3572 = vmul.f32 %v3508, 0.2
        %v3573 = vmul.f32 %v3509, 0.2
        %v3574 = vmul.f32 %v3510, 0.2
        %v3575 = vmul.f32 %v3511, 0.2
        %v3576 = vmul.f32 %v3512, 0.2
        %v3577 = vmul.f32 %v3513, 0.2
        %v3578 = vmul.f32 %v3514, 0.2
        %v3579 = vmul.f32 %v3515, 0.2
        %v3580 = vmul.f32 %v3516, 0.2
        %v3581 = vmul.f32 %v3517, 0.2
        %v3582 = vmul.f32 %v3518, 0.2
        %v3583 = vmul.f32 %v3519, 0.2
        %v3584 = vmul.f32 %v3520, 0.2
        %v3585 = vmul.f32 %v3521, 0.2
        %v3586 = vmul.f32 %v3522, 0.2
        %v3587 = vmul.f32 %v3523, 0.2
        %v3588 = vmul.f32 %v3524, 0.2
        %v3589 = vmul.f32 %v3525, 0.2
        %v3590 = vmul.f32 %v3526, 0.2
        %v3591 = vmul.f32 %v3527, 0.2
        %v3592 = vmul.f32 %v3528, 0.2
        %v3593 = vmul.f32 %v3529, 0.2
        %v3594 = vmul.f32 %v3530, 0.2
        %v3595 = vmul.f32 %v3531, 0.2
        %v3596 = vmul.f32 %v3532, 0.2
        %v3597 = vmul.f32 %v3533, 0.2
        %v3598 = vmul.f32 %v3534, 0.2
        %v3599 = vmul.f32 %v3535, 0.2
        %v3600 = vmul.f32 %v3536, 0.2
        %v3601 = vmul.f32 %v3537, 0.2
        %v3602 = vmul.f32 %v3538, 0.2
        %v3603 = vmul.f32 %v3539, 0.2
        %v3604 = vsel %vm3540, %v3508, %v3572
        %v3605 = vsel %vm3541, %v3509, %v3573
        %v3606 = vsel %vm3542, %v3510, %v3574
        %v3607 = vsel %vm3543, %v3511, %v3575
        %v3608 = vsel %vm3544, %v3512, %v3576
        %v3609 = vsel %vm3545, %v3513, %v3577
        %v3610 = vsel %vm3546, %v3514, %v3578
        %v3611 = vsel %vm3547, %v3515, %v3579
        %v3612 = vsel %vm3548, %v3516, %v3580
        %v3613 = vsel %vm3549, %v3517, %v3581
        %v3614 = vsel %vm3550, %v3518, %v3582
        %v3615 = vsel %vm3551, %v3519, %v3583
        %v3616 = vsel %vm3552, %v3520, %v3584
        %v3617 = vsel %vm3553, %v3521, %v3585
        %v3618 = vsel %vm3554, %v3522, %v3586
        %v3619 = vsel %vm3555, %v3523, %v3587
        %v3620 = vsel %vm3556, %v3524, %v3588
        %v3621 = vsel %vm3557, %v3525, %v3589
        %v3622 = vsel %vm3558, %v3526, %v3590
        %v3623 = vsel %vm3559, %v3527, %v3591
        %v3624 = vsel %vm3560, %v3528, %v3592
        %v3625 = vsel %vm3561, %v3529, %v3593
        %v3626 = vsel %vm3562, %v3530, %v3594
        %v3627 = vsel %vm3563, %v3531, %v3595
        %v3628 = vsel %vm3564, %v3532, %v3596
        %v3629 = vsel %vm3565, %v3533, %v3597
        %v3630 = vsel %vm3566, %v3534, %v3598
        %v3631 = vsel %vm3567, %v3535, %v3599
        %v3632 = vsel %vm3568, %v3536, %v3600
        %v3633 = vsel %vm3569, %v3537, %v3601
        %v3634 = vsel %vm3570, %v3538, %v3602
        %v3635 = vsel %vm3571, %v3539, %v3603
        %v3636 = vpack.c.bf16 %v3605, %v3604
        %v3637 = vpack.c.bf16 %v3607, %v3606
        %v3638 = vpack.c.bf16 %v3609, %v3608
        %v3639 = vpack.c.bf16 %v3611, %v3610
        %v3640 = vpack.c.bf16 %v3613, %v3612
        %v3641 = vpack.c.bf16 %v3615, %v3614
        %v3642 = vpack.c.bf16 %v3617, %v3616
        %v3643 = vpack.c.bf16 %v3619, %v3618
        %v3644 = vpack.c.bf16 %v3621, %v3620
        %v3645 = vpack.c.bf16 %v3623, %v3622
        %v3646 = vpack.c.bf16 %v3625, %v3624
        %v3647 = vpack.c.bf16 %v3627, %v3626
        %v3648 = vpack.c.bf16 %v3629, %v3628
        %v3649 = vpack.c.bf16 %v3631, %v3630
        %v3650 = vpack.c.bf16 %v3633, %v3632
        %v3651 = vpack.c.bf16 %v3635, %v3634
        %v3668 = vunpack.c.l.b16 %v3636
        %v3669 = vunpack.c.h.b16 %v3636
        %v3670 = vunpack.c.l.b16 %v3637
        %v3671 = vunpack.c.h.b16 %v3637
        %v3672 = vunpack.c.l.b16 %v3638
        %v3673 = vunpack.c.h.b16 %v3638
        %v3674 = vunpack.c.l.b16 %v3639
        %v3675 = vunpack.c.h.b16 %v3639
        %v3676 = vunpack.c.l.b16 %v3640
        %v3677 = vunpack.c.h.b16 %v3640
        %v3678 = vunpack.c.l.b16 %v3641
        %v3679 = vunpack.c.h.b16 %v3641
        %v3680 = vunpack.c.l.b16 %v3642
        %v3681 = vunpack.c.h.b16 %v3642
        %v3682 = vunpack.c.l.b16 %v3643
        %v3683 = vunpack.c.h.b16 %v3643
        %v3684 = vunpack.c.l.b16 %v3644
        %v3685 = vunpack.c.h.b16 %v3644
        %v3686 = vunpack.c.l.b16 %v3645
        %v3687 = vunpack.c.h.b16 %v3645
        %v3688 = vunpack.c.l.b16 %v3646
        %v3689 = vunpack.c.h.b16 %v3646
        %v3690 = vunpack.c.l.b16 %v3647
        %v3691 = vunpack.c.h.b16 %v3647
        %v3692 = vunpack.c.l.b16 %v3648
        %v3693 = vunpack.c.h.b16 %v3648
        %v3694 = vunpack.c.l.b16 %v3649
        %v3695 = vunpack.c.h.b16 %v3649
        %v3696 = vunpack.c.l.b16 %v3650
        %v3697 = vunpack.c.h.b16 %v3650
        %v3698 = vunpack.c.l.b16 %v3651
        %v3699 = vunpack.c.h.b16 %v3651
        %v3700 = vpack.c.b16 %v3668, %v3668
        %v3701 = vpack.c.b16 %v3669, %v3669
        %v3702 = vpack.c.b16 %v3670, %v3670
        %v3703 = vpack.c.b16 %v3671, %v3671
        %v3704 = vpack.c.b16 %v3672, %v3672
        %v3705 = vpack.c.b16 %v3673, %v3673
        %v3706 = vpack.c.b16 %v3674, %v3674
        %v3707 = vpack.c.b16 %v3675, %v3675
        %v3708 = vpack.c.b16 %v3676, %v3676
        %v3709 = vpack.c.b16 %v3677, %v3677
        %v3710 = vpack.c.b16 %v3678, %v3678
        %v3711 = vpack.c.b16 %v3679, %v3679
        %v3712 = vpack.c.b16 %v3680, %v3680
        %v3713 = vpack.c.b16 %v3681, %v3681
        %v3714 = vpack.c.b16 %v3682, %v3682
        %v3715 = vpack.c.b16 %v3683, %v3683
        %v3716 = vpack.c.b16 %v3684, %v3684
        %v3717 = vpack.c.b16 %v3685, %v3685
        %v3718 = vpack.c.b16 %v3686, %v3686
        %v3719 = vpack.c.b16 %v3687, %v3687
        %v3720 = vpack.c.b16 %v3688, %v3688
        %v3721 = vpack.c.b16 %v3689, %v3689
        %v3722 = vpack.c.b16 %v3690, %v3690
        %v3723 = vpack.c.b16 %v3691, %v3691
        %v3724 = vpack.c.b16 %v3692, %v3692
        %v3725 = vpack.c.b16 %v3693, %v3693
        %v3726 = vpack.c.b16 %v3694, %v3694
        %v3727 = vpack.c.b16 %v3695, %v3695
        %v3728 = vpack.c.b16 %v3696, %v3696
        %v3729 = vpack.c.b16 %v3697, %v3697
        %v3730 = vpack.c.b16 %v3698, %v3698
        %v3731 = vpack.c.b16 %v3699, %v3699
        %3764 = vst [vmem:[%s284] sm:$0xf] %v3700
        %3765 = vst [vmem:[%s284 + $0x4] sm:$0xf] %v3701
        %3766 = vst [vmem:[%s284 + $0x8] sm:$0xf] %v3702
        %3767 = vst [vmem:[%s284 + $0xc] sm:$0xf] %v3703
        %3768 = vst [vmem:[%s284 + $0x10] sm:$0xf] %v3704
        %3769 = vst [vmem:[%s284 + $0x14] sm:$0xf] %v3705
        %3770 = vst [vmem:[%s284 + $0x18] sm:$0xf] %v3706
        %3771 = vst [vmem:[%s284 + $0x1c] sm:$0xf] %v3707
        %3772 = vst [vmem:[%s284 + $0x20] sm:$0xf] %v3708
        %3773 = vst [vmem:[%s284 + $0x24] sm:$0xf] %v3709
        %3774 = vst [vmem:[%s284 + $0x28] sm:$0xf] %v3710
        %3775 = vst [vmem:[%s284 + $0x2c] sm:$0xf] %v3711
        %3776 = vst [vmem:[%s284 + $0x30] sm:$0xf] %v3712
        %3777 = vst [vmem:[%s284 + $0x34] sm:$0xf] %v3713
        %3778 = vst [vmem:[%s284 + $0x38] sm:$0xf] %v3714
        %3779 = vst [vmem:[%s284 + $0x3c] sm:$0xf] %v3715
        %3780 = vst [vmem:[%s284 + $0x40] sm:$0xf] %v3716
        %3781 = vst [vmem:[%s284 + $0x44] sm:$0xf] %v3717
        %3782 = vst [vmem:[%s284 + $0x48] sm:$0xf] %v3718
        %3783 = vst [vmem:[%s284 + $0x4c] sm:$0xf] %v3719
        %3784 = vst [vmem:[%s284 + $0x50] sm:$0xf] %v3720
        %3785 = vst [vmem:[%s284 + $0x54] sm:$0xf] %v3721
        %3786 = vst [vmem:[%s284 + $0x58] sm:$0xf] %v3722
        %3787 = vst [vmem:[%s284 + $0x5c] sm:$0xf] %v3723
        %3788 = vst [vmem:[%s284 + $0x60] sm:$0xf] %v3724
        %3789 = vst [vmem:[%s284 + $0x64] sm:$0xf] %v3725
        %3790 = vst [vmem:[%s284 + $0x68] sm:$0xf] %v3726
        %3791 = vst [vmem:[%s284 + $0x6c] sm:$0xf] %v3727
        %3792 = vst [vmem:[%s284 + $0x70] sm:$0xf] %v3728
        %3793 = vst [vmem:[%s284 + $0x74] sm:$0xf] %v3729
        %3794 = vst [vmem:[%s284 + $0x78] sm:$0xf] %v3730
        %3795 = vst [vmem:[%s284 + $0x7c] sm:$0xf] %v3731
        %s3796 = sand.u32 %s160, 1
        %s3797 = scalar_lea.sflag [#allocation3], %s3796
        %s3798 = sand.u32 %s160, 1
        %s3799 = smul.addr %s3798, 128
        %s3800 = scalar_lea.vmem [#allocation2], %s3799
        // Predicated region
        $region41: #{tpu_custom_call.1} parent=39 // pred_check
          %p3801 = pneg %p170
        $region42: #{tpu_custom_call.1} parent=39 // pred_check_branch
          %3803 = sbr.rel (%p3801) target = $region44
        $region43: #{tpu_custom_call.1} parent=39 // pred_region
          %s3804 = smul.u32 16, %s24
          %s3806 = ssub.s32 2048, 2048
          %3807 = vsyncadd %s3797, %s3806
          %s3808 = smul.addr %s3804, 2
          %s3809 = smul.addr %s23, 32
          %s3810 = sadd.s32 %s3808, %s3809
          %s3811 = smul.addr %s3810, 64
          %s3812 = scalar_lea.hbm %s5, %s3811
          %s3813 = sshll.u32 %s3800, 4
          %s3814 = int_to_ptr.vmem [resolvable:$true] %s3813
          %3819 = dma.vmem_to_hbm [thread:$0]  %s3814, 2048, %s3812, %s3797, 64, 64, 4
        $region44: #{tpu_custom_call.1} parent=39 // pred_fallthru
          _
      $region40: #{tpu_custom_call.1} parent=5 // pred_fallthru
        _
      %p3820 = scmp.le.s32.totalorder 2, %s14
      // Predicated region
      $region45: #{tpu_custom_call.1} parent=5 // pred_check
        %p3821 = pneg %p3820
      $region46: #{tpu_custom_call.1} parent=5 // pred_check_branch
        %3823 = sbr.rel (%p3821) target = $region48
      $region47: #{tpu_custom_call.1} parent=5 // pred_region
        %s3824 = ssub.s32 %s14, 2
        // Predicated region
        $region49: #{tpu_custom_call.1} parent=47 // pred_check
          %p3825 = pneg %p176
        $region50: #{tpu_custom_call.1} parent=47 // pred_check_branch
          %3827 = sbr.rel (%p3825) target = $region52
        $region51: #{tpu_custom_call.1} parent=47 // pred_region
          %s3828 = sand.u32 %s161, 1
          %s3829 = scalar_lea.sflag [#allocation3], %s3828
          %s3830 = sand.u32 %s161, 1
          %s3831 = smul.addr %s3830, 128
          %s3832 = scalar_lea.vmem [#allocation2], %s3831
          %3833 = dma.done %s3829, 2048
        $region52: #{tpu_custom_call.1} parent=47 // pred_fallthru
          _
      $region48: #{tpu_custom_call.1} parent=5 // pred_fallthru
        _
    $region6: #{tpu_custom_call.1} parent=1 // loop_footer
      %s18 = sadd.s32 1, %s14
    $region7: #{tpu_custom_call.1} parent=1 // loop_footer_branch
      %13 = sbr.rel target = $region3
    $region8: #{tpu_custom_call.1} parent=1 // loop_exit
      _
    %3834 = vsyncpa [#allocation3], 1
    %s3835 = scalar_lea.sflag [#allocation3], 1
    %3836 = vsyncpa %s3835, 1

</llo_original>
